<compile_context>
chip_gen: v6e
topology: v6e:2x2x1
jax: 0.10.0
libtpu: 0.0.40
codegen_flags: <defaults>
</compile_context>

<pallas_src>
from functools import partial

import jax
import jax.numpy as jnp
from jax.experimental import pallas as pl
from jax.experimental.pallas import tpu as pltpu


def _round_up(x, m):
    return ((x + m - 1) // m) * m


def _pick_tile(m, tile_max):
    """Return (padded_m, tile) with tile | padded_m and tile a multiple of 128
    (or tile == m when m <= tile_max, i.e. a full-extent lane block)."""
    if m <= tile_max:
        return m, m
    unit = 512
    mp = _round_up(m, unit)
    tile = unit
    for t in range(tile_max, unit - 1, -unit):
        if mp % t == 0:
            tile = t
            break
    return mp, tile


def _divisor_tile(mp, tile_max):
    """Largest multiple-of-128 tile <= tile_max dividing mp (or mp itself)."""
    if mp <= tile_max:
        return mp
    for t in range(tile_max, 0, -128):
        if mp % t == 0:
            return t
    return mp  # full extent is always legal


# ----------------------------------------------------------------------------
# Kernel 1: conv-as-matmul hot path, channel-major layout.
# One (image, row-tile) grid step:  out[Cout, tile] = relu(W_aug @ P_aug[tile])
# W_aug = [weights | bias] (bf16), P_aug = [patches ; ones-row] (bf16),
# accumulation in f32 on the MXU, output stored lane-dense in bf16.
# ----------------------------------------------------------------------------
def _conv_mm_kernel(w_ref, p_ref, o_ref):
    acc = jnp.dot(w_ref[...], p_ref[...], preferred_element_type=jnp.float32)
    o_ref[...] = jnp.maximum(acc, 0.0).astype(o_ref.dtype)  # ReLU, bf16 store


def _conv3x3_s2_relu(f5d, w, b, *, tile_m_max=1024):
    """3x3 conv, stride 2, pad 1, ReLU on an [x, y] pair.

    f5d: (2, Cin, B, H, W) float   (leading 2 = [x, y])
    w:   (3, 3, Cin, Cout) f32 (HWIO);   b: (Cout,) f32
    Returns (feat, (B, Ho, Wo, M)):
      feat: (2, Cout, Mp) bf16, columns ordered (b, oh, ow);
            columns >= M (padding) are exactly zero.
    """
    _, cin, B, H, W = f5d.shape
    cout = w.shape[-1]
    ho = (H + 2 - 3) // 2 + 1
    wo = (W + 2 - 3) // 2 + 1
    M = B * ho * wo
    K = 9 * cin

    # im2col (wrapper glue, static strided slices): patch row order = (tap, cin)
    # matching w.reshape(9*Cin, Cout).  Patches live in bf16, [K, rows] layout.
    xp = jnp.pad(f5d, ((0, 0), (0, 0), (0, 0), (1, 1), (1, 1)))
    taps = []
    for ki in range(3):
        for kj in range(3):
            taps.append(xp[:, :, :, ki:ki + 2 * ho:2, kj:kj + 2 * wo:2])
    patches = jnp.stack(taps, axis=1).reshape(2, K, M).astype(jnp.bfloat16)

    # Fold the bias into the matmul via an appended ones-row: zero-padded
    # columns then yield exactly-zero outputs after ReLU.
    ones_row = jnp.ones((2, 1, M), jnp.bfloat16)
    patches = jnp.concatenate([patches, ones_row], axis=1)            # (2, K+1, M)
    kp1 = K + 1

    w_mat = w.reshape(K, cout).T                                      # (Cout, K)
    w_aug = jnp.concatenate([w_mat, b.reshape(cout, 1)], axis=1)      # (Cout, K+1)
    w_aug = w_aug.astype(jnp.bfloat16)

    mp, tile_m = _pick_tile(M, tile_m_max)
    if mp != M:
        patches = jnp.pad(patches, ((0, 0), (0, 0), (0, mp - M)))

    grid = (2, mp // tile_m)
    flops = 2 * 2 * mp * kp1 * cout
    bytes_accessed = 2 * kp1 * mp * 2 + cout * kp1 * 2 + 2 * cout * mp * 2

    feat = pl.pallas_call(
        _conv_mm_kernel,
        out_shape=jax.ShapeDtypeStruct((2, cout, mp), jnp.bfloat16),
        grid=grid,
        in_specs=[pl.BlockSpec((cout, kp1), lambda s, i: (0, 0)),
                  pl.BlockSpec((None, kp1, tile_m), lambda s, i: (s, 0, i))],
        out_specs=pl.BlockSpec((None, cout, tile_m), lambda s, i: (s, 0, i)),
        compiler_params=pltpu.CompilerParams(
            dimension_semantics=("parallel", "parallel")),
        cost_estimate=pl.CostEstimate(flops=flops, transcendentals=0,
                                      bytes_accessed=bytes_accessed),
    )(w_aug, patches)
    return feat, (B, ho, wo, M)


# ----------------------------------------------------------------------------
# Kernel 2: LPIPS comparison hot path for one feature level.
# Inputs are (C, tile) blocks (rows on lanes).  Per-column L2 norm over C
# (== PyTorch .norm(dim=1)), normalize with +1e-10 on the norm, |diff|,
# and a per-column partial sum written lane-dense ("parallel" grid; the tiny
# partial vector is reduced in JAX).  Zero-padded columns contribute exactly 0.
# ----------------------------------------------------------------------------
def _lpips_level_kernel(fx_ref, fy_ref, o_ref):
    fx = fx_ref[...].astype(jnp.float32)                       # (C, tile)
    fy = fy_ref[...].astype(jnp.float32)
    nx = jnp.sqrt(jnp.sum(fx * fx, axis=0, keepdims=True))     # (1, tile)
    ny = jnp.sqrt(jnp.sum(fy * fy, axis=0, keepdims=True))
    inv_nx = pl.reciprocal(nx + 1e-10, approx=True)            # eps stays on the norm
    inv_ny = pl.reciprocal(ny + 1e-10, approx=True)
    d = jnp.abs(fx * inv_nx - fy * inv_ny)                     # (C, tile)
    o_ref[...] = jnp.sum(d, axis=0, keepdims=True)             # per-column partial


def _lpips_level_sum(feat, *, tile_max=2048):
    """feat: (2, C, Mp) bf16 (x = leading index 0, y = 1; pad columns are 0).
    Returns sum over all |fx_hat - fy_hat| elements of the valid region."""
    _, C, mp = feat.shape
    tile = _divisor_tile(mp, tile_max)
    n_tiles = mp // tile

    partial_cols = pl.pallas_call(
        _lpips_level_kernel,
        out_shape=jax.ShapeDtypeStruct((1, mp), jnp.float32),
        grid=(n_tiles,),
        in_specs=[pl.BlockSpec((None, C, tile), lambda i: (0, 0, i)),
                  pl.BlockSpec((None, C, tile), lambda i: (1, 0, i))],
        out_specs=pl.BlockSpec((1, tile), lambda i: (0, i)),
        compiler_params=pltpu.CompilerParams(dimension_semantics=("parallel",)),
    )(feat, feat)
    return jnp.sum(partial_cols)


# ----------------------------------------------------------------------------
# Synthetic feature net (stands in for timm rdnet_base features_only):
# 4 stages, each 3x3 stride-2 conv + ReLU, returning 4 multi-scale features.
# ----------------------------------------------------------------------------
def feature_net(xy5d, params):
    feats = []
    h5d = xy5d
    for (w, b) in params:
        feat, meta = _conv3x3_s2_relu(h5d, w, b)
        feats.append((feat, meta))
        B, ho, wo, M = meta
        cout = w.shape[-1]
        # Valid columns -> spatial layout for the next stage's im2col (bf16).
        h5d = feat[:, :, :M].reshape(2, cout, B, ho, wo)
    return feats


def init_params(key, cin=3, channels=(16, 32, 64, 128)):
    params = []
    c_prev = cin
    for c in channels:
        key, k1, k2 = jax.random.split(key, 3)
        fan_in = 3 * 3 * c_prev
        w = jax.random.normal(k1, (3, 3, c_prev, c), jnp.float32) * (2.0 / fan_in) ** 0.5
        b = jax.random.normal(k2, (c,), jnp.float32) * 0.01
        params.append((w, b))
        c_prev = c
    return params


# ----------------------------------------------------------------------------
# LPIPS forward: matches the PyTorch module's semantics
#   loss = sum_i  w_i * L1( f_x[i]/(||f_x[i]||_C + 1e-10),
#                           f_y[i]/(||f_y[i]||_C + 1e-10) )
# with L1Loss = mean over all elements of the feature map.
# x and y share one feature-net pass (leading axis of size 2).
# ----------------------------------------------------------------------------
def lpips(x_nchw, y_nchw, params, weights=(0.2, 0.4, 0.3, 0.1)):
    x = x_nchw.astype(jnp.float32)
    y = y_nchw.astype(jnp.float32)
    xy5d = jnp.transpose(jnp.stack([x, y], axis=0), (0, 2, 1, 3, 4))  # (2, C, B, H, W)
    feats = feature_net(xy5d, params)

    loss = jnp.float32(0.0)
    for i, (feat, (B, ho, wo, M)) in enumerate(feats):
        C = feat.shape[1]
        abs_sum = _lpips_level_sum(feat)
        loss = loss + jnp.float32(weights[i]) * (abs_sum / jnp.float32(M * C))
    return loss


# ----------------------------------------------------------------------------
# Pure-JAX reference with the same dtype policy (bf16 features, f32 math),
# used as the correctness oracle for the Pallas path.
# ----------------------------------------------------------------------------
def lpips_reference(x_nchw, y_nchw, params, weights=(0.2, 0.4, 0.3, 0.1)):
    def feats(img):
        h = jnp.transpose(img.astype(jnp.float32), (0, 2, 3, 1)).astype(jnp.bfloat16)
        outs = []
        for (w, b) in params:
            acc = jax.lax.conv_general_dilated(
                h, w.astype(jnp.bfloat16), window_strides=(2, 2),
                padding=((1, 1), (1, 1)),
                dimension_numbers=("NHWC", "HWIO", "NHWC"),
                preferred_element_type=jnp.float32)
            acc = acc + b.astype(jnp.bfloat16).astype(jnp.float32)
            h = jnp.maximum(acc, 0.0).astype(jnp.bfloat16)
            outs.append(h)
        return outs

    fx, fy = feats(x_nchw), feats(y_nchw)
    loss = jnp.float32(0.0)
    for i in range(len(fx)):
        a = fx[i].astype(jnp.float32)
        c = fy[i].astype(jnp.float32)
        na = jnp.sqrt(jnp.sum(a * a, axis=-1, keepdims=True))
        nc = jnp.sqrt(jnp.sum(c * c, axis=-1, keepdims=True))
        loss = loss + jnp.float32(weights[i]) * jnp.mean(
            jnp.abs(a / (na + 1e-10) - c / (nc + 1e-10)))
    return loss


if __name__ == "__main__":
    key = jax.random.PRNGKey(0)
    kx, ky, kp = jax.random.split(key, 3)

    # Small shapes consistent with the module: [B, C, H, W] images.
    x = jax.random.normal(kx, (2, 3, 32, 32), jnp.float32)
    y = jax.random.normal(ky, (2, 3, 32, 32), jnp.float32)
    params = init_params(kp)

    fn = jax.jit(partial(lpips, params=params))
    loss = fn(x, y)
    jax.block_until_ready(loss)

    ref = jax.jit(partial(lpips_reference, params=params))(x, y)
    jax.block_until_ready(ref)

    rel = abs(float(loss) - float(ref)) / max(abs(float(ref)), 1e-6)
    assert rel < 0.05, f"LPIPS mismatch: kernel={float(loss)} ref={float(ref)} rel={rel:.4f}"
    print("KERNEL_OK")
</pallas_src>

<mosaic_0001>
module attributes {stable_mosaic.version = 11 : i64} {
  func.func @_conv_mm_kernel(%arg0: i32, %arg1: i32, %arg2: memref<16x28xbf16, #tpu.memory_space<vmem>>, %arg3: memref<1x28x512xbf16, #tpu.memory_space<vmem>>, %arg4: memref<1x16x512xbf16, #tpu.memory_space<vmem>>) attributes {dimension_semantics = [#tpu.dimension_semantics<parallel>, #tpu.dimension_semantics<parallel>], iteration_bounds = array<i64: 2, 1>, scalar_prefetch = 0 : i64, scratch_operands = 0 : i64, tpu.core_type = #tpu.core_type<tc>, window_params = [{pipeline_mode = #tpu.pipeline_mode<synchronous>, transform_indices = @transform_0, window_bounds = array<i64: 16, 28>}, {transform_indices = @transform_1, window_bounds = array<i64: 1, 28, 512>}, {transform_indices = @transform_2, window_bounds = array<i64: 1, 16, 512>}]} {
    %c0 = arith.constant 0 : index
    %c0_0 = arith.constant 0 : index
    %0 = vector.load %arg2[%c0, %c0_0] : memref<16x28xbf16, #tpu.memory_space<vmem>>, vector<16x28xbf16>
    %c0_1 = arith.constant 0 : index
    %c0_2 = arith.constant 0 : index
    %c0_3 = arith.constant 0 : index
    %1 = vector.load %arg3[%c0_1, %c0_2, %c0_3] : memref<1x28x512xbf16, #tpu.memory_space<vmem>>, vector<1x28x512xbf16>
    %2 = vector.shape_cast %1 : vector<1x28x512xbf16> to vector<28x512xbf16>
    %cst = arith.constant dense<0.000000e+00> : vector<16x512xf32>
    %3 = tpu.matmul %0, %2, %cst {dimension_numbers = #tpu.dot_dimension_numbers<[1], [0], [0], [1], [0, 0, 1, 1], [], []>} : vector<16x28xbf16>, vector<28x512xbf16>, vector<16x512xf32> -> vector<16x512xf32>
    %cst_4 = arith.constant 0.000000e+00 : f32
    %4 = vector.broadcast %cst_4 : f32 to vector<16x512xf32>
    %5 = arith.maximumf %3, %4 : vector<16x512xf32>
    %6 = arith.truncf %5 : vector<16x512xf32> to vector<16x512xbf16>
    %c0_5 = arith.constant 0 : index
    %c0_6 = arith.constant 0 : index
    %c0_7 = arith.constant 0 : index
    %7 = vector.load %arg4[%c0_5, %c0_6, %c0_7] : memref<1x16x512xbf16, #tpu.memory_space<vmem>>, vector<1x16x512xbf16>
    %8 = vector.shape_cast %7 : vector<1x16x512xbf16> to vector<16x512xbf16>
    %9 = vector.shape_cast %6 : vector<16x512xbf16> to vector<1x16x512xbf16>
    tpu.vector_store %arg4[%c0_5, %c0_6, %c0_7], %9 {strides = array<i32>} : memref<1x16x512xbf16, #tpu.memory_space<vmem>>, vector<1x16x512xbf16>,
    return
  }
  func.func @transform_0(%arg0: i32, %arg1: i32) -> (i32, i32) {
    %c0_i32 = arith.constant 0 : i32
    %c0_i32_0 = arith.constant 0 : i32
    %c0_i32_1 = arith.constant 0 : i32
    return %c0_i32, %c0_i32_0 : i32, i32
  }
  func.func @transform_1(%arg0: i32, %arg1: i32) -> (i32, i32, i32) {
    %c0_i32 = arith.constant 0 : i32
    %c0_i32_0 = arith.constant 0 : i32
    return %arg0, %c0_i32, %arg1 : i32, i32, i32
  }
  func.func @transform_2(%arg0: i32, %arg1: i32) -> (i32, i32, i32) {
    %c0_i32 = arith.constant 0 : i32
    %c0_i32_0 = arith.constant 0 : i32
    return %arg0, %c0_i32, %arg1 : i32, i32, i32
  }
}

module attributes {stable_mosaic.version = 11 : i64} {
  func.func @_lpips_level_kernel(%arg0: i32, %arg1: memref<1x16x512xbf16, #tpu.memory_space<vmem>>, %arg2: memref<1x16x512xbf16, #tpu.memory_space<vmem>>, %arg3: memref<1x512xf32, #tpu.memory_space<vmem>>) attributes {dimension_semantics = [#tpu.dimension_semantics<parallel>], iteration_bounds = array<i64: 1>, scalar_prefetch = 0 : i64, scratch_operands = 0 : i64, tpu.core_type = #tpu.core_type<tc>, window_params = [{transform_indices = @transform_0, window_bounds = array<i64: 1, 16, 512>}, {transform_indices = @transform_1, window_bounds = array<i64: 1, 16, 512>}, {transform_indices = @transform_2, window_bounds = array<i64: 1, 512>}]} {
    %c0 = arith.constant 0 : index
    %c0_0 = arith.constant 0 : index
    %c0_1 = arith.constant 0 : index
    %0 = vector.load %arg1[%c0, %c0_0, %c0_1] : memref<1x16x512xbf16, #tpu.memory_space<vmem>>, vector<1x16x512xbf16>
    %1 = vector.shape_cast %0 : vector<1x16x512xbf16> to vector<16x512xbf16>
    %2 = arith.extf %1 : vector<16x512xbf16> to vector<16x512xf32>
    %c0_2 = arith.constant 0 : index
    %c0_3 = arith.constant 0 : index
    %c0_4 = arith.constant 0 : index
    %3 = vector.load %arg2[%c0_2, %c0_3, %c0_4] : memref<1x16x512xbf16, #tpu.memory_space<vmem>>, vector<1x16x512xbf16>
    %4 = vector.shape_cast %3 : vector<1x16x512xbf16> to vector<16x512xbf16>
    %5 = arith.extf %4 : vector<16x512xbf16> to vector<16x512xf32>
    %6 = arith.mulf %2, %2 : vector<16x512xf32>
    %cst = arith.constant dense<0.000000e+00> : vector<512xf32>
    %7 = vector.multi_reduction <add>, %6, %cst [0] : vector<16x512xf32> to vector<512xf32>
    %8 = vector.shape_cast %7 : vector<512xf32> to vector<1x512xf32>
    %9 = math.sqrt %8 : vector<1x512xf32>
    %10 = arith.mulf %5, %5 : vector<16x512xf32>
    %cst_5 = arith.constant dense<0.000000e+00> : vector<512xf32>
    %11 = vector.multi_reduction <add>, %10, %cst_5 [0] : vector<16x512xf32> to vector<512xf32>
    %12 = vector.shape_cast %11 : vector<512xf32> to vector<1x512xf32>
    %13 = math.sqrt %12 : vector<1x512xf32>
    %cst_6 = arith.constant 1.000000e-10 : f32
    %14 = vector.broadcast %cst_6 : f32 to vector<1x512xf32>
    %15 = arith.addf %9, %14 : vector<1x512xf32>
    %16 = tpu.reciprocal %15 {approx = true} : vector<1x512xf32> -> vector<1x512xf32>
    %cst_7 = arith.constant 1.000000e-10 : f32
    %17 = vector.broadcast %cst_7 : f32 to vector<1x512xf32>
    %18 = arith.addf %13, %17 : vector<1x512xf32>
    %19 = tpu.reciprocal %18 {approx = true} : vector<1x512xf32> -> vector<1x512xf32>
    %20 = vector.broadcast %16 : vector<1x512xf32> to vector<16x512xf32>
    %21 = arith.mulf %2, %20 : vector<16x512xf32>
    %22 = vector.broadcast %19 : vector<1x512xf32> to vector<16x512xf32>
    %23 = arith.mulf %5, %22 : vector<16x512xf32>
    %24 = arith.subf %21, %23 : vector<16x512xf32>
    %25 = math.absf %24 : vector<16x512xf32>
    %cst_8 = arith.constant dense<0.000000e+00> : vector<512xf32>
    %26 = vector.multi_reduction <add>, %25, %cst_8 [0] : vector<16x512xf32> to vector<512xf32>
    %27 = vector.shape_cast %26 : vector<512xf32> to vector<1x512xf32>
    %c0_9 = arith.constant 0 : index
    %c0_10 = arith.constant 0 : index
    %28 = vector.load %arg3[%c0_9, %c0_10] : memref<1x512xf32, #tpu.memory_space<vmem>>, vector<1x512xf32>
    tpu.vector_store %arg3[%c0_9, %c0_10], %27 {strides = array<i32>} : memref<1x512xf32, #tpu.memory_space<vmem>>, vector<1x512xf32>,
    return
  }
  func.func @transform_0(%arg0: i32) -> (i32, i32, i32) {
    %c0_i32 = arith.constant 0 : i32
    %c0_i32_0 = arith.constant 0 : i32
    %c0_i32_1 = arith.constant 0 : i32
    return %c0_i32, %c0_i32_0, %arg0 : i32, i32, i32
  }
  func.func @transform_1(%arg0: i32) -> (i32, i32, i32) {
    %c1_i32 = arith.constant 1 : i32
    %c0_i32 = arith.constant 0 : i32
    %c0_i32_0 = arith.constant 0 : i32
    return %c1_i32, %c0_i32, %arg0 : i32, i32, i32
  }
  func.func @transform_2(%arg0: i32) -> (i32, i32) {
    %c0_i32 = arith.constant 0 : i32
    %c0_i32_0 = arith.constant 0 : i32
    return %c0_i32, %arg0 : i32, i32
  }
}

module attributes {stable_mosaic.version = 11 : i64} {
  func.func @_conv_mm_kernel(%arg0: i32, %arg1: i32, %arg2: memref<32x145xbf16, #tpu.memory_space<vmem>>, %arg3: memref<1x145x128xbf16, #tpu.memory_space<vmem>>, %arg4: memref<1x32x128xbf16, #tpu.memory_space<vmem>>) attributes {dimension_semantics = [#tpu.dimension_semantics<parallel>, #tpu.dimension_semantics<parallel>], iteration_bounds = array<i64: 2, 1>, scalar_prefetch = 0 : i64, scratch_operands = 0 : i64, tpu.core_type = #tpu.core_type<tc>, window_params = [{pipeline_mode = #tpu.pipeline_mode<synchronous>, transform_indices = @transform_0, window_bounds = array<i64: 32, 145>}, {transform_indices = @transform_1, window_bounds = array<i64: 1, 145, 128>}, {transform_indices = @transform_2, window_bounds = array<i64: 1, 32, 128>}]} {
    %c0 = arith.constant 0 : index
    %c0_0 = arith.constant 0 : index
    %0 = vector.load %arg2[%c0, %c0_0] : memref<32x145xbf16, #tpu.memory_space<vmem>>, vector<32x145xbf16>
    %c0_1 = arith.constant 0 : index
    %c0_2 = arith.constant 0 : index
    %c0_3 = arith.constant 0 : index
    %1 = vector.load %arg3[%c0_1, %c0_2, %c0_3] : memref<1x145x128xbf16, #tpu.memory_space<vmem>>, vector<1x145x128xbf16>
    %2 = vector.shape_cast %1 : vector<1x145x128xbf16> to vector<145x128xbf16>
    %cst = arith.constant dense<0.000000e+00> : vector<32x128xf32>
    %3 = tpu.matmul %0, %2, %cst {dimension_numbers = #tpu.dot_dimension_numbers<[1], [0], [0], [1], [0, 0, 1, 1], [], []>} : vector<32x145xbf16>, vector<145x128xbf16>, vector<32x128xf32> -> vector<32x128xf32>
    %cst_4 = arith.constant 0.000000e+00 : f32
    %4 = vector.broadcast %cst_4 : f32 to vector<32x128xf32>
    %5 = arith.maximumf %3, %4 : vector<32x128xf32>
    %6 = arith.truncf %5 : vector<32x128xf32> to vector<32x128xbf16>
    %c0_5 = arith.constant 0 : index
    %c0_6 = arith.constant 0 : index
    %c0_7 = arith.constant 0 : index
    %7 = vector.load %arg4[%c0_5, %c0_6, %c0_7] : memref<1x32x128xbf16, #tpu.memory_space<vmem>>, vector<1x32x128xbf16>
    %8 = vector.shape_cast %7 : vector<1x32x128xbf16> to vector<32x128xbf16>
    %9 = vector.shape_cast %6 : vector<32x128xbf16> to vector<1x32x128xbf16>
    tpu.vector_store %arg4[%c0_5, %c0_6, %c0_7], %9 {strides = array<i32>} : memref<1x32x128xbf16, #tpu.memory_space<vmem>>, vector<1x32x128xbf16>,
    return
  }
  func.func @transform_0(%arg0: i32, %arg1: i32) -> (i32, i32) {
    %c0_i32 = arith.constant 0 : i32
    %c0_i32_0 = arith.constant 0 : i32
    %c0_i32_1 = arith.constant 0 : i32
    return %c0_i32, %c0_i32_0 : i32, i32
  }
  func.func @transform_1(%arg0: i32, %arg1: i32) -> (i32, i32, i32) {
    %c0_i32 = arith.constant 0 : i32
    %c0_i32_0 = arith.constant 0 : i32
    return %arg0, %c0_i32, %arg1 : i32, i32, i32
  }
  func.func @transform_2(%arg0: i32, %arg1: i32) -> (i32, i32, i32) {
    %c0_i32 = arith.constant 0 : i32
    %c0_i32_0 = arith.constant 0 : i32
    return %arg0, %c0_i32, %arg1 : i32, i32, i32
  }
}

module attributes {stable_mosaic.version = 11 : i64} {
  func.func @_lpips_level_kernel(%arg0: i32, %arg1: memref<1x32x128xbf16, #tpu.memory_space<vmem>>, %arg2: memref<1x32x128xbf16, #tpu.memory_space<vmem>>, %arg3: memref<1x128xf32, #tpu.memory_space<vmem>>) attributes {dimension_semantics = [#tpu.dimension_semantics<parallel>], iteration_bounds = array<i64: 1>, scalar_prefetch = 0 : i64, scratch_operands = 0 : i64, tpu.core_type = #tpu.core_type<tc>, window_params = [{transform_indices = @transform_0, window_bounds = array<i64: 1, 32, 128>}, {transform_indices = @transform_1, window_bounds = array<i64: 1, 32, 128>}, {transform_indices = @transform_2, window_bounds = array<i64: 1, 128>}]} {
    %c0 = arith.constant 0 : index
    %c0_0 = arith.constant 0 : index
    %c0_1 = arith.constant 0 : index
    %0 = vector.load %arg1[%c0, %c0_0, %c0_1] : memref<1x32x128xbf16, #tpu.memory_space<vmem>>, vector<1x32x128xbf16>
    %1 = vector.shape_cast %0 : vector<1x32x128xbf16> to vector<32x128xbf16>
    %2 = arith.extf %1 : vector<32x128xbf16> to vector<32x128xf32>
    %c0_2 = arith.constant 0 : index
    %c0_3 = arith.constant 0 : index
    %c0_4 = arith.constant 0 : index
    %3 = vector.load %arg2[%c0_2, %c0_3, %c0_4] : memref<1x32x128xbf16, #tpu.memory_space<vmem>>, vector<1x32x128xbf16>
    %4 = vector.shape_cast %3 : vector<1x32x128xbf16> to vector<32x128xbf16>
    %5 = arith.extf %4 : vector<32x128xbf16> to vector<32x128xf32>
    %6 = arith.mulf %2, %2 : vector<32x128xf32>
    %cst = arith.constant dense<0.000000e+00> : vector<128xf32>
    %7 = vector.multi_reduction <add>, %6, %cst [0] : vector<32x128xf32> to vector<128xf32>
    %8 = vector.shape_cast %7 : vector<128xf32> to vector<1x128xf32>
    %9 = math.sqrt %8 : vector<1x128xf32>
    %10 = arith.mulf %5, %5 : vector<32x128xf32>
    %cst_5 = arith.constant dense<0.000000e+00> : vector<128xf32>
    %11 = vector.multi_reduction <add>, %10, %cst_5 [0] : vector<32x128xf32> to vector<128xf32>
    %12 = vector.shape_cast %11 : vector<128xf32> to vector<1x128xf32>
    %13 = math.sqrt %12 : vector<1x128xf32>
    %cst_6 = arith.constant 1.000000e-10 : f32
    %14 = vector.broadcast %cst_6 : f32 to vector<1x128xf32>
    %15 = arith.addf %9, %14 : vector<1x128xf32>
    %16 = tpu.reciprocal %15 {approx = true} : vector<1x128xf32> -> vector<1x128xf32>
    %cst_7 = arith.constant 1.000000e-10 : f32
    %17 = vector.broadcast %cst_7 : f32 to vector<1x128xf32>
    %18 = arith.addf %13, %17 : vector<1x128xf32>
    %19 = tpu.reciprocal %18 {approx = true} : vector<1x128xf32> -> vector<1x128xf32>
    %20 = vector.broadcast %16 : vector<1x128xf32> to vector<32x128xf32>
    %21 = arith.mulf %2, %20 : vector<32x128xf32>
    %22 = vector.broadcast %19 : vector<1x128xf32> to vector<32x128xf32>
    %23 = arith.mulf %5, %22 : vector<32x128xf32>
    %24 = arith.subf %21, %23 : vector<32x128xf32>
    %25 = math.absf %24 : vector<32x128xf32>
    %cst_8 = arith.constant dense<0.000000e+00> : vector<128xf32>
    %26 = vector.multi_reduction <add>, %25, %cst_8 [0] : vector<32x128xf32> to vector<128xf32>
    %27 = vector.shape_cast %26 : vector<128xf32> to vector<1x128xf32>
    %c0_9 = arith.constant 0 : index
    %c0_10 = arith.constant 0 : index
    %28 = vector.load %arg3[%c0_9, %c0_10] : memref<1x128xf32, #tpu.memory_space<vmem>>, vector<1x128xf32>
    tpu.vector_store %arg3[%c0_9, %c0_10], %27 {strides = array<i32>} : memref<1x128xf32, #tpu.memory_space<vmem>>, vector<1x128xf32>,
    return
  }
  func.func @transform_0(%arg0: i32) -> (i32, i32, i32) {
    %c0_i32 = arith.constant 0 : i32
    %c0_i32_0 = arith.constant 0 : i32
    %c0_i32_1 = arith.constant 0 : i32
    return %c0_i32, %c0_i32_0, %arg0 : i32, i32, i32
  }
  func.func @transform_1(%arg0: i32) -> (i32, i32, i32) {
    %c1_i32 = arith.constant 1 : i32
    %c0_i32 = arith.constant 0 : i32
    %c0_i32_0 = arith.constant 0 : i32
    return %c1_i32, %c0_i32, %arg0 : i32, i32, i32
  }
  func.func @transform_2(%arg0: i32) -> (i32, i32) {
    %c0_i32 = arith.constant 0 : i32
    %c0_i32_0 = arith.constant 0 : i32
    return %c0_i32, %arg0 : i32, i32
  }
}

module attributes {stable_mosaic.version = 11 : i64} {
  func.func @_conv_mm_kernel(%arg0: i32, %arg1: i32, %arg2: memref<64x289xbf16, #tpu.memory_space<vmem>>, %arg3: memref<1x289x32xbf16, #tpu.memory_space<vmem>>, %arg4: memref<1x64x32xbf16, #tpu.memory_space<vmem>>) attributes {dimension_semantics = [#tpu.dimension_semantics<parallel>, #tpu.dimension_semantics<parallel>], iteration_bounds = array<i64: 2, 1>, scalar_prefetch = 0 : i64, scratch_operands = 0 : i64, tpu.core_type = #tpu.core_type<tc>, window_params = [{pipeline_mode = #tpu.pipeline_mode<synchronous>, transform_indices = @transform_0, window_bounds = array<i64: 64, 289>}, {transform_indices = @transform_1, window_bounds = array<i64: 1, 289, 32>}, {transform_indices = @transform_2, window_bounds = array<i64: 1, 64, 32>}]} {
    %c0 = arith.constant 0 : index
    %c0_0 = arith.constant 0 : index
    %0 = vector.load %arg2[%c0, %c0_0] : memref<64x289xbf16, #tpu.memory_space<vmem>>, vector<64x289xbf16>
    %c0_1 = arith.constant 0 : index
    %c0_2 = arith.constant 0 : index
    %c0_3 = arith.constant 0 : index
    %1 = vector.load %arg3[%c0_1, %c0_2, %c0_3] : memref<1x289x32xbf16, #tpu.memory_space<vmem>>, vector<1x289x32xbf16>
    %2 = vector.shape_cast %1 : vector<1x289x32xbf16> to vector<289x32xbf16>
    %cst = arith.constant dense<0.000000e+00> : vector<64x32xf32>
    %3 = tpu.matmul %0, %2, %cst {dimension_numbers = #tpu.dot_dimension_numbers<[1], [0], [0], [1], [0, 0, 1, 1], [], []>} : vector<64x289xbf16>, vector<289x32xbf16>, vector<64x32xf32> -> vector<64x32xf32>
    %cst_4 = arith.constant 0.000000e+00 : f32
    %4 = vector.broadcast %cst_4 : f32 to vector<64x32xf32>
    %5 = arith.maximumf %3, %4 : vector<64x32xf32>
    %6 = arith.truncf %5 : vector<64x32xf32> to vector<64x32xbf16>
    %c0_5 = arith.constant 0 : index
    %c0_6 = arith.constant 0 : index
    %c0_7 = arith.constant 0 : index
    %7 = vector.load %arg4[%c0_5, %c0_6, %c0_7] : memref<1x64x32xbf16, #tpu.memory_space<vmem>>, vector<1x64x32xbf16>
    %8 = vector.shape_cast %7 : vector<1x64x32xbf16> to vector<64x32xbf16>
    %9 = vector.shape_cast %6 : vector<64x32xbf16> to vector<1x64x32xbf16>
    tpu.vector_store %arg4[%c0_5, %c0_6, %c0_7], %9 {strides = array<i32>} : memref<1x64x32xbf16, #tpu.memory_space<vmem>>, vector<1x64x32xbf16>,
    return
  }
  func.func @transform_0(%arg0: i32, %arg1: i32) -> (i32, i32) {
    %c0_i32 = arith.constant 0 : i32
    %c0_i32_0 = arith.constant 0 : i32
    %c0_i32_1 = arith.constant 0 : i32
    return %c0_i32, %c0_i32_0 : i32, i32
  }
  func.func @transform_1(%arg0: i32, %arg1: i32) -> (i32, i32, i32) {
    %c0_i32 = arith.constant 0 : i32
    %c0_i32_0 = arith.constant 0 : i32
    return %arg0, %c0_i32, %arg1 : i32, i32, i32
  }
  func.func @transform_2(%arg0: i32, %arg1: i32) -> (i32, i32, i32) {
    %c0_i32 = arith.constant 0 : i32
    %c0_i32_0 = arith.constant 0 : i32
    return %arg0, %c0_i32, %arg1 : i32, i32, i32
  }
}

module attributes {stable_mosaic.version = 11 : i64} {
  func.func @_lpips_level_kernel(%arg0: i32, %arg1: memref<1x64x32xbf16, #tpu.memory_space<vmem>>, %arg2: memref<1x64x32xbf16, #tpu.memory_space<vmem>>, %arg3: memref<1x32xf32, #tpu.memory_space<vmem>>) attributes {dimension_semantics = [#tpu.dimension_semantics<parallel>], iteration_bounds = array<i64: 1>, scalar_prefetch = 0 : i64, scratch_operands = 0 : i64, tpu.core_type = #tpu.core_type<tc>, window_params = [{transform_indices = @transform_0, window_bounds = array<i64: 1, 64, 32>}, {transform_indices = @transform_1, window_bounds = array<i64: 1, 64, 32>}, {transform_indices = @transform_2, window_bounds = array<i64: 1, 32>}]} {
    %c0 = arith.constant 0 : index
    %c0_0 = arith.constant 0 : index
    %c0_1 = arith.constant 0 : index
    %0 = vector.load %arg1[%c0, %c0_0, %c0_1] : memref<1x64x32xbf16, #tpu.memory_space<vmem>>, vector<1x64x32xbf16>
    %1 = vector.shape_cast %0 : vector<1x64x32xbf16> to vector<64x32xbf16>
    %2 = arith.extf %1 : vector<64x32xbf16> to vector<64x32xf32>
    %c0_2 = arith.constant 0 : index
    %c0_3 = arith.constant 0 : index
    %c0_4 = arith.constant 0 : index
    %3 = vector.load %arg2[%c0_2, %c0_3, %c0_4] : memref<1x64x32xbf16, #tpu.memory_space<vmem>>, vector<1x64x32xbf16>
    %4 = vector.shape_cast %3 : vector<1x64x32xbf16> to vector<64x32xbf16>
    %5 = arith.extf %4 : vector<64x32xbf16> to vector<64x32xf32>
    %6 = arith.mulf %2, %2 : vector<64x32xf32>
    %cst = arith.constant dense<0.000000e+00> : vector<32xf32>
    %7 = vector.multi_reduction <add>, %6, %cst [0] : vector<64x32xf32> to vector<32xf32>
    %8 = vector.shape_cast %7 : vector<32xf32> to vector<1x32xf32>
    %9 = math.sqrt %8 : vector<1x32xf32>
    %10 = arith.mulf %5, %5 : vector<64x32xf32>
    %cst_5 = arith.constant dense<0.000000e+00> : vector<32xf32>
    %11 = vector.multi_reduction <add>, %10, %cst_5 [0] : vector<64x32xf32> to vector<32xf32>
    %12 = vector.shape_cast %11 : vector<32xf32> to vector<1x32xf32>
    %13 = math.sqrt %12 : vector<1x32xf32>
    %cst_6 = arith.constant 1.000000e-10 : f32
    %14 = vector.broadcast %cst_6 : f32 to vector<1x32xf32>
    %15 = arith.addf %9, %14 : vector<1x32xf32>
    %16 = tpu.reciprocal %15 {approx = true} : vector<1x32xf32> -> vector<1x32xf32>
    %cst_7 = arith.constant 1.000000e-10 : f32
    %17 = vector.broadcast %cst_7 : f32 to vector<1x32xf32>
    %18 = arith.addf %13, %17 : vector<1x32xf32>
    %19 = tpu.reciprocal %18 {approx = true} : vector<1x32xf32> -> vector<1x32xf32>
    %20 = vector.broadcast %16 : vector<1x32xf32> to vector<64x32xf32>
    %21 = arith.mulf %2, %20 : vector<64x32xf32>
    %22 = vector.broadcast %19 : vector<1x32xf32> to vector<64x32xf32>
    %23 = arith.mulf %5, %22 : vector<64x32xf32>
    %24 = arith.subf %21, %23 : vector<64x32xf32>
    %25 = math.absf %24 : vector<64x32xf32>
    %cst_8 = arith.constant dense<0.000000e+00> : vector<32xf32>
    %26 = vector.multi_reduction <add>, %25, %cst_8 [0] : vector<64x32xf32> to vector<32xf32>
    %27 = vector.shape_cast %26 : vector<32xf32> to vector<1x32xf32>
    %c0_9 = arith.constant 0 : index
    %c0_10 = arith.constant 0 : index
    %28 = vector.load %arg3[%c0_9, %c0_10] : memref<1x32xf32, #tpu.memory_space<vmem>>, vector<1x32xf32>
    tpu.vector_store %arg3[%c0_9, %c0_10], %27 {strides = array<i32>} : memref<1x32xf32, #tpu.memory_space<vmem>>, vector<1x32xf32>,
    return
  }
  func.func @transform_0(%arg0: i32) -> (i32, i32, i32) {
    %c0_i32 = arith.constant 0 : i32
    %c0_i32_0 = arith.constant 0 : i32
    %c0_i32_1 = arith.constant 0 : i32
    return %c0_i32, %c0_i32_0, %arg0 : i32, i32, i32
  }
  func.func @transform_1(%arg0: i32) -> (i32, i32, i32) {
    %c1_i32 = arith.constant 1 : i32
    %c0_i32 = arith.constant 0 : i32
    %c0_i32_0 = arith.constant 0 : i32
    return %c1_i32, %c0_i32, %arg0 : i32, i32, i32
  }
  func.func @transform_2(%arg0: i32) -> (i32, i32) {
    %c0_i32 = arith.constant 0 : i32
    %c0_i32_0 = arith.constant 0 : i32
    return %c0_i32, %arg0 : i32, i32
  }
}

module attributes {stable_mosaic.version = 11 : i64} {
  func.func @_conv_mm_kernel(%arg0: i32, %arg1: i32, %arg2: memref<128x577xbf16, #tpu.memory_space<vmem>>, %arg3: memref<1x577x8xbf16, #tpu.memory_space<vmem>>, %arg4: memref<1x128x8xbf16, #tpu.memory_space<vmem>>) attributes {dimension_semantics = [#tpu.dimension_semantics<parallel>, #tpu.dimension_semantics<parallel>], iteration_bounds = array<i64: 2, 1>, scalar_prefetch = 0 : i64, scratch_operands = 0 : i64, tpu.core_type = #tpu.core_type<tc>, window_params = [{pipeline_mode = #tpu.pipeline_mode<synchronous>, transform_indices = @transform_0, window_bounds = array<i64: 128, 577>}, {transform_indices = @transform_1, window_bounds = array<i64: 1, 577, 8>}, {transform_indices = @transform_2, window_bounds = array<i64: 1, 128, 8>}]} {
    %c0 = arith.constant 0 : index
    %c0_0 = arith.constant 0 : index
    %0 = vector.load %arg2[%c0, %c0_0] : memref<128x577xbf16, #tpu.memory_space<vmem>>, vector<128x577xbf16>
    %c0_1 = arith.constant 0 : index
    %c0_2 = arith.constant 0 : index
    %c0_3 = arith.constant 0 : index
    %1 = vector.load %arg3[%c0_1, %c0_2, %c0_3] : memref<1x577x8xbf16, #tpu.memory_space<vmem>>, vector<1x577x8xbf16>
    %2 = vector.shape_cast %1 : vector<1x577x8xbf16> to vector<577x8xbf16>
    %cst = arith.constant dense<0.000000e+00> : vector<128x8xf32>
    %3 = tpu.matmul %0, %2, %cst {dimension_numbers = #tpu.dot_dimension_numbers<[1], [0], [0], [1], [0, 0, 1, 1], [], []>} : vector<128x577xbf16>, vector<577x8xbf16>, vector<128x8xf32> -> vector<128x8xf32>
    %cst_4 = arith.constant 0.000000e+00 : f32
    %4 = vector.broadcast %cst_4 : f32 to vector<128x8xf32>
    %5 = arith.maximumf %3, %4 : vector<128x8xf32>
    %6 = arith.truncf %5 : vector<128x8xf32> to vector<128x8xbf16>
    %c0_5 = arith.constant 0 : index
    %c0_6 = arith.constant 0 : index
    %c0_7 = arith.constant 0 : index
    %7 = vector.load %arg4[%c0_5, %c0_6, %c0_7] : memref<1x128x8xbf16, #tpu.memory_space<vmem>>, vector<1x128x8xbf16>
    %8 = vector.shape_cast %7 : vector<1x128x8xbf16> to vector<128x8xbf16>
    %9 = vector.shape_cast %6 : vector<128x8xbf16> to vector<1x128x8xbf16>
    tpu.vector_store %arg4[%c0_5, %c0_6, %c0_7], %9 {strides = array<i32>} : memref<1x128x8xbf16, #tpu.memory_space<vmem>>, vector<1x128x8xbf16>,
    return
  }
  func.func @transform_0(%arg0: i32, %arg1: i32) -> (i32, i32) {
    %c0_i32 = arith.constant 0 : i32
    %c0_i32_0 = arith.constant 0 : i32
    %c0_i32_1 = arith.constant 0 : i32
    return %c0_i32, %c0_i32_0 : i32, i32
  }
  func.func @transform_1(%arg0: i32, %arg1: i32) -> (i32, i32, i32) {
    %c0_i32 = arith.constant 0 : i32
    %c0_i32_0 = arith.constant 0 : i32
    return %arg0, %c0_i32, %arg1 : i32, i32, i32
  }
  func.func @transform_2(%arg0: i32, %arg1: i32) -> (i32, i32, i32) {
    %c0_i32 = arith.constant 0 : i32
    %c0_i32_0 = arith.constant 0 : i32
    return %arg0, %c0_i32, %arg1 : i32, i32, i32
  }
}

module attributes {stable_mosaic.version = 11 : i64} {
  func.func @_lpips_level_kernel(%arg0: i32, %arg1: memref<1x128x8xbf16, #tpu.memory_space<vmem>>, %arg2: memref<1x128x8xbf16, #tpu.memory_space<vmem>>, %arg3: memref<1x8xf32, #tpu.memory_space<vmem>>) attributes {dimension_semantics = [#tpu.dimension_semantics<parallel>], iteration_bounds = array<i64: 1>, scalar_prefetch = 0 : i64, scratch_operands = 0 : i64, tpu.core_type = #tpu.core_type<tc>, window_params = [{transform_indices = @transform_0, window_bounds = array<i64: 1, 128, 8>}, {transform_indices = @transform_1, window_bounds = array<i64: 1, 128, 8>}, {transform_indices = @transform_2, window_bounds = array<i64: 1, 8>}]} {
    %c0 = arith.constant 0 : index
    %c0_0 = arith.constant 0 : index
    %c0_1 = arith.constant 0 : index
    %0 = vector.load %arg1[%c0, %c0_0, %c0_1] : memref<1x128x8xbf16, #tpu.memory_space<vmem>>, vector<1x128x8xbf16>
    %1 = vector.shape_cast %0 : vector<1x128x8xbf16> to vector<128x8xbf16>
    %2 = arith.extf %1 : vector<128x8xbf16> to vector<128x8xf32>
    %c0_2 = arith.constant 0 : index
    %c0_3 = arith.constant 0 : index
    %c0_4 = arith.constant 0 : index
    %3 = vector.load %arg2[%c0_2, %c0_3, %c0_4] : memref<1x128x8xbf16, #tpu.memory_space<vmem>>, vector<1x128x8xbf16>
    %4 = vector.shape_cast %3 : vector<1x128x8xbf16> to vector<128x8xbf16>
    %5 = arith.extf %4 : vector<128x8xbf16> to vector<128x8xf32>
    %6 = arith.mulf %2, %2 : vector<128x8xf32>
    %cst = arith.constant dense<0.000000e+00> : vector<8xf32>
    %7 = vector.multi_reduction <add>, %6, %cst [0] : vector<128x8xf32> to vector<8xf32>
    %8 = vector.shape_cast %7 : vector<8xf32> to vector<1x8xf32>
    %9 = math.sqrt %8 : vector<1x8xf32>
    %10 = arith.mulf %5, %5 : vector<128x8xf32>
    %cst_5 = arith.constant dense<0.000000e+00> : vector<8xf32>
    %11 = vector.multi_reduction <add>, %10, %cst_5 [0] : vector<128x8xf32> to vector<8xf32>
    %12 = vector.shape_cast %11 : vector<8xf32> to vector<1x8xf32>
    %13 = math.sqrt %12 : vector<1x8xf32>
    %cst_6 = arith.constant 1.000000e-10 : f32
    %14 = vector.broadcast %cst_6 : f32 to vector<1x8xf32>
    %15 = arith.addf %9, %14 : vector<1x8xf32>
    %16 = tpu.reciprocal %15 {approx = true} : vector<1x8xf32> -> vector<1x8xf32>
    %cst_7 = arith.constant 1.000000e-10 : f32
    %17 = vector.broadcast %cst_7 : f32 to vector<1x8xf32>
    %18 = arith.addf %13, %17 : vector<1x8xf32>
    %19 = tpu.reciprocal %18 {approx = true} : vector<1x8xf32> -> vector<1x8xf32>
    %20 = vector.broadcast %16 : vector<1x8xf32> to vector<128x8xf32>
    %21 = arith.mulf %2, %20 : vector<128x8xf32>
    %22 = vector.broadcast %19 : vector<1x8xf32> to vector<128x8xf32>
    %23 = arith.mulf %5, %22 : vector<128x8xf32>
    %24 = arith.subf %21, %23 : vector<128x8xf32>
    %25 = math.absf %24 : vector<128x8xf32>
    %cst_8 = arith.constant dense<0.000000e+00> : vector<8xf32>
    %26 = vector.multi_reduction <add>, %25, %cst_8 [0] : vector<128x8xf32> to vector<8xf32>
    %27 = vector.shape_cast %26 : vector<8xf32> to vector<1x8xf32>
    %c0_9 = arith.constant 0 : index
    %c0_10 = arith.constant 0 : index
    %28 = vector.load %arg3[%c0_9, %c0_10] : memref<1x8xf32, #tpu.memory_space<vmem>>, vector<1x8xf32>
    tpu.vector_store %arg3[%c0_9, %c0_10], %27 {strides = array<i32>} : memref<1x8xf32, #tpu.memory_space<vmem>>, vector<1x8xf32>,
    return
  }
  func.func @transform_0(%arg0: i32) -> (i32, i32, i32) {
    %c0_i32 = arith.constant 0 : i32
    %c0_i32_0 = arith.constant 0 : i32
    %c0_i32_1 = arith.constant 0 : i32
    return %c0_i32, %c0_i32_0, %arg0 : i32, i32, i32
  }
  func.func @transform_1(%arg0: i32) -> (i32, i32, i32) {
    %c1_i32 = arith.constant 1 : i32
    %c0_i32 = arith.constant 0 : i32
    %c0_i32_0 = arith.constant 0 : i32
    return %c1_i32, %c0_i32, %arg0 : i32, i32, i32
  }
  func.func @transform_2(%arg0: i32) -> (i32, i32) {
    %c0_i32 = arith.constant 0 : i32
    %c0_i32_0 = arith.constant 0 : i32
    return %c0_i32, %arg0 : i32, i32
  }
}

</mosaic_0001>

<llo_original>
// kernel: lpips.12
$region0: #{lpips.12}
  #allocation0 [shape = 'u32[]', space=smem, size = 0x4, offset = 0x4, fixed_abs, tag = 'smem constant byte address 0x4 - core index']
  #allocation1 [shape = 'u32[144,128]{1,0:T(1,128)}', space=vmem, size = 0x12000, scoped, tag = 'internal scratch']
  %s0 = inlined_call_operand.vmem [shape: bf16[2,16,512], index: 0, kind: input, shape index: {}, may-alias: {0,1}]
  %s1 = inlined_call_operand.vmem [shape: bf16[2,16,512], index: 1, kind: input, shape index: {}, may-alias: {0,1}]
  %s2 = inlined_call_operand.vmem [shape: f32[1,512], index: 2, kind: output, shape index: {}]
  %s3 = sld [smem:[#allocation0]]
  $region18: #{lpips.12} parent=0
    _
  %s5 = ssub.s32 1, %s3
  %s6 = scalar_select 0, %s5, %s3
  // Predicated region
  $region2: #{lpips.12} parent=0 // pred_check
    _
  $region3: #{lpips.12} parent=0 // pred_check_branch
    %8 = sbr.rel (0) target = $region5
  $region4: #{lpips.12} parent=0 // pred_region
    _
  $region5: #{lpips.12} parent=0 // pred_fallthru
    _
  // Predicated region
  $region6: #{lpips.12} parent=0 // pred_check
    _
  $region7: #{lpips.12} parent=0 // pred_check_branch
    %10 = sbr.rel (0) target = $region9
  $region8: #{lpips.12} parent=0 // pred_region
    %s11 = scalar_lea.vmem %s1, 32
  $region9: #{lpips.12} parent=0 // pred_fallthru
    _
  %s12 = scalar_lea.vmem %s1, 32
  %s13 = scalar_lea.vmem %s1, 32
  %v14 = vld [vmem:[%s0] sm:$0xff]
  %v15 = vld [vmem:[%s0 + $0x8] sm:$0xff]
  %v16 = vld [vmem:[%s0 + $0x10] sm:$0xff]
  %v17 = vld [vmem:[%s0 + $0x18] sm:$0xff]
  %v18 = vunpack.c.l.bf16 %v14
  %v19 = vunpack.c.h.bf16 %v14
  %v20 = vunpack.c.l.bf16 %v15
  %v21 = vunpack.c.h.bf16 %v15
  %v22 = vunpack.c.l.bf16 %v16
  %v23 = vunpack.c.h.bf16 %v16
  %v24 = vunpack.c.l.bf16 %v17
  %v25 = vunpack.c.h.bf16 %v17
  %v26 = vld [vmem:[%s13] sm:$0xff]
  %v27 = vld [vmem:[%s13 + $0x8] sm:$0xff]
  %v28 = vld [vmem:[%s13 + $0x10] sm:$0xff]
  %v29 = vld [vmem:[%s13 + $0x18] sm:$0xff]
  %v30 = vunpack.c.l.bf16 %v26
  %v31 = vunpack.c.h.bf16 %v26
  %v32 = vunpack.c.l.bf16 %v27
  %v33 = vunpack.c.h.bf16 %v27
  %v34 = vunpack.c.l.bf16 %v28
  %v35 = vunpack.c.h.bf16 %v28
  %v36 = vunpack.c.l.bf16 %v29
  %v37 = vunpack.c.h.bf16 %v29
  %v38 = vmul.f32 %v18, %v18
  %v39 = vmul.f32 %v19, %v19
  %v40 = vmul.f32 %v20, %v20
  %v41 = vmul.f32 %v21, %v21
  %v42 = vmul.f32 %v22, %v22
  %v43 = vmul.f32 %v23, %v23
  %v44 = vmul.f32 %v24, %v24
  %v45 = vmul.f32 %v25, %v25
  %v46 = vadd.f32 %v38, %v42
  %v47 = vrot.slane %v46, 4
  %v48 = vadd.f32 %v46, %v47
  %v49 = vrot.slane %v48, 2
  %v50 = vadd.f32 %v48, %v49
  %v51 = vrot.slane %v50, 1
  %v52 = vadd.f32 %v50, %v51
  %v53 = vadd.f32 %v39, %v43
  %v54 = vrot.slane %v53, 4
  %v55 = vadd.f32 %v53, %v54
  %v56 = vrot.slane %v55, 2
  %v57 = vadd.f32 %v55, %v56
  %v58 = vrot.slane %v57, 1
  %v59 = vadd.f32 %v57, %v58
  %v60 = vadd.f32 %v40, %v44
  %v61 = vrot.slane %v60, 4
  %v62 = vadd.f32 %v60, %v61
  %v63 = vrot.slane %v62, 2
  %v64 = vadd.f32 %v62, %v63
  %v65 = vrot.slane %v64, 1
  %v66 = vadd.f32 %v64, %v65
  %v67 = vadd.f32 %v41, %v45
  %v68 = vrot.slane %v67, 4
  %v69 = vadd.f32 %v67, %v68
  %v70 = vrot.slane %v69, 2
  %v71 = vadd.f32 %v69, %v70
  %v72 = vrot.slane %v71, 1
  %v73 = vadd.f32 %v71, %v72
  %v74 = vrsqrt.pop %v52
  %v75 = vmul.f32 %v52, %v74
  %vm76 = vcmp.eq.f32.partialorder %v52, inf
  %v77 = vsel %vm76, %v52, %v75
  %vm78 = vcmp.eq.f32.partialorder %v52, 0.0
  %v79 = vand.u32 %v52, 2147483648
  %v80 = vsel %vm78, %v79, %v77
  %v81 = vrsqrt.pop %v59
  %v82 = vmul.f32 %v59, %v81
  %vm83 = vcmp.eq.f32.partialorder %v59, inf
  %v84 = vsel %vm83, %v59, %v82
  %vm85 = vcmp.eq.f32.partialorder %v59, 0.0
  %v86 = vand.u32 %v59, 2147483648
  %v87 = vsel %vm85, %v86, %v84
  %v88 = vrsqrt.pop %v66
  %v89 = vmul.f32 %v66, %v88
  %vm90 = vcmp.eq.f32.partialorder %v66, inf
  %v91 = vsel %vm90, %v66, %v89
  %vm92 = vcmp.eq.f32.partialorder %v66, 0.0
  %v93 = vand.u32 %v66, 2147483648
  %v94 = vsel %vm92, %v93, %v91
  %v95 = vrsqrt.pop %v73
  %v96 = vmul.f32 %v73, %v95
  %vm97 = vcmp.eq.f32.partialorder %v73, inf
  %v98 = vsel %vm97, %v73, %v96
  %vm99 = vcmp.eq.f32.partialorder %v73, 0.0
  %v100 = vand.u32 %v73, 2147483648
  %v101 = vsel %vm99, %v100, %v98
  %v102 = vmul.f32 %v30, %v30
  %v103 = vmul.f32 %v31, %v31
  %v104 = vmul.f32 %v32, %v32
  %v105 = vmul.f32 %v33, %v33
  %v106 = vmul.f32 %v34, %v34
  %v107 = vmul.f32 %v35, %v35
  %v108 = vmul.f32 %v36, %v36
  %v109 = vmul.f32 %v37, %v37
  %v110 = vadd.f32 %v102, %v106
  %v111 = vrot.slane %v110, 4
  %v112 = vadd.f32 %v110, %v111
  %v113 = vrot.slane %v112, 2
  %v114 = vadd.f32 %v112, %v113
  %v115 = vrot.slane %v114, 1
  %v116 = vadd.f32 %v114, %v115
  %v117 = vadd.f32 %v103, %v107
  %v118 = vrot.slane %v117, 4
  %v119 = vadd.f32 %v117, %v118
  %v120 = vrot.slane %v119, 2
  %v121 = vadd.f32 %v119, %v120
  %v122 = vrot.slane %v121, 1
  %v123 = vadd.f32 %v121, %v122
  %v124 = vadd.f32 %v104, %v108
  %v125 = vrot.slane %v124, 4
  %v126 = vadd.f32 %v124, %v125
  %v127 = vrot.slane %v126, 2
  %v128 = vadd.f32 %v126, %v127
  %v129 = vrot.slane %v128, 1
  %v130 = vadd.f32 %v128, %v129
  %v131 = vadd.f32 %v105, %v109
  %v132 = vrot.slane %v131, 4
  %v133 = vadd.f32 %v131, %v132
  %v134 = vrot.slane %v133, 2
  %v135 = vadd.f32 %v133, %v134
  %v136 = vrot.slane %v135, 1
  %v137 = vadd.f32 %v135, %v136
  %v138 = vrsqrt.pop %v116
  %v139 = vmul.f32 %v116, %v138
  %vm140 = vcmp.eq.f32.partialorder %v116, inf
  %v141 = vsel %vm140, %v116, %v139
  %vm142 = vcmp.eq.f32.partialorder %v116, 0.0
  %v143 = vand.u32 %v116, 2147483648
  %v144 = vsel %vm142, %v143, %v141
  %v145 = vrsqrt.pop %v123
  %v146 = vmul.f32 %v123, %v145
  %vm147 = vcmp.eq.f32.partialorder %v123, inf
  %v148 = vsel %vm147, %v123, %v146
  %vm149 = vcmp.eq.f32.partialorder %v123, 0.0
  %v150 = vand.u32 %v123, 2147483648
  %v151 = vsel %vm149, %v150, %v148
  %v152 = vrsqrt.pop %v130
  %v153 = vmul.f32 %v130, %v152
  %vm154 = vcmp.eq.f32.partialorder %v130, inf
  %v155 = vsel %vm154, %v130, %v153
  %vm156 = vcmp.eq.f32.partialorder %v130, 0.0
  %v157 = vand.u32 %v130, 2147483648
  %v158 = vsel %vm156, %v157, %v155
  %v159 = vrsqrt.pop %v137
  %v160 = vmul.f32 %v137, %v159
  %vm161 = vcmp.eq.f32.partialorder %v137, inf
  %v162 = vsel %vm161, %v137, %v160
  %vm163 = vcmp.eq.f32.partialorder %v137, 0.0
  %v164 = vand.u32 %v137, 2147483648
  %v165 = vsel %vm163, %v164, %v162
  %v166 = vadd.f32 %v80, 1e-10
  %v167 = vadd.f32 %v87, 1e-10
  %v168 = vadd.f32 %v94, 1e-10
  %v169 = vadd.f32 %v101, 1e-10
  %v170 = vrcp.pop %v166
  %v171 = vrcp.pop %v167
  %v172 = vrcp.pop %v168
  %v173 = vrcp.pop %v169
  %v174 = vadd.f32 %v144, 1e-10
  %v175 = vadd.f32 %v151, 1e-10
  %v176 = vadd.f32 %v158, 1e-10
  %v177 = vadd.f32 %v165, 1e-10
  %v178 = vrcp.pop %v174
  %v179 = vrcp.pop %v175
  %v180 = vrcp.pop %v176
  %v181 = vrcp.pop %v177
  %v182 = vmul.f32 %v18, %v170
  %v183 = vmul.f32 %v19, %v171
  %v184 = vmul.f32 %v20, %v172
  %v185 = vmul.f32 %v21, %v173
  %v186 = vmul.f32 %v22, %v170
  %v187 = vmul.f32 %v23, %v171
  %v188 = vmul.f32 %v24, %v172
  %v189 = vmul.f32 %v25, %v173
  %v190 = vmul.f32 %v30, %v178
  %v191 = vmul.f32 %v31, %v179
  %v192 = vmul.f32 %v32, %v180
  %v193 = vmul.f32 %v33, %v181
  %v194 = vmul.f32 %v34, %v178
  %v195 = vmul.f32 %v35, %v179
  %v196 = vmul.f32 %v36, %v180
  %v197 = vmul.f32 %v37, %v181
  %v198 = vsub.f32 %v182, %v190
  %v199 = vsub.f32 %v183, %v191
  %v200 = vsub.f32 %v184, %v192
  %v201 = vsub.f32 %v185, %v193
  %v202 = vsub.f32 %v186, %v194
  %v203 = vsub.f32 %v187, %v195
  %v204 = vsub.f32 %v188, %v196
  %v205 = vsub.f32 %v189, %v197
  %v206 = vand.u32 2147483647, %v198
  %v207 = vand.u32 2147483647, %v199
  %v208 = vand.u32 2147483647, %v200
  %v209 = vand.u32 2147483647, %v201
  %v210 = vand.u32 2147483647, %v202
  %v211 = vand.u32 2147483647, %v203
  %v212 = vand.u32 2147483647, %v204
  %v213 = vand.u32 2147483647, %v205
  %v214 = vadd.f32 %v206, %v210
  %v215 = vrot.slane %v214, 4
  %v216 = vadd.f32 %v214, %v215
  %v217 = vrot.slane %v216, 2
  %v218 = vadd.f32 %v216, %v217
  %v219 = vrot.slane %v218, 1
  %v220 = vadd.f32 %v218, %v219
  %v221 = vadd.f32 %v207, %v211
  %v222 = vrot.slane %v221, 4
  %v223 = vadd.f32 %v221, %v222
  %v224 = vrot.slane %v223, 2
  %v225 = vadd.f32 %v223, %v224
  %v226 = vrot.slane %v225, 1
  %v227 = vadd.f32 %v225, %v226
  %v228 = vadd.f32 %v208, %v212
  %v229 = vrot.slane %v228, 4
  %v230 = vadd.f32 %v228, %v229
  %v231 = vrot.slane %v230, 2
  %v232 = vadd.f32 %v230, %v231
  %v233 = vrot.slane %v232, 1
  %v234 = vadd.f32 %v232, %v233
  %v235 = vadd.f32 %v209, %v213
  %v236 = vrot.slane %v235, 4
  %v237 = vadd.f32 %v235, %v236
  %v238 = vrot.slane %v237, 2
  %v239 = vadd.f32 %v237, %v238
  %v240 = vrot.slane %v239, 1
  %v241 = vadd.f32 %v239, %v240
  %v246 = vcombine.low %v220, %v227
  %v247 = vcombine.low %v234, %v241
  %v249 = vunpack.c.l.s4 1966171168
  %v250 = vunpack.c.0.s8 %v249
  %v251 = vlaneseq
  %v252 = vshrl.u32 %v251, 7
  %v253 = vsub.s32 %v250, %v252
  %v254 = vrot.slane %v246, %v253
  %v256 = vunpack.c.l.s4 1966171168
  %v257 = vunpack.c.0.s8 %v256
  %v258 = vlaneseq
  %v259 = vshrl.u32 %v258, 7
  %v260 = vsub.s32 %v257, %v259
  %v261 = vrot.slane %v247, %v260
  %v262 = vcombine.low %v254, %v261
  %v264 = vunpack.c.l.s4 1966171168
  %v265 = vunpack.c.0.s8 %v264
  %v266 = vlaneseq
  %v267 = vshrl.u32 %v266, 7
  %v268 = vsub.s32 %v265, %v267
  %v269 = vrot.slane %v262, %v268
  %v271 = vlaneseq
  %vm272 = vcmp.ge.s32.totalorder %v271, 0
  %vm273 = vcmp.lt.s32.totalorder %v271, 512
  %vm274 = vmand %vm272, %vm273
  %275 = vst.msk [vmem:[%s2] sm:$0xf] %vm274, %v269
  // Predicated region
  $region10: #{lpips.12} parent=0 // pred_check
    _
  $region11: #{lpips.12} parent=0 // pred_check_branch
    %277 = sbr.rel (0) target = $region13
  $region12: #{lpips.12} parent=0 // pred_region
    _
  $region13: #{lpips.12} parent=0 // pred_fallthru
    _
  // Predicated region
  $region14: #{lpips.12} parent=0 // pred_check
    _
  $region15: #{lpips.12} parent=0 // pred_check_branch
    %279 = sbr.rel (0) target = $region17
  $region16: #{lpips.12} parent=0 // pred_region
    _
  $region17: #{lpips.12} parent=0 // pred_fallthru
    _

// kernel: lpips.8
$region0: #{lpips.8}
  #allocation0 [shape = 'u32[]', space=smem, size = 0x4, offset = 0x4, fixed_abs, tag = 'smem constant byte address 0x4 - core index']
  #allocation1 [shape = 'u32[144,128]{1,0:T(1,128)}', space=vmem, size = 0x12000, scoped, tag = 'internal scratch']
  %s0 = inlined_call_operand.vmem [shape: bf16[16,28], index: 0, kind: input, shape index: {}]
  %s1 = inlined_call_operand.vmem [shape: bf16[2,28,512], index: 1, kind: input, shape index: {}]
  %s2 = inlined_call_operand.vmem [shape: bf16[2,16,512], index: 2, kind: output, shape index: {}]
  %s3 = sld [smem:[#allocation0]]
  $region41: #{lpips.8} parent=0
    _
  %s5 = ssub.s32 1, %s3
  %s6 = scalar_select 0, %s5, %s3
  loop: start=0, step=1, limit=4
  $region2: #{lpips.8} parent=0 // loop_pre_header
    _
  $region3: #{lpips.8} parent=0 // loop_header
    %s8 = sphi 0, %s12
    %p9 = scmp.ge.s32.totalorder %s8, 4
    %s15 = sphi 0, %s27
    %s16 = sphi 0, %s23
    %s17 = sphi 0, %s15
    %s18 = sphi 0, %s16
    %s19 = sphi 0, %s17
    %s20 = sphi 0, %s18
    %s28 = sphi 0, %s28
    %s30 = sphi 0, %s28
    %s31 = sphi 0, %s30
    %s45 = sphi 0, %s31
    %s53 = sphi 0, %s55
    %s56 = sphi 0, %s53
    %s57 = sphi 0, %s56
    %s73 = sphi 0, %s57
    %s81 = sphi 0, %s83
    %s84 = sphi 0, %s81
    %s85 = sphi 0, %s84
    %s101 = sphi 0, %s85
  $region4: #{lpips.8} parent=0 // loop_header_branch
    %11 = sbr.rel (%p9) target = $region8
  $region5: #{lpips.8} parent=0 // loop_body
    %s13 = ssub.s32 %s8, 1
    %s14 = ssub.s32 %s8, 2
    %s21 = sadd.s32 1, %s16
    %p22 = scmp.ge.s32.totalorder %s21, 1
    %s23 = scalar_select %p22, 0, %s21
    %s24 = sadd.s32 1, %s15
    %s25 = scalar_select %p22, %s24, %s15
    %p26 = scmp.ge.s32.totalorder %s25, 2
    %s27 = scalar_select %p26, 0, %s25
    %s29 = sadd.s32 %s28, 1
    %p32 = scmp.eq.s32.totalorder %s8, 1
    %p33 = scmp.ne.s32.totalorder %s28, %s30
    %p34 = scmp.eq.s32.totalorder %s8, 0
    %p35 = por %p33, %p34
    %p36 = scmp.ne.s32.totalorder %s28, %s30
    %p37 = scmp.eq.s32.totalorder %s13, 1
    %p38 = por %p36, %p37
    %p39 = scmp.ne.s32.totalorder %s30, %s31
    %p40 = scmp.eq.s32.totalorder %s13, 0
    %p41 = por %p39, %p40
    %p42 = scmp.ne.s32.totalorder %s30, %s31
    %p43 = scmp.eq.s32.totalorder %s14, 1
    %p44 = por %p42, %p43
    %p46 = scmp.ne.s32.totalorder %s31, %s45
    %p47 = scmp.eq.s32.totalorder %s14, 0
    %p48 = por %p46, %p47
    %s49 = ssub.s32 %s15, %s27
    %s50 = ssub.s32 %s16, %s23
    %s51 = sor.u32 %s49, %s50
    %p52 = scmp.eq.s32.totalorder %s51, 0
    %s54 = sadd.s32 %s53, 1
    %s55 = scalar_select %p52, %s53, %s54
    %p58 = pneg %p52
    %p59 = scmp.eq.s32.totalorder %s8, 1
    %p60 = por %p58, %p59
    %p61 = scmp.ne.s32.totalorder %s53, %s56
    %p62 = scmp.eq.s32.totalorder %s8, 0
    %p63 = por %p61, %p62
    %p64 = scmp.ne.s32.totalorder %s53, %s56
    %p65 = scmp.eq.s32.totalorder %s13, 1
    %p66 = por %p64, %p65
    %p67 = scmp.ne.s32.totalorder %s56, %s57
    %p68 = scmp.eq.s32.totalorder %s13, 0
    %p69 = por %p67, %p68
    %p70 = scmp.ne.s32.totalorder %s56, %s57
    %p71 = scmp.eq.s32.totalorder %s14, 1
    %p72 = por %p70, %p71
    %p74 = scmp.ne.s32.totalorder %s57, %s73
    %p75 = scmp.eq.s32.totalorder %s14, 0
    %p76 = por %p74, %p75
    %s77 = ssub.s32 %s15, %s27
    %s78 = ssub.s32 %s16, %s23
    %s79 = sor.u32 %s77, %s78
    %p80 = scmp.eq.s32.totalorder %s79, 0
    %s82 = sadd.s32 %s81, 1
    %s83 = scalar_select %p80, %s81, %s82
    %p86 = pneg %p80
    %p87 = scmp.eq.s32.totalorder %s8, 1
    %p88 = por %p86, %p87
    %p89 = scmp.ne.s32.totalorder %s81, %s84
    %p90 = scmp.eq.s32.totalorder %s8, 0
    %p91 = por %p89, %p90
    %p92 = scmp.ne.s32.totalorder %s81, %s84
    %p93 = scmp.eq.s32.totalorder %s13, 1
    %p94 = por %p92, %p93
    %p95 = scmp.ne.s32.totalorder %s84, %s85
    %p96 = scmp.eq.s32.totalorder %s13, 0
    %p97 = por %p95, %p96
    %p98 = scmp.ne.s32.totalorder %s84, %s85
    %p99 = scmp.eq.s32.totalorder %s14, 1
    %p100 = por %p98, %p99
    %p102 = scmp.ne.s32.totalorder %s85, %s101
    %p103 = scmp.eq.s32.totalorder %s14, 0
    %p104 = por %p102, %p103
    %p105 = scmp.le.s32.totalorder 1, %s8
    %p106 = scmp.lt.s32.totalorder %s8, 3
    %p107 = pnand %p105, %p106
    %p108 = pneg %p107
    // Predicated region
    $region9: #{lpips.8} parent=5 // pred_check
      _
    $region10: #{lpips.8} parent=5 // pred_check_branch
      %110 = sbr.rel (%p107) target = $region12
    $region11: #{lpips.8} parent=5 // pred_region
      %s111 = ssub.s32 %s8, 1
      // Predicated region
      $region13: #{lpips.8} parent=11 // pred_check
        %p112 = pneg %p41
      $region14: #{lpips.8} parent=11 // pred_check_branch
        %114 = sbr.rel (%p112) target = $region16
      $region15: #{lpips.8} parent=11 // pred_region
        _
      $region16: #{lpips.8} parent=11 // pred_fallthru
        _
    $region12: #{lpips.8} parent=5 // pred_fallthru
      _
    %p115 = scmp.lt.s32.totalorder %s8, 2
    // Predicated region
    $region17: #{lpips.8} parent=5 // pred_check
      %p116 = pneg %p115
    $region18: #{lpips.8} parent=5 // pred_check_branch
      %118 = sbr.rel (%p116) target = $region20
    $region19: #{lpips.8} parent=5 // pred_region
      // Predicated region
      $region21: #{lpips.8} parent=19 // pred_check
        %p119 = pneg %p63
      $region22: #{lpips.8} parent=19 // pred_check_branch
        %121 = sbr.rel (%p119) target = $region24
      $region23: #{lpips.8} parent=19 // pred_region
        %s122 = smul.u32 4, %s16
        %p123 = scmp.lt.s32.totalorder %s15, 1
        %s124 = scalar_select %p123, %s15, 1
        %p125 = scmp.lt.s32.totalorder %s122, 3
        %s126 = scalar_select %p125, %s122, 3
        %s127 = smul.addr %s124, 16
        %s128 = sadd.s32 %s126, %s127
        %s129 = smul.addr %s128, 4
        %s130 = scalar_lea.vmem %s1, %s129
        %s131 = smul.u32 4, %s16
      $region24: #{lpips.8} parent=19 // pred_fallthru
        _
    $region20: #{lpips.8} parent=5 // pred_fallthru
      _
    %p132 = scmp.le.s32.totalorder 1, %s8
    %p133 = scmp.lt.s32.totalorder %s8, 3
    %p134 = pnand %p132, %p133
    %p135 = pneg %p134
    // Predicated region
    $region25: #{lpips.8} parent=5 // pred_check
      _
    $region26: #{lpips.8} parent=5 // pred_check_branch
      %137 = sbr.rel (%p134) target = $region28
    $region27: #{lpips.8} parent=5 // pred_region
      %s138 = ssub.s32 %s8, 1
      %p139 = pneg %p41
      %p140 = pneg %p38
      %s141 = smul.u32 4, %s18
      %p142 = scmp.lt.s32.totalorder %s17, 1
      %s143 = scalar_select %p142, %s17, 1
      %p144 = scmp.lt.s32.totalorder %s141, 3
      %s145 = scalar_select %p144, %s141, 3
      %s146 = smul.addr %s143, 16
      %s147 = sadd.s32 %s145, %s146
      %s148 = smul.addr %s147, 4
      %s149 = scalar_lea.vmem %s1, %s148
      %p150 = pneg %p69
      %p151 = pneg %p66
      %p152 = pneg %p97
      %p153 = pneg %p94
      %s154 = smul.u32 4, %s18
      %p155 = scmp.lt.s32.totalorder %s17, 1
      %s156 = scalar_select %p155, %s17, 1
      %p157 = scmp.lt.s32.totalorder %s154, 3
      %s158 = scalar_select %p157, %s154, 3
      %s159 = smul.addr %s156, 8
      %s160 = sadd.s32 %s158, %s159
      %s161 = smul.addr %s160, 4
      %s162 = scalar_lea.vmem %s2, %s161
      %s163 = smul.u32 4, %s18
      %p164 = scmp.lt.s32.totalorder %s17, 1
      %s165 = scalar_select %p164, %s17, 1
      %p166 = scmp.lt.s32.totalorder %s163, 3
      %s167 = scalar_select %p166, %s163, 3
      %s168 = smul.addr %s165, 16
      %s169 = sadd.s32 %s167, %s168
      %s170 = smul.addr %s169, 4
      %s171 = scalar_lea.vmem %s1, %s170
      %s172 = smul.u32 4, %s18
      %s173 = smul.u32 4, %s18
      %p174 = scmp.lt.s32.totalorder %s17, 1
      %s175 = scalar_select %p174, %s17, 1
      %p176 = scmp.lt.s32.totalorder %s173, 3
      %s177 = scalar_select %p176, %s173, 3
      %s178 = smul.addr %s175, 8
      %s179 = sadd.s32 %s177, %s178
      %s180 = smul.addr %s179, 4
      %s181 = scalar_lea.vmem %s2, %s180
      %s182 = smul.u32 4, %s18
      %v184 = vld [vmem:[%s0] sm:$0xf]
      %v185 = vld [vmem:[%s0 + $0x4] sm:$0xf]
      %v186 = vld [vmem:[%s171] sm:$0xff]
      %v187 = vld [vmem:[%s171 + $0x8] sm:$0xff]
      %v188 = vld [vmem:[%s171 + $0x10] sm:$0xff]
      %v189 = vld [vmem:[%s171 + $0x18] sm:$0xff]
      %v190 = vld [vmem:[%s171 + $0x20] sm:$0xff]
      %v191 = vld [vmem:[%s171 + $0x28] sm:$0xff]
      %v192 = vld [vmem:[%s171 + $0x30] sm:$0x33]
      %v193 = vld [vmem:[%s171 + $0x38] sm:$0x33]
      %v196 = vunpack.c.l.b16 %v184
      %v197 = vunpack.c.l.b16 %v185
      %v198 = vpack.c.b16 %v197, %v196
      %v207 = vunpack.c.l.b16 %v186
      %v208 = vunpack.c.h.b16 %v186
      %v209 = vunpack.c.l.b16 %v187
      %v210 = vunpack.c.h.b16 %v187
      %v211 = vunpack.c.l.b16 %v188
      %v212 = vunpack.c.h.b16 %v188
      %v213 = vunpack.c.l.b16 %v189
      %v214 = vunpack.c.h.b16 %v189
      %v215 = vunpack.c.l.b16 %v190
      %v216 = vunpack.c.h.b16 %v190
      %v217 = vunpack.c.l.b16 %v191
      %v218 = vunpack.c.h.b16 %v191
      %v219 = vunpack.c.l.b16 %v192
      %v220 = vunpack.c.h.b16 %v192
      %v221 = vunpack.c.l.b16 %v193
      %v222 = vunpack.c.h.b16 %v193
      %v223 = vpack.c.b16 %v211, %v207
      %v224 = vpack.c.b16 %v212, %v208
      %v225 = vpack.c.b16 %v213, %v209
      %v226 = vpack.c.b16 %v214, %v210
      %v227 = vpack.c.b16 %v219, %v215
      %v228 = vpack.c.b16 %v220, %v216
      %v229 = vpack.c.b16 %v221, %v217
      %v230 = vpack.c.b16 %v222, %v218
      %vm235 = vcmask 228352
      %v237 = vsel %vm235, %v198, 0
      %vm239 = vcmask 1045504
      %v241 = vsel %vm239, %v227, 0
      %v244 = vsel %vm239, %v228, 0
      %v247 = vsel %vm239, %v229, 0
      %v250 = vsel %vm239, %v230, 0
      %252 = vmatprep.subr.bf16.mxu0 0
      %253 = vmatpush1.bf16.msra.mxu0 0
      %254 = vmatprep.subr.bf16.mxu0 0
      %255 = vmatpush1.bf16.msra.mxu0 0
      %256 = vmatprep.subr.bf16.mxu0 0
      %257 = vmatpush1.bf16.msra.mxu0 0
      %258 = vmatprep.subr.bf16.mxu0 0
      %259 = vmatpush1.bf16.msra.mxu0 0
      %260 = vmatprep.subr.bf16.mxu0 0
      %261 = vmatpush1.bf16.msra.mxu0 0
      %262 = vmatprep.subr.bf16.mxu0 0
      %263 = vmatpush1.bf16.msra.mxu0 0
      %264 = vmatprep.subr.bf16.mxu0 %v244
      %265 = vmatpush1.bf16.msra.mxu0 %v241
      %266 = vmatprep.subr.bf16.mxu0 %v224
      %267 = vmatpush1.bf16.msra.mxu0 %v223
      %268 = vmatprep.subr.bf16.mxu0 0
      %269 = vmatpush2.bf16.msra.mxu0 0
      %270 = vmatprep.subr.bf16.mxu0 0
      %271 = vmatpush2.bf16.msra.mxu0 0
      %272 = vmatprep.subr.bf16.mxu0 0
      %273 = vmatpush2.bf16.msra.mxu0 0
      %274 = vmatprep.subr.bf16.mxu0 0
      %275 = vmatpush2.bf16.msra.mxu0 0
      %276 = vmatprep.subr.bf16.mxu0 0
      %277 = vmatpush2.bf16.msra.mxu0 0
      %278 = vmatprep.subr.bf16.mxu0 0
      %279 = vmatpush2.bf16.msra.mxu0 0
      %280 = vmatprep.subr.bf16.mxu0 0
      %281 = vmatpush2.bf16.msra.mxu0 0
      %282 = vmatprep.subr.bf16.mxu0 0
      %283 = vmatpush2.bf16.msra.mxu0 0
      %284 = vmatprep.mubr.bf16.mxu0 0
      %285 = vmatmul.mubr.bf16.gmra.mxu0 %v237
      %v286 = vpop.f32.mrf.mxu0
      %v287 = vadd.f32 0.0, %v286
      %v288 = vpop.f32.mrf.mxu0
      %v289 = vadd.f32 0.0, %v288
      %v290 = vpop.f32.mrf.mxu0
      %v291 = vadd.f32 0.0, %v290
      %v292 = vpop.f32.mrf.mxu0
      %v293 = vadd.f32 0.0, %v292
      %294 = vdwg.mxu0
      %295 = vmatprep.subr.bf16.mxu0 0
      %296 = vmatpush1.bf16.msra.mxu0 0
      %297 = vmatprep.subr.bf16.mxu0 0
      %298 = vmatpush1.bf16.msra.mxu0 0
      %299 = vmatprep.subr.bf16.mxu0 0
      %300 = vmatpush1.bf16.msra.mxu0 0
      %301 = vmatprep.subr.bf16.mxu0 0
      %302 = vmatpush1.bf16.msra.mxu0 0
      %303 = vmatprep.subr.bf16.mxu0 0
      %304 = vmatpush1.bf16.msra.mxu0 0
      %305 = vmatprep.subr.bf16.mxu0 0
      %306 = vmatpush1.bf16.msra.mxu0 0
      %307 = vmatprep.subr.bf16.mxu0 %v250
      %308 = vmatpush1.bf16.msra.mxu0 %v247
      %309 = vmatprep.subr.bf16.mxu0 %v226
      %310 = vmatpush1.bf16.msra.mxu0 %v225
      %311 = vmatprep.subr.bf16.mxu0 0
      %312 = vmatpush2.bf16.msra.mxu0 0
      %313 = vmatprep.subr.bf16.mxu0 0
      %314 = vmatpush2.bf16.msra.mxu0 0
      %315 = vmatprep.subr.bf16.mxu0 0
      %316 = vmatpush2.bf16.msra.mxu0 0
      %317 = vmatprep.subr.bf16.mxu0 0
      %318 = vmatpush2.bf16.msra.mxu0 0
      %319 = vmatprep.subr.bf16.mxu0 0
      %320 = vmatpush2.bf16.msra.mxu0 0
      %321 = vmatprep.subr.bf16.mxu0 0
      %322 = vmatpush2.bf16.msra.mxu0 0
      %323 = vmatprep.subr.bf16.mxu0 0
      %324 = vmatpush2.bf16.msra.mxu0 0
      %325 = vmatprep.subr.bf16.mxu0 0
      %326 = vmatpush2.bf16.msra.mxu0 0
      %327 = vmatprep.mubr.bf16.mxu0 0
      %328 = vmatmul.mubr.bf16.gmra.mxu0 %v237
      %v329 = vpop.f32.mrf.mxu0
      %v330 = vadd.f32 0.0, %v329
      %v331 = vpop.f32.mrf.mxu0
      %v332 = vadd.f32 0.0, %v331
      %v333 = vpop.f32.mrf.mxu0
      %v334 = vadd.f32 0.0, %v333
      %v335 = vpop.f32.mrf.mxu0
      %v336 = vadd.f32 0.0, %v335
      %337 = vdwg.mxu0
      %v338 = vmax.f32 %v287, 0.0
      %v339 = vmax.f32 %v289, 0.0
      %v340 = vmax.f32 %v330, 0.0
      %v341 = vmax.f32 %v332, 0.0
      %v342 = vmax.f32 %v291, 0.0
      %v343 = vmax.f32 %v293, 0.0
      %v344 = vmax.f32 %v334, 0.0
      %v345 = vmax.f32 %v336, 0.0
      %v346 = vpack.c.bf16 %v342, %v338
      %v347 = vpack.c.bf16 %v343, %v339
      %v348 = vpack.c.bf16 %v344, %v340
      %v349 = vpack.c.bf16 %v345, %v341
      %v354 = vunpack.c.l.b16 %v346
      %v355 = vunpack.c.l.b16 %v347
      %v356 = vunpack.c.l.b16 %v348
      %v357 = vunpack.c.l.b16 %v349
      %v358 = vunpack.c.h.b16 %v346
      %v359 = vunpack.c.h.b16 %v347
      %v360 = vunpack.c.h.b16 %v348
      %v361 = vunpack.c.h.b16 %v349
      %v362 = vpack.c.b16 %v355, %v354
      %v363 = vpack.c.b16 %v357, %v356
      %v364 = vpack.c.b16 %v359, %v358
      %v365 = vpack.c.b16 %v361, %v360
      %370 = vst [vmem:[%s181] sm:$0xff] %v362
      %371 = vst [vmem:[%s181 + $0x8] sm:$0xff] %v363
      %372 = vst [vmem:[%s181 + $0x10] sm:$0xff] %v364
      %373 = vst [vmem:[%s181 + $0x18] sm:$0xff] %v365
      %s374 = smul.u32 4, %s18
      %p375 = scmp.lt.s32.totalorder %s17, 1
      %s376 = scalar_select %p375, %s17, 1
      %p377 = scmp.lt.s32.totalorder %s374, 3
      %s378 = scalar_select %p377, %s374, 3
      %s379 = smul.addr %s376, 8
      %s380 = sadd.s32 %s378, %s379
      %s381 = smul.addr %s380, 4
      %s382 = scalar_lea.vmem %s2, %s381
      // Predicated region
      $region29: #{lpips.8} parent=27 // pred_check
        %p383 = pneg %p94
      $region30: #{lpips.8} parent=27 // pred_check_branch
        %385 = sbr.rel (%p383) target = $region32
      $region31: #{lpips.8} parent=27 // pred_region
        %s386 = smul.u32 4, %s18
      $region32: #{lpips.8} parent=27 // pred_fallthru
        _
    $region28: #{lpips.8} parent=5 // pred_fallthru
      _
    %p387 = scmp.le.s32.totalorder 2, %s8
    // Predicated region
    $region33: #{lpips.8} parent=5 // pred_check
      %p388 = pneg %p387
    $region34: #{lpips.8} parent=5 // pred_check_branch
      %390 = sbr.rel (%p388) target = $region36
    $region35: #{lpips.8} parent=5 // pred_region
      %s391 = ssub.s32 %s8, 2
      // Predicated region
      $region37: #{lpips.8} parent=35 // pred_check
        %p392 = pneg %p100
      $region38: #{lpips.8} parent=35 // pred_check_branch
        %394 = sbr.rel (%p392) target = $region40
      $region39: #{lpips.8} parent=35 // pred_region
        %s395 = smul.u32 4, %s20
        %p396 = scmp.lt.s32.totalorder %s19, 1
        %s397 = scalar_select %p396, %s19, 1
        %p398 = scmp.lt.s32.totalorder %s395, 3
        %s399 = scalar_select %p398, %s395, 3
        %s400 = smul.addr %s397, 8
        %s401 = sadd.s32 %s399, %s400
        %s402 = smul.addr %s401, 4
        %s403 = scalar_lea.vmem %s2, %s402
      $region40: #{lpips.8} parent=35 // pred_fallthru
        _
    $region36: #{lpips.8} parent=5 // pred_fallthru
      _
  $region6: #{lpips.8} parent=0 // loop_footer
    %s12 = sadd.s32 1, %s8
  $region7: #{lpips.8} parent=0 // loop_footer_branch
    %7 = sbr.rel target = $region3
  $region8: #{lpips.8} parent=0 // loop_exit
    _

// kernel: lpips.9
$region0: #{lpips.9}
  #allocation0 [shape = 'u32[]', space=smem, size = 0x4, offset = 0x4, fixed_abs, tag = 'smem constant byte address 0x4 - core index']
  #allocation1 [shape = 'u32[144,128]{1,0:T(1,128)}', space=vmem, size = 0x12000, scoped, tag = 'internal scratch']
  %s0 = inlined_call_operand.vmem [shape: bf16[32,145], index: 0, kind: input, shape index: {}]
  %s1 = inlined_call_operand.vmem [shape: bf16[2,145,128], index: 1, kind: input, shape index: {}]
  %s2 = inlined_call_operand.vmem [shape: bf16[2,32,128], index: 2, kind: output, shape index: {}]
  %s3 = sld [smem:[#allocation0]]
  $region41: #{lpips.9} parent=0
    _
  %s5 = ssub.s32 1, %s3
  %s6 = scalar_select 0, %s5, %s3
  loop: start=0, step=1, limit=4
  $region2: #{lpips.9} parent=0 // loop_pre_header
    _
  $region3: #{lpips.9} parent=0 // loop_header
    %s8 = sphi 0, %s12
    %p9 = scmp.ge.s32.totalorder %s8, 4
    %s15 = sphi 0, %s27
    %s16 = sphi 0, %s23
    %s17 = sphi 0, %s15
    %s18 = sphi 0, %s16
    %s19 = sphi 0, %s17
    %s20 = sphi 0, %s18
    %s28 = sphi 0, %s28
    %s30 = sphi 0, %s28
    %s31 = sphi 0, %s30
    %s45 = sphi 0, %s31
    %s53 = sphi 0, %s55
    %s56 = sphi 0, %s53
    %s57 = sphi 0, %s56
    %s73 = sphi 0, %s57
    %s81 = sphi 0, %s83
    %s84 = sphi 0, %s81
    %s85 = sphi 0, %s84
    %s101 = sphi 0, %s85
  $region4: #{lpips.9} parent=0 // loop_header_branch
    %11 = sbr.rel (%p9) target = $region8
  $region5: #{lpips.9} parent=0 // loop_body
    %s13 = ssub.s32 %s8, 1
    %s14 = ssub.s32 %s8, 2
    %s21 = sadd.s32 1, %s16
    %p22 = scmp.ge.s32.totalorder %s21, 1
    %s23 = scalar_select %p22, 0, %s21
    %s24 = sadd.s32 1, %s15
    %s25 = scalar_select %p22, %s24, %s15
    %p26 = scmp.ge.s32.totalorder %s25, 2
    %s27 = scalar_select %p26, 0, %s25
    %s29 = sadd.s32 %s28, 1
    %p32 = scmp.eq.s32.totalorder %s8, 1
    %p33 = scmp.ne.s32.totalorder %s28, %s30
    %p34 = scmp.eq.s32.totalorder %s8, 0
    %p35 = por %p33, %p34
    %p36 = scmp.ne.s32.totalorder %s28, %s30
    %p37 = scmp.eq.s32.totalorder %s13, 1
    %p38 = por %p36, %p37
    %p39 = scmp.ne.s32.totalorder %s30, %s31
    %p40 = scmp.eq.s32.totalorder %s13, 0
    %p41 = por %p39, %p40
    %p42 = scmp.ne.s32.totalorder %s30, %s31
    %p43 = scmp.eq.s32.totalorder %s14, 1
    %p44 = por %p42, %p43
    %p46 = scmp.ne.s32.totalorder %s31, %s45
    %p47 = scmp.eq.s32.totalorder %s14, 0
    %p48 = por %p46, %p47
    %s49 = ssub.s32 %s15, %s27
    %s50 = ssub.s32 %s16, %s23
    %s51 = sor.u32 %s49, %s50
    %p52 = scmp.eq.s32.totalorder %s51, 0
    %s54 = sadd.s32 %s53, 1
    %s55 = scalar_select %p52, %s53, %s54
    %p58 = pneg %p52
    %p59 = scmp.eq.s32.totalorder %s8, 1
    %p60 = por %p58, %p59
    %p61 = scmp.ne.s32.totalorder %s53, %s56
    %p62 = scmp.eq.s32.totalorder %s8, 0
    %p63 = por %p61, %p62
    %p64 = scmp.ne.s32.totalorder %s53, %s56
    %p65 = scmp.eq.s32.totalorder %s13, 1
    %p66 = por %p64, %p65
    %p67 = scmp.ne.s32.totalorder %s56, %s57
    %p68 = scmp.eq.s32.totalorder %s13, 0
    %p69 = por %p67, %p68
    %p70 = scmp.ne.s32.totalorder %s56, %s57
    %p71 = scmp.eq.s32.totalorder %s14, 1
    %p72 = por %p70, %p71
    %p74 = scmp.ne.s32.totalorder %s57, %s73
    %p75 = scmp.eq.s32.totalorder %s14, 0
    %p76 = por %p74, %p75
    %s77 = ssub.s32 %s15, %s27
    %s78 = ssub.s32 %s16, %s23
    %s79 = sor.u32 %s77, %s78
    %p80 = scmp.eq.s32.totalorder %s79, 0
    %s82 = sadd.s32 %s81, 1
    %s83 = scalar_select %p80, %s81, %s82
    %p86 = pneg %p80
    %p87 = scmp.eq.s32.totalorder %s8, 1
    %p88 = por %p86, %p87
    %p89 = scmp.ne.s32.totalorder %s81, %s84
    %p90 = scmp.eq.s32.totalorder %s8, 0
    %p91 = por %p89, %p90
    %p92 = scmp.ne.s32.totalorder %s81, %s84
    %p93 = scmp.eq.s32.totalorder %s13, 1
    %p94 = por %p92, %p93
    %p95 = scmp.ne.s32.totalorder %s84, %s85
    %p96 = scmp.eq.s32.totalorder %s13, 0
    %p97 = por %p95, %p96
    %p98 = scmp.ne.s32.totalorder %s84, %s85
    %p99 = scmp.eq.s32.totalorder %s14, 1
    %p100 = por %p98, %p99
    %p102 = scmp.ne.s32.totalorder %s85, %s101
    %p103 = scmp.eq.s32.totalorder %s14, 0
    %p104 = por %p102, %p103
    %p105 = scmp.le.s32.totalorder 1, %s8
    %p106 = scmp.lt.s32.totalorder %s8, 3
    %p107 = pnand %p105, %p106
    %p108 = pneg %p107
    // Predicated region
    $region9: #{lpips.9} parent=5 // pred_check
      _
    $region10: #{lpips.9} parent=5 // pred_check_branch
      %110 = sbr.rel (%p107) target = $region12
    $region11: #{lpips.9} parent=5 // pred_region
      %s111 = ssub.s32 %s8, 1
      // Predicated region
      $region13: #{lpips.9} parent=11 // pred_check
        %p112 = pneg %p41
      $region14: #{lpips.9} parent=11 // pred_check_branch
        %114 = sbr.rel (%p112) target = $region16
      $region15: #{lpips.9} parent=11 // pred_region
        _
      $region16: #{lpips.9} parent=11 // pred_fallthru
        _
    $region12: #{lpips.9} parent=5 // pred_fallthru
      _
    %p115 = scmp.lt.s32.totalorder %s8, 2
    // Predicated region
    $region17: #{lpips.9} parent=5 // pred_check
      %p116 = pneg %p115
    $region18: #{lpips.9} parent=5 // pred_check_branch
      %118 = sbr.rel (%p116) target = $region20
    $region19: #{lpips.9} parent=5 // pred_region
      // Predicated region
      $region21: #{lpips.9} parent=19 // pred_check
        %p119 = pneg %p63
      $region22: #{lpips.9} parent=19 // pred_check_branch
        %121 = sbr.rel (%p119) target = $region24
      $region23: #{lpips.9} parent=19 // pred_region
        %p122 = scmp.lt.s32.totalorder %s15, 1
        %s123 = scalar_select %p122, %s15, 1
        %p124 = scmp.lt.s32.totalorder %s16, 0
        %s125 = scalar_select %p124, %s16, 0
        %s126 = smul.addr %s123, 19
        %s127 = sadd.s32 %s125, %s126
        %s128 = smul.addr %s127, 4
        %s129 = scalar_lea.vmem %s1, %s128
      $region24: #{lpips.9} parent=19 // pred_fallthru
        _
    $region20: #{lpips.9} parent=5 // pred_fallthru
      _
    %p130 = scmp.le.s32.totalorder 1, %s8
    %p131 = scmp.lt.s32.totalorder %s8, 3
    %p132 = pnand %p130, %p131
    %p133 = pneg %p132
    // Predicated region
    $region25: #{lpips.9} parent=5 // pred_check
      _
    $region26: #{lpips.9} parent=5 // pred_check_branch
      %135 = sbr.rel (%p132) target = $region28
    $region27: #{lpips.9} parent=5 // pred_region
      %s136 = ssub.s32 %s8, 1
      %p137 = pneg %p41
      %p138 = pneg %p38
      %p139 = scmp.lt.s32.totalorder %s17, 1
      %s140 = scalar_select %p139, %s17, 1
      %p141 = scmp.lt.s32.totalorder %s18, 0
      %s142 = scalar_select %p141, %s18, 0
      %s143 = smul.addr %s140, 19
      %s144 = sadd.s32 %s142, %s143
      %s145 = smul.addr %s144, 4
      %s146 = scalar_lea.vmem %s1, %s145
      %p147 = pneg %p69
      %p148 = pneg %p66
      %p149 = pneg %p97
      %p150 = pneg %p94
      %p151 = scmp.lt.s32.totalorder %s17, 1
      %s152 = scalar_select %p151, %s17, 1
      %p153 = scmp.lt.s32.totalorder %s18, 0
      %s154 = scalar_select %p153, %s18, 0
      %s155 = smul.addr %s152, 4
      %s156 = sadd.s32 %s154, %s155
      %s157 = smul.addr %s156, 4
      %s158 = scalar_lea.vmem %s2, %s157
      %p159 = scmp.lt.s32.totalorder %s17, 1
      %s160 = scalar_select %p159, %s17, 1
      %p161 = scmp.lt.s32.totalorder %s18, 0
      %s162 = scalar_select %p161, %s18, 0
      %s163 = smul.addr %s160, 19
      %s164 = sadd.s32 %s162, %s163
      %s165 = smul.addr %s164, 4
      %s166 = scalar_lea.vmem %s1, %s165
      %p167 = scmp.lt.s32.totalorder %s17, 1
      %s168 = scalar_select %p167, %s17, 1
      %p169 = scmp.lt.s32.totalorder %s18, 0
      %s170 = scalar_select %p169, %s18, 0
      %s171 = smul.addr %s168, 4
      %s172 = sadd.s32 %s170, %s171
      %s173 = smul.addr %s172, 4
      %s174 = scalar_lea.vmem %s2, %s173
      %v176 = vld [vmem:[%s0] sm:$0xff]
      %v177 = vld [vmem:[%s0 + $0x8] sm:$0xff]
      %v178 = vld [vmem:[%s0 + $0x10] sm:$0xff]
      %v179 = vld [vmem:[%s0 + $0x18] sm:$0xff]
      %v180 = vld [vmem:[%s166] sm:$0xf]
      %v181 = vld [vmem:[%s166 + $0x4] sm:$0xf]
      %v182 = vld [vmem:[%s166 + $0x8] sm:$0xf]
      %v183 = vld [vmem:[%s166 + $0xc] sm:$0xf]
      %v184 = vld [vmem:[%s166 + $0x10] sm:$0xf]
      %v185 = vld [vmem:[%s166 + $0x14] sm:$0xf]
      %v186 = vld [vmem:[%s166 + $0x18] sm:$0xf]
      %v187 = vld [vmem:[%s166 + $0x1c] sm:$0xf]
      %v188 = vld [vmem:[%s166 + $0x20] sm:$0xf]
      %v189 = vld [vmem:[%s166 + $0x24] sm:$0xf]
      %v190 = vld [vmem:[%s166 + $0x28] sm:$0xf]
      %v191 = vld [vmem:[%s166 + $0x2c] sm:$0xf]
      %v192 = vld [vmem:[%s166 + $0x30] sm:$0xf]
      %v193 = vld [vmem:[%s166 + $0x34] sm:$0xf]
      %v194 = vld [vmem:[%s166 + $0x38] sm:$0xf]
      %v195 = vld [vmem:[%s166 + $0x3c] sm:$0xf]
      %v196 = vld [vmem:[%s166 + $0x40] sm:$0xf]
      %v197 = vld [vmem:[%s166 + $0x44] sm:$0xf]
      %v198 = vld [vmem:[%s166 + $0x48] sm:$0x1]
      %v203 = vunpack.c.l.b16 %v176
      %v204 = vunpack.c.h.b16 %v176
      %v205 = vunpack.c.l.b16 %v177
      %v206 = vunpack.c.h.b16 %v177
      %v207 = vunpack.c.l.b16 %v178
      %v208 = vunpack.c.h.b16 %v178
      %v209 = vunpack.c.l.b16 %v179
      %v210 = vunpack.c.h.b16 %v179
      %v211 = vpack.c.b16 %v205, %v203
      %v212 = vpack.c.b16 %v206, %v204
      %v213 = vpack.c.b16 %v209, %v207
      %v214 = vpack.c.b16 %v210, %v208
      %v236 = vunpack.c.l.b16 %v180
      %v237 = vunpack.c.l.b16 %v181
      %v238 = vunpack.c.l.b16 %v182
      %v239 = vunpack.c.l.b16 %v183
      %v240 = vunpack.c.l.b16 %v184
      %v241 = vunpack.c.l.b16 %v185
      %v242 = vunpack.c.l.b16 %v186
      %v243 = vunpack.c.l.b16 %v187
      %v244 = vunpack.c.l.b16 %v188
      %v245 = vunpack.c.l.b16 %v189
      %v246 = vunpack.c.l.b16 %v190
      %v247 = vunpack.c.l.b16 %v191
      %v248 = vunpack.c.l.b16 %v192
      %v249 = vunpack.c.l.b16 %v193
      %v250 = vunpack.c.l.b16 %v194
      %v251 = vunpack.c.l.b16 %v195
      %v252 = vunpack.c.l.b16 %v196
      %v253 = vunpack.c.l.b16 %v197
      %v254 = vunpack.c.l.b16 %v198
      %v255 = vpack.c.b16 %v237, %v236
      %v256 = vpack.c.b16 %v239, %v238
      %v257 = vpack.c.b16 %v241, %v240
      %v258 = vpack.c.b16 %v243, %v242
      %v259 = vpack.c.b16 %v245, %v244
      %v260 = vpack.c.b16 %v247, %v246
      %v261 = vpack.c.b16 %v249, %v248
      %v262 = vpack.c.b16 %v251, %v250
      %v263 = vpack.c.b16 %v253, %v252
      %v264 = vpack.c.b16 %v254, %v254
      %vm274 = vcmask 138240
      %v276 = vsel %vm274, %v212, 0
      %v279 = vsel %vm274, %v214, 0
      %vm281 = vcmask 1040384
      %v282 = vsel 0, 4294967295, 65535
      %v283 = vsel %vm281, %v282, 0
      %v285 = vand.u32 %v264, %v283
      %287 = vmatprep.subr.bf16.mxu0 0
      %288 = vmatpush1.bf16.msra.mxu0 %v262
      %289 = vmatprep.subr.bf16.mxu0 0
      %290 = vmatpush1.bf16.msra.mxu0 %v261
      %291 = vmatprep.subr.bf16.mxu0 0
      %292 = vmatpush1.bf16.msra.mxu0 %v260
      %293 = vmatprep.subr.bf16.mxu0 0
      %294 = vmatpush1.bf16.msra.mxu0 %v259
      %295 = vmatprep.subr.bf16.mxu0 0
      %296 = vmatpush1.bf16.msra.mxu0 %v258
      %297 = vmatprep.subr.bf16.mxu0 0
      %298 = vmatpush1.bf16.msra.mxu0 %v257
      %299 = vmatprep.subr.bf16.mxu0 0
      %300 = vmatpush1.bf16.msra.mxu0 %v256
      %301 = vmatprep.subr.bf16.mxu0 0
      %302 = vmatpush1.bf16.msra.mxu0 %v255
      %303 = vmatprep.subr.bf16.mxu0 0
      %304 = vmatpush2.bf16.msra.mxu0 0
      %305 = vmatprep.subr.bf16.mxu0 0
      %306 = vmatpush2.bf16.msra.mxu0 0
      %307 = vmatprep.subr.bf16.mxu0 0
      %308 = vmatpush2.bf16.msra.mxu0 0
      %309 = vmatprep.subr.bf16.mxu0 0
      %310 = vmatpush2.bf16.msra.mxu0 0
      %311 = vmatprep.subr.bf16.mxu0 0
      %312 = vmatpush2.bf16.msra.mxu0 0
      %313 = vmatprep.subr.bf16.mxu0 0
      %314 = vmatpush2.bf16.msra.mxu0 0
      %315 = vmatprep.subr.bf16.mxu0 0
      %316 = vmatpush2.bf16.msra.mxu0 %v285
      %317 = vmatprep.subr.bf16.mxu0 0
      %318 = vmatpush2.bf16.msra.mxu0 %v263
      %319 = vmatprep.mubr.bf16.mxu0 %v276
      %320 = vmatmul.mubr.bf16.gmra.mxu0 %v211
      %v321 = vpop.f32.mrf.mxu0
      %v322 = vadd.f32 0.0, %v321
      %v323 = vpop.f32.mrf.mxu0
      %v324 = vpop.f32.mrf.mxu0
      %v325 = vadd.f32 0.0, %v324
      %v326 = vpop.f32.mrf.mxu0
      %327 = vmatprep.mubr.bf16.mxu0 %v279
      %328 = vmatmul.mubr.bf16.gmra.mxu0 %v213
      %v329 = vpop.f32.mrf.mxu0
      %v330 = vadd.f32 0.0, %v329
      %v331 = vpop.f32.mrf.mxu0
      %v332 = vpop.f32.mrf.mxu0
      %v333 = vadd.f32 0.0, %v332
      %v334 = vpop.f32.mrf.mxu0
      %335 = vdwg.mxu0
      %v336 = vmax.f32 %v322, 0.0
      %v337 = vmax.f32 %v325, 0.0
      %v338 = vmax.f32 %v330, 0.0
      %v339 = vmax.f32 %v333, 0.0
      %v340 = vpack.c.bf16 %v337, %v336
      %v341 = vpack.c.bf16 %v339, %v338
      %v344 = vunpack.c.l.b16 %v340
      %v345 = vunpack.c.h.b16 %v340
      %v346 = vunpack.c.l.b16 %v341
      %v347 = vunpack.c.h.b16 %v341
      %v348 = vpack.c.b16 %v344, %v344
      %v349 = vpack.c.b16 %v345, %v345
      %v350 = vpack.c.b16 %v346, %v346
      %v351 = vpack.c.b16 %v347, %v347
      %356 = vst [vmem:[%s174] sm:$0xf] %v348
      %357 = vst [vmem:[%s174 + $0x4] sm:$0xf] %v349
      %358 = vst [vmem:[%s174 + $0x8] sm:$0xf] %v350
      %359 = vst [vmem:[%s174 + $0xc] sm:$0xf] %v351
      %p360 = scmp.lt.s32.totalorder %s17, 1
      %s361 = scalar_select %p360, %s17, 1
      %p362 = scmp.lt.s32.totalorder %s18, 0
      %s363 = scalar_select %p362, %s18, 0
      %s364 = smul.addr %s361, 4
      %s365 = sadd.s32 %s363, %s364
      %s366 = smul.addr %s365, 4
      %s367 = scalar_lea.vmem %s2, %s366
      // Predicated region
      $region29: #{lpips.9} parent=27 // pred_check
        %p368 = pneg %p94
      $region30: #{lpips.9} parent=27 // pred_check_branch
        %370 = sbr.rel (%p368) target = $region32
      $region31: #{lpips.9} parent=27 // pred_region
        _
      $region32: #{lpips.9} parent=27 // pred_fallthru
        _
    $region28: #{lpips.9} parent=5 // pred_fallthru
      _
    %p371 = scmp.le.s32.totalorder 2, %s8
    // Predicated region
    $region33: #{lpips.9} parent=5 // pred_check
      %p372 = pneg %p371
    $region34: #{lpips.9} parent=5 // pred_check_branch
      %374 = sbr.rel (%p372) target = $region36
    $region35: #{lpips.9} parent=5 // pred_region
      %s375 = ssub.s32 %s8, 2
      // Predicated region
      $region37: #{lpips.9} parent=35 // pred_check
        %p376 = pneg %p100
      $region38: #{lpips.9} parent=35 // pred_check_branch
        %378 = sbr.rel (%p376) target = $region40
      $region39: #{lpips.9} parent=35 // pred_region
        %p379 = scmp.lt.s32.totalorder %s19, 1
        %s380 = scalar_select %p379, %s19, 1
        %p381 = scmp.lt.s32.totalorder %s20, 0
        %s382 = scalar_select %p381, %s20, 0
        %s383 = smul.addr %s380, 4
        %s384 = sadd.s32 %s382, %s383
        %s385 = smul.addr %s384, 4
        %s386 = scalar_lea.vmem %s2, %s385
      $region40: #{lpips.9} parent=35 // pred_fallthru
        _
    $region36: #{lpips.9} parent=5 // pred_fallthru
      _
  $region6: #{lpips.9} parent=0 // loop_footer
    %s12 = sadd.s32 1, %s8
  $region7: #{lpips.9} parent=0 // loop_footer_branch
    %7 = sbr.rel target = $region3
  $region8: #{lpips.9} parent=0 // loop_exit
    _

// kernel: lpips.13
$region0: #{lpips.13}
  #allocation0 [shape = 'u32[]', space=smem, size = 0x4, offset = 0x4, fixed_abs, tag = 'smem constant byte address 0x4 - core index']
  #allocation1 [shape = 'u32[144,128]{1,0:T(1,128)}', space=vmem, size = 0x12000, scoped, tag = 'internal scratch']
  %s0 = inlined_call_operand.vmem [shape: bf16[2,32,128], index: 0, kind: input, shape index: {}, may-alias: {0,1}]
  %s1 = inlined_call_operand.vmem [shape: bf16[2,32,128], index: 1, kind: input, shape index: {}, may-alias: {0,1}]
  %s2 = inlined_call_operand.vmem [shape: f32[1,128], index: 2, kind: output, shape index: {}]
  %s3 = sld [smem:[#allocation0]]
  $region18: #{lpips.13} parent=0
    _
  %s5 = ssub.s32 1, %s3
  %s6 = scalar_select 0, %s5, %s3
  // Predicated region
  $region2: #{lpips.13} parent=0 // pred_check
    _
  $region3: #{lpips.13} parent=0 // pred_check_branch
    %8 = sbr.rel (0) target = $region5
  $region4: #{lpips.13} parent=0 // pred_region
    _
  $region5: #{lpips.13} parent=0 // pred_fallthru
    _
  // Predicated region
  $region6: #{lpips.13} parent=0 // pred_check
    _
  $region7: #{lpips.13} parent=0 // pred_check_branch
    %10 = sbr.rel (0) target = $region9
  $region8: #{lpips.13} parent=0 // pred_region
    %s11 = scalar_lea.vmem %s1, 16
  $region9: #{lpips.13} parent=0 // pred_fallthru
    _
  %s12 = scalar_lea.vmem %s1, 16
  %s13 = scalar_lea.vmem %s1, 16
  %v14 = vld [vmem:[%s0] sm:$0xf]
  %v15 = vld [vmem:[%s0 + $0x4] sm:$0xf]
  %v16 = vld [vmem:[%s0 + $0x8] sm:$0xf]
  %v17 = vld [vmem:[%s0 + $0xc] sm:$0xf]
  %v18 = vunpack.c.l.bf16 %v14
  %v19 = vunpack.c.l.bf16 %v15
  %v20 = vunpack.c.l.bf16 %v16
  %v21 = vunpack.c.l.bf16 %v17
  %v22 = vld [vmem:[%s13] sm:$0xf]
  %v23 = vld [vmem:[%s13 + $0x4] sm:$0xf]
  %v24 = vld [vmem:[%s13 + $0x8] sm:$0xf]
  %v25 = vld [vmem:[%s13 + $0xc] sm:$0xf]
  %v26 = vunpack.c.l.bf16 %v22
  %v27 = vunpack.c.l.bf16 %v23
  %v28 = vunpack.c.l.bf16 %v24
  %v29 = vunpack.c.l.bf16 %v25
  %v30 = vmul.f32 %v18, %v18
  %v31 = vmul.f32 %v19, %v19
  %v32 = vmul.f32 %v20, %v20
  %v33 = vmul.f32 %v21, %v21
  %v34 = vadd.f32 %v30, %v31
  %v35 = vadd.f32 %v34, %v32
  %v36 = vadd.f32 %v35, %v33
  %v37 = vrot.slane %v36, 4
  %v38 = vadd.f32 %v36, %v37
  %v39 = vrot.slane %v38, 2
  %v40 = vadd.f32 %v38, %v39
  %v41 = vrot.slane %v40, 1
  %v42 = vadd.f32 %v40, %v41
  %v43 = vrsqrt.pop %v42
  %v44 = vmul.f32 %v42, %v43
  %vm45 = vcmp.eq.f32.partialorder %v42, inf
  %v46 = vsel %vm45, %v42, %v44
  %vm47 = vcmp.eq.f32.partialorder %v42, 0.0
  %v48 = vand.u32 %v42, 2147483648
  %v49 = vsel %vm47, %v48, %v46
  %v50 = vmul.f32 %v26, %v26
  %v51 = vmul.f32 %v27, %v27
  %v52 = vmul.f32 %v28, %v28
  %v53 = vmul.f32 %v29, %v29
  %v54 = vadd.f32 %v50, %v51
  %v55 = vadd.f32 %v54, %v52
  %v56 = vadd.f32 %v55, %v53
  %v57 = vrot.slane %v56, 4
  %v58 = vadd.f32 %v56, %v57
  %v59 = vrot.slane %v58, 2
  %v60 = vadd.f32 %v58, %v59
  %v61 = vrot.slane %v60, 1
  %v62 = vadd.f32 %v60, %v61
  %v63 = vrsqrt.pop %v62
  %v64 = vmul.f32 %v62, %v63
  %vm65 = vcmp.eq.f32.partialorder %v62, inf
  %v66 = vsel %vm65, %v62, %v64
  %vm67 = vcmp.eq.f32.partialorder %v62, 0.0
  %v68 = vand.u32 %v62, 2147483648
  %v69 = vsel %vm67, %v68, %v66
  %v70 = vadd.f32 %v49, 1e-10
  %v71 = vrcp.pop %v70
  %v72 = vadd.f32 %v69, 1e-10
  %v73 = vrcp.pop %v72
  %v74 = vmul.f32 %v18, %v71
  %v75 = vmul.f32 %v19, %v71
  %v76 = vmul.f32 %v20, %v71
  %v77 = vmul.f32 %v21, %v71
  %v78 = vmul.f32 %v26, %v73
  %v79 = vmul.f32 %v27, %v73
  %v80 = vmul.f32 %v28, %v73
  %v81 = vmul.f32 %v29, %v73
  %v82 = vsub.f32 %v74, %v78
  %v83 = vsub.f32 %v75, %v79
  %v84 = vsub.f32 %v76, %v80
  %v85 = vsub.f32 %v77, %v81
  %v86 = vand.u32 2147483647, %v82
  %v87 = vand.u32 2147483647, %v83
  %v88 = vand.u32 2147483647, %v84
  %v89 = vand.u32 2147483647, %v85
  %v90 = vadd.f32 %v86, %v87
  %v91 = vadd.f32 %v90, %v88
  %v92 = vadd.f32 %v91, %v89
  %v93 = vrot.slane %v92, 4
  %v94 = vadd.f32 %v92, %v93
  %v95 = vrot.slane %v94, 2
  %v96 = vadd.f32 %v94, %v95
  %v97 = vrot.slane %v96, 1
  %v98 = vadd.f32 %v96, %v97
  %99 = vst [vmem:[%s2] sm:$0x1] %v98
  // Predicated region
  $region10: #{lpips.13} parent=0 // pred_check
    _
  $region11: #{lpips.13} parent=0 // pred_check_branch
    %101 = sbr.rel (0) target = $region13
  $region12: #{lpips.13} parent=0 // pred_region
    _
  $region13: #{lpips.13} parent=0 // pred_fallthru
    _
  // Predicated region
  $region14: #{lpips.13} parent=0 // pred_check
    _
  $region15: #{lpips.13} parent=0 // pred_check_branch
    %103 = sbr.rel (0) target = $region17
  $region16: #{lpips.13} parent=0 // pred_region
    _
  $region17: #{lpips.13} parent=0 // pred_fallthru
    _

// kernel: lpips.10
$region0: #{lpips.10}
  #allocation0 [shape = 'u32[]', space=smem, size = 0x4, offset = 0x4, fixed_abs, tag = 'smem constant byte address 0x4 - core index']
  #allocation1 [shape = 'u32[144,128]{1,0:T(1,128)}', space=vmem, size = 0x12000, scoped, tag = 'internal scratch']
  %s0 = inlined_call_operand.vmem [shape: bf16[64,289], index: 0, kind: input, shape index: {}]
  %s1 = inlined_call_operand.vmem [shape: bf16[2,289,32], index: 1, kind: input, shape index: {}]
  %s2 = inlined_call_operand.vmem [shape: bf16[2,64,32], index: 2, kind: output, shape index: {}]
  %s3 = sld [smem:[#allocation0]]
  $region41: #{lpips.10} parent=0
    _
  %s5 = ssub.s32 1, %s3
  %s6 = scalar_select 0, %s5, %s3
  loop: start=0, step=1, limit=4
  $region2: #{lpips.10} parent=0 // loop_pre_header
    _
  $region3: #{lpips.10} parent=0 // loop_header
    %s8 = sphi 0, %s12
    %p9 = scmp.ge.s32.totalorder %s8, 4
    %s15 = sphi 0, %s27
    %s16 = sphi 0, %s23
    %s17 = sphi 0, %s15
    %s18 = sphi 0, %s16
    %s19 = sphi 0, %s17
    %s20 = sphi 0, %s18
    %s28 = sphi 0, %s28
    %s30 = sphi 0, %s28
    %s31 = sphi 0, %s30
    %s45 = sphi 0, %s31
    %s53 = sphi 0, %s55
    %s56 = sphi 0, %s53
    %s57 = sphi 0, %s56
    %s73 = sphi 0, %s57
    %s81 = sphi 0, %s83
    %s84 = sphi 0, %s81
    %s85 = sphi 0, %s84
    %s101 = sphi 0, %s85
  $region4: #{lpips.10} parent=0 // loop_header_branch
    %11 = sbr.rel (%p9) target = $region8
  $region5: #{lpips.10} parent=0 // loop_body
    %s13 = ssub.s32 %s8, 1
    %s14 = ssub.s32 %s8, 2
    %s21 = sadd.s32 1, %s16
    %p22 = scmp.ge.s32.totalorder %s21, 1
    %s23 = scalar_select %p22, 0, %s21
    %s24 = sadd.s32 1, %s15
    %s25 = scalar_select %p22, %s24, %s15
    %p26 = scmp.ge.s32.totalorder %s25, 2
    %s27 = scalar_select %p26, 0, %s25
    %s29 = sadd.s32 %s28, 1
    %p32 = scmp.eq.s32.totalorder %s8, 1
    %p33 = scmp.ne.s32.totalorder %s28, %s30
    %p34 = scmp.eq.s32.totalorder %s8, 0
    %p35 = por %p33, %p34
    %p36 = scmp.ne.s32.totalorder %s28, %s30
    %p37 = scmp.eq.s32.totalorder %s13, 1
    %p38 = por %p36, %p37
    %p39 = scmp.ne.s32.totalorder %s30, %s31
    %p40 = scmp.eq.s32.totalorder %s13, 0
    %p41 = por %p39, %p40
    %p42 = scmp.ne.s32.totalorder %s30, %s31
    %p43 = scmp.eq.s32.totalorder %s14, 1
    %p44 = por %p42, %p43
    %p46 = scmp.ne.s32.totalorder %s31, %s45
    %p47 = scmp.eq.s32.totalorder %s14, 0
    %p48 = por %p46, %p47
    %s49 = ssub.s32 %s15, %s27
    %s50 = ssub.s32 %s16, %s23
    %s51 = sor.u32 %s49, %s50
    %p52 = scmp.eq.s32.totalorder %s51, 0
    %s54 = sadd.s32 %s53, 1
    %s55 = scalar_select %p52, %s53, %s54
    %p58 = pneg %p52
    %p59 = scmp.eq.s32.totalorder %s8, 1
    %p60 = por %p58, %p59
    %p61 = scmp.ne.s32.totalorder %s53, %s56
    %p62 = scmp.eq.s32.totalorder %s8, 0
    %p63 = por %p61, %p62
    %p64 = scmp.ne.s32.totalorder %s53, %s56
    %p65 = scmp.eq.s32.totalorder %s13, 1
    %p66 = por %p64, %p65
    %p67 = scmp.ne.s32.totalorder %s56, %s57
    %p68 = scmp.eq.s32.totalorder %s13, 0
    %p69 = por %p67, %p68
    %p70 = scmp.ne.s32.totalorder %s56, %s57
    %p71 = scmp.eq.s32.totalorder %s14, 1
    %p72 = por %p70, %p71
    %p74 = scmp.ne.s32.totalorder %s57, %s73
    %p75 = scmp.eq.s32.totalorder %s14, 0
    %p76 = por %p74, %p75
    %s77 = ssub.s32 %s15, %s27
    %s78 = ssub.s32 %s16, %s23
    %s79 = sor.u32 %s77, %s78
    %p80 = scmp.eq.s32.totalorder %s79, 0
    %s82 = sadd.s32 %s81, 1
    %s83 = scalar_select %p80, %s81, %s82
    %p86 = pneg %p80
    %p87 = scmp.eq.s32.totalorder %s8, 1
    %p88 = por %p86, %p87
    %p89 = scmp.ne.s32.totalorder %s81, %s84
    %p90 = scmp.eq.s32.totalorder %s8, 0
    %p91 = por %p89, %p90
    %p92 = scmp.ne.s32.totalorder %s81, %s84
    %p93 = scmp.eq.s32.totalorder %s13, 1
    %p94 = por %p92, %p93
    %p95 = scmp.ne.s32.totalorder %s84, %s85
    %p96 = scmp.eq.s32.totalorder %s13, 0
    %p97 = por %p95, %p96
    %p98 = scmp.ne.s32.totalorder %s84, %s85
    %p99 = scmp.eq.s32.totalorder %s14, 1
    %p100 = por %p98, %p99
    %p102 = scmp.ne.s32.totalorder %s85, %s101
    %p103 = scmp.eq.s32.totalorder %s14, 0
    %p104 = por %p102, %p103
    %p105 = scmp.le.s32.totalorder 1, %s8
    %p106 = scmp.lt.s32.totalorder %s8, 3
    %p107 = pnand %p105, %p106
    %p108 = pneg %p107
    // Predicated region
    $region9: #{lpips.10} parent=5 // pred_check
      _
    $region10: #{lpips.10} parent=5 // pred_check_branch
      %110 = sbr.rel (%p107) target = $region12
    $region11: #{lpips.10} parent=5 // pred_region
      %s111 = ssub.s32 %s8, 1
      // Predicated region
      $region13: #{lpips.10} parent=11 // pred_check
        %p112 = pneg %p41
      $region14: #{lpips.10} parent=11 // pred_check_branch
        %114 = sbr.rel (%p112) target = $region16
      $region15: #{lpips.10} parent=11 // pred_region
        _
      $region16: #{lpips.10} parent=11 // pred_fallthru
        _
    $region12: #{lpips.10} parent=5 // pred_fallthru
      _
    %p115 = scmp.lt.s32.totalorder %s8, 2
    // Predicated region
    $region17: #{lpips.10} parent=5 // pred_check
      %p116 = pneg %p115
    $region18: #{lpips.10} parent=5 // pred_check_branch
      %118 = sbr.rel (%p116) target = $region20
    $region19: #{lpips.10} parent=5 // pred_region
      // Predicated region
      $region21: #{lpips.10} parent=19 // pred_check
        %p119 = pneg %p63
      $region22: #{lpips.10} parent=19 // pred_check_branch
        %121 = sbr.rel (%p119) target = $region24
      $region23: #{lpips.10} parent=19 // pred_region
        %p122 = scmp.lt.s32.totalorder %s15, 1
        %s123 = scalar_select %p122, %s15, 1
        %p124 = scmp.lt.s32.totalorder %s16, 0
        %s125 = scalar_select %p124, %s16, 0
        %s126 = smul.addr %s123, 37
        %s127 = sadd.s32 %s125, %s126
        %s128 = smul.addr %s127, 4
        %s129 = scalar_lea.vmem %s1, %s128
      $region24: #{lpips.10} parent=19 // pred_fallthru
        _
    $region20: #{lpips.10} parent=5 // pred_fallthru
      _
    %p130 = scmp.le.s32.totalorder 1, %s8
    %p131 = scmp.lt.s32.totalorder %s8, 3
    %p132 = pnand %p130, %p131
    %p133 = pneg %p132
    // Predicated region
    $region25: #{lpips.10} parent=5 // pred_check
      _
    $region26: #{lpips.10} parent=5 // pred_check_branch
      %135 = sbr.rel (%p132) target = $region28
    $region27: #{lpips.10} parent=5 // pred_region
      %s136 = ssub.s32 %s8, 1
      %p137 = pneg %p41
      %p138 = pneg %p38
      %p139 = scmp.lt.s32.totalorder %s17, 1
      %s140 = scalar_select %p139, %s17, 1
      %p141 = scmp.lt.s32.totalorder %s18, 0
      %s142 = scalar_select %p141, %s18, 0
      %s143 = smul.addr %s140, 37
      %s144 = sadd.s32 %s142, %s143
      %s145 = smul.addr %s144, 4
      %s146 = scalar_lea.vmem %s1, %s145
      %p147 = pneg %p69
      %p148 = pneg %p66
      %p149 = pneg %p97
      %p150 = pneg %p94
      %p151 = scmp.lt.s32.totalorder %s17, 1
      %s152 = scalar_select %p151, %s17, 1
      %p153 = scmp.lt.s32.totalorder %s18, 0
      %s154 = scalar_select %p153, %s18, 0
      %s155 = smul.addr %s152, 8
      %s156 = sadd.s32 %s154, %s155
      %s157 = smul.addr %s156, 4
      %s158 = scalar_lea.vmem %s2, %s157
      %p159 = scmp.lt.s32.totalorder %s17, 1
      %s160 = scalar_select %p159, %s17, 1
      %p161 = scmp.lt.s32.totalorder %s18, 0
      %s162 = scalar_select %p161, %s18, 0
      %s163 = smul.addr %s160, 37
      %s164 = sadd.s32 %s162, %s163
      %s165 = smul.addr %s164, 4
      %s166 = scalar_lea.vmem %s1, %s165
      %p167 = scmp.lt.s32.totalorder %s17, 1
      %s168 = scalar_select %p167, %s17, 1
      %p169 = scmp.lt.s32.totalorder %s18, 0
      %s170 = scalar_select %p169, %s18, 0
      %s171 = smul.addr %s168, 8
      %s172 = sadd.s32 %s170, %s171
      %s173 = smul.addr %s172, 4
      %s174 = scalar_lea.vmem %s2, %s173
      %v176 = vld [vmem:[%s0] sm:$0xff]
      %v177 = vld [vmem:[%s0 + $0x8] sm:$0xf]
      %v178 = vld [vmem:[%s0 + $0xc] sm:$0xff]
      %v179 = vld [vmem:[%s0 + $0x14] sm:$0xf]
      %v180 = vld [vmem:[%s0 + $0x18] sm:$0xff]
      %v181 = vld [vmem:[%s0 + $0x20] sm:$0xf]
      %v182 = vld [vmem:[%s0 + $0x24] sm:$0xff]
      %v183 = vld [vmem:[%s0 + $0x2c] sm:$0xf]
      %v184 = vld [vmem:[%s0 + $0x30] sm:$0xff]
      %v185 = vld [vmem:[%s0 + $0x38] sm:$0xf]
      %v186 = vld [vmem:[%s0 + $0x3c] sm:$0xff]
      %v187 = vld [vmem:[%s0 + $0x44] sm:$0xf]
      %v188 = vld [vmem:[%s0 + $0x48] sm:$0xff]
      %v189 = vld [vmem:[%s0 + $0x50] sm:$0xf]
      %v190 = vld [vmem:[%s0 + $0x54] sm:$0xff]
      %v191 = vld [vmem:[%s0 + $0x5c] sm:$0xf]
      %v192 = vld [vmem:[%s166] sm:$0xf]
      %v193 = vld [vmem:[%s166 + $0x4] sm:$0xf]
      %v194 = vld [vmem:[%s166 + $0x8] sm:$0xf]
      %v195 = vld [vmem:[%s166 + $0xc] sm:$0xf]
      %v196 = vld [vmem:[%s166 + $0x10] sm:$0xf]
      %v197 = vld [vmem:[%s166 + $0x14] sm:$0xf]
      %v198 = vld [vmem:[%s166 + $0x18] sm:$0xf]
      %v199 = vld [vmem:[%s166 + $0x1c] sm:$0xf]
      %v200 = vld [vmem:[%s166 + $0x20] sm:$0xf]
      %v201 = vld [vmem:[%s166 + $0x24] sm:$0xf]
      %v202 = vld [vmem:[%s166 + $0x28] sm:$0xf]
      %v203 = vld [vmem:[%s166 + $0x2c] sm:$0xf]
      %v204 = vld [vmem:[%s166 + $0x30] sm:$0xf]
      %v205 = vld [vmem:[%s166 + $0x34] sm:$0xf]
      %v206 = vld [vmem:[%s166 + $0x38] sm:$0xf]
      %v207 = vld [vmem:[%s166 + $0x3c] sm:$0xf]
      %v208 = vld [vmem:[%s166 + $0x40] sm:$0xf]
      %v209 = vld [vmem:[%s166 + $0x44] sm:$0xf]
      %v210 = vld [vmem:[%s166 + $0x48] sm:$0xf]
      %v211 = vld [vmem:[%s166 + $0x4c] sm:$0xf]
      %v212 = vld [vmem:[%s166 + $0x50] sm:$0xf]
      %v213 = vld [vmem:[%s166 + $0x54] sm:$0xf]
      %v214 = vld [vmem:[%s166 + $0x58] sm:$0xf]
      %v215 = vld [vmem:[%s166 + $0x5c] sm:$0xf]
      %v216 = vld [vmem:[%s166 + $0x60] sm:$0xf]
      %v217 = vld [vmem:[%s166 + $0x64] sm:$0xf]
      %v218 = vld [vmem:[%s166 + $0x68] sm:$0xf]
      %v219 = vld [vmem:[%s166 + $0x6c] sm:$0xf]
      %v220 = vld [vmem:[%s166 + $0x70] sm:$0xf]
      %v221 = vld [vmem:[%s166 + $0x74] sm:$0xf]
      %v222 = vld [vmem:[%s166 + $0x78] sm:$0xf]
      %v223 = vld [vmem:[%s166 + $0x7c] sm:$0xf]
      %v224 = vld [vmem:[%s166 + $0x80] sm:$0xf]
      %v225 = vld [vmem:[%s166 + $0x84] sm:$0xf]
      %v226 = vld [vmem:[%s166 + $0x88] sm:$0xf]
      %v227 = vld [vmem:[%s166 + $0x8c] sm:$0xf]
      %v228 = vld [vmem:[%s166 + $0x90] sm:$0x1]
      %v245 = vunpack.c.l.b16 %v176
      %v246 = vunpack.c.h.b16 %v176
      %v247 = vunpack.c.l.b16 %v177
      %v248 = vunpack.c.l.b16 %v178
      %v249 = vunpack.c.h.b16 %v178
      %v250 = vunpack.c.l.b16 %v179
      %v251 = vunpack.c.l.b16 %v180
      %v252 = vunpack.c.h.b16 %v180
      %v253 = vunpack.c.l.b16 %v181
      %v254 = vunpack.c.l.b16 %v182
      %v255 = vunpack.c.h.b16 %v182
      %v256 = vunpack.c.l.b16 %v183
      %v257 = vunpack.c.l.b16 %v184
      %v258 = vunpack.c.h.b16 %v184
      %v259 = vunpack.c.l.b16 %v185
      %v260 = vunpack.c.l.b16 %v186
      %v261 = vunpack.c.h.b16 %v186
      %v262 = vunpack.c.l.b16 %v187
      %v263 = vunpack.c.l.b16 %v188
      %v264 = vunpack.c.h.b16 %v188
      %v265 = vunpack.c.l.b16 %v189
      %v266 = vunpack.c.l.b16 %v190
      %v267 = vunpack.c.h.b16 %v190
      %v268 = vunpack.c.l.b16 %v191
      %v269 = vpack.c.b16 %v248, %v245
      %v270 = vpack.c.b16 %v249, %v246
      %v271 = vpack.c.b16 %v250, %v247
      %v272 = vpack.c.b16 %v254, %v251
      %v273 = vpack.c.b16 %v255, %v252
      %v274 = vpack.c.b16 %v256, %v253
      %v275 = vpack.c.b16 %v260, %v257
      %v276 = vpack.c.b16 %v261, %v258
      %v277 = vpack.c.b16 %v262, %v259
      %v278 = vpack.c.b16 %v266, %v263
      %v279 = vpack.c.b16 %v267, %v264
      %v280 = vpack.c.b16 %v268, %v265
      %v326 = vunpack.c.l.b16 %v192
      %v327 = vunpack.c.l.b16 %v193
      %v328 = vunpack.c.l.b16 %v194
      %v329 = vunpack.c.l.b16 %v195
      %v330 = vunpack.c.l.b16 %v196
      %v331 = vunpack.c.l.b16 %v197
      %v332 = vunpack.c.l.b16 %v198
      %v333 = vunpack.c.l.b16 %v199
      %v334 = vunpack.c.l.b16 %v200
      %v335 = vunpack.c.l.b16 %v201
      %v336 = vunpack.c.l.b16 %v202
      %v337 = vunpack.c.l.b16 %v203
      %v338 = vunpack.c.l.b16 %v204
      %v339 = vunpack.c.l.b16 %v205
      %v340 = vunpack.c.l.b16 %v206
      %v341 = vunpack.c.l.b16 %v207
      %v342 = vunpack.c.l.b16 %v208
      %v343 = vunpack.c.l.b16 %v209
      %v344 = vunpack.c.l.b16 %v210
      %v345 = vunpack.c.l.b16 %v211
      %v346 = vunpack.c.l.b16 %v212
      %v347 = vunpack.c.l.b16 %v213
      %v348 = vunpack.c.l.b16 %v214
      %v349 = vunpack.c.l.b16 %v215
      %v350 = vunpack.c.l.b16 %v216
      %v351 = vunpack.c.l.b16 %v217
      %v352 = vunpack.c.l.b16 %v218
      %v353 = vunpack.c.l.b16 %v219
      %v354 = vunpack.c.l.b16 %v220
      %v355 = vunpack.c.l.b16 %v221
      %v356 = vunpack.c.l.b16 %v222
      %v357 = vunpack.c.l.b16 %v223
      %v358 = vunpack.c.l.b16 %v224
      %v359 = vunpack.c.l.b16 %v225
      %v360 = vunpack.c.l.b16 %v226
      %v361 = vunpack.c.l.b16 %v227
      %v362 = vunpack.c.l.b16 %v228
      %v363 = vpack.c.b16 %v327, %v326
      %v364 = vpack.c.b16 %v329, %v328
      %v365 = vpack.c.b16 %v331, %v330
      %v366 = vpack.c.b16 %v333, %v332
      %v367 = vpack.c.b16 %v335, %v334
      %v368 = vpack.c.b16 %v337, %v336
      %v369 = vpack.c.b16 %v339, %v338
      %v370 = vpack.c.b16 %v341, %v340
      %v371 = vpack.c.b16 %v343, %v342
      %v372 = vpack.c.b16 %v345, %v344
      %v373 = vpack.c.b16 %v347, %v346
      %v374 = vpack.c.b16 %v349, %v348
      %v375 = vpack.c.b16 %v351, %v350
      %v376 = vpack.c.b16 %v353, %v352
      %v377 = vpack.c.b16 %v355, %v354
      %v378 = vpack.c.b16 %v357, %v356
      %v379 = vpack.c.b16 %v359, %v358
      %v380 = vpack.c.b16 %v361, %v360
      %v381 = vpack.c.b16 %v362, %v362
      %vm400 = vcmask 269312
      %v402 = vsel %vm400, %v271, 0
      %v405 = vsel %vm400, %v274, 0
      %v408 = vsel %vm400, %v277, 0
      %v411 = vsel %vm400, %v280, 0
      %vm413 = vcmask 1040384
      %v414 = vsel 0, 4294967295, 65535
      %v415 = vsel %vm413, %v414, 0
      %v417 = vand.u32 %v381, %v415
      %419 = vmatprep.subr.bf16.mxu0 0
      %420 = vmatpush1.bf16.msra.mxu0 %v370
      %421 = vmatprep.subr.bf16.mxu0 0
      %422 = vmatpush1.bf16.msra.mxu0 %v369
      %423 = vmatprep.subr.bf16.mxu0 0
      %424 = vmatpush1.bf16.msra.mxu0 %v368
      %425 = vmatprep.subr.bf16.mxu0 0
      %426 = vmatpush1.bf16.msra.mxu0 %v367
      %427 = vmatprep.subr.bf16.mxu0 0
      %428 = vmatpush1.bf16.msra.mxu0 %v366
      %429 = vmatprep.subr.bf16.mxu0 0
      %430 = vmatpush1.bf16.msra.mxu0 %v365
      %431 = vmatprep.subr.bf16.mxu0 0
      %432 = vmatpush1.bf16.msra.mxu0 %v364
      %433 = vmatprep.subr.bf16.mxu0 0
      %434 = vmatpush1.bf16.msra.mxu0 %v363
      %435 = vmatprep.subr.bf16.mxu0 0
      %436 = vmatpush2.bf16.msra.mxu0 %v378
      %437 = vmatprep.subr.bf16.mxu0 0
      %438 = vmatpush2.bf16.msra.mxu0 %v377
      %439 = vmatprep.subr.bf16.mxu0 0
      %440 = vmatpush2.bf16.msra.mxu0 %v376
      %441 = vmatprep.subr.bf16.mxu0 0
      %442 = vmatpush2.bf16.msra.mxu0 %v375
      %443 = vmatprep.subr.bf16.mxu0 0
      %444 = vmatpush2.bf16.msra.mxu0 %v374
      %445 = vmatprep.subr.bf16.mxu0 0
      %446 = vmatpush2.bf16.msra.mxu0 %v373
      %447 = vmatprep.subr.bf16.mxu0 0
      %448 = vmatpush2.bf16.msra.mxu0 %v372
      %449 = vmatprep.subr.bf16.mxu0 0
      %450 = vmatpush2.bf16.msra.mxu0 %v371
      %451 = vmatprep.mubr.bf16.mxu0 %v270
      %452 = vmatmul.mubr.bf16.gmra.mxu0 %v269
      %v453 = vpop.f32.mrf.mxu0
      %v454 = vadd.f32 0.0, %v453
      %v455 = vpop.f32.mrf.mxu0
      %v456 = vpop.f32.mrf.mxu0
      %v457 = vadd.f32 0.0, %v456
      %v458 = vpop.f32.mrf.mxu0
      %459 = vmatprep.mubr.bf16.mxu0 %v273
      %460 = vmatmul.mubr.bf16.gmra.mxu0 %v272
      %v461 = vpop.f32.mrf.mxu0
      %v462 = vadd.f32 0.0, %v461
      %v463 = vpop.f32.mrf.mxu0
      %v464 = vpop.f32.mrf.mxu0
      %v465 = vadd.f32 0.0, %v464
      %v466 = vpop.f32.mrf.mxu0
      %467 = vmatprep.mubr.bf16.mxu0 %v276
      %468 = vmatmul.mubr.bf16.gmra.mxu0 %v275
      %v469 = vpop.f32.mrf.mxu0
      %v470 = vadd.f32 0.0, %v469
      %v471 = vpop.f32.mrf.mxu0
      %v472 = vpop.f32.mrf.mxu0
      %v473 = vadd.f32 0.0, %v472
      %v474 = vpop.f32.mrf.mxu0
      %475 = vmatprep.mubr.bf16.mxu0 %v279
      %476 = vmatmul.mubr.bf16.gmra.mxu0 %v278
      %v477 = vpop.f32.mrf.mxu0
      %v478 = vadd.f32 0.0, %v477
      %v479 = vpop.f32.mrf.mxu0
      %v480 = vpop.f32.mrf.mxu0
      %v481 = vadd.f32 0.0, %v480
      %v482 = vpop.f32.mrf.mxu0
      %483 = vdwg.mxu0
      %484 = vmatprep.subr.bf16.mxu0 0
      %485 = vmatpush1.bf16.msra.mxu0 0
      %486 = vmatprep.subr.bf16.mxu0 0
      %487 = vmatpush1.bf16.msra.mxu0 0
      %488 = vmatprep.subr.bf16.mxu0 0
      %489 = vmatpush1.bf16.msra.mxu0 0
      %490 = vmatprep.subr.bf16.mxu0 0
      %491 = vmatpush1.bf16.msra.mxu0 0
      %492 = vmatprep.subr.bf16.mxu0 0
      %493 = vmatpush1.bf16.msra.mxu0 0
      %494 = vmatprep.subr.bf16.mxu0 0
      %495 = vmatpush1.bf16.msra.mxu0 %v417
      %496 = vmatprep.subr.bf16.mxu0 0
      %497 = vmatpush1.bf16.msra.mxu0 %v380
      %498 = vmatprep.subr.bf16.mxu0 0
      %499 = vmatpush1.bf16.msra.mxu0 %v379
      %500 = vmatprep.subr.bf16.mxu0 0
      %501 = vmatpush2.bf16.msra.mxu0 0
      %502 = vmatprep.subr.bf16.mxu0 0
      %503 = vmatpush2.bf16.msra.mxu0 0
      %504 = vmatprep.subr.bf16.mxu0 0
      %505 = vmatpush2.bf16.msra.mxu0 0
      %506 = vmatprep.subr.bf16.mxu0 0
      %507 = vmatpush2.bf16.msra.mxu0 0
      %508 = vmatprep.subr.bf16.mxu0 0
      %509 = vmatpush2.bf16.msra.mxu0 0
      %510 = vmatprep.subr.bf16.mxu0 0
      %511 = vmatpush2.bf16.msra.mxu0 0
      %512 = vmatprep.subr.bf16.mxu0 0
      %513 = vmatpush2.bf16.msra.mxu0 0
      %514 = vmatprep.subr.bf16.mxu0 0
      %515 = vmatpush2.bf16.msra.mxu0 0
      %516 = vmatprep.mubr.bf16.mxu0 0
      %517 = vmatmul.mubr.bf16.gmra.mxu0 %v402
      %v518 = vpop.f32.mrf.mxu0
      %v519 = vadd.f32 %v454, %v518
      %v520 = vpop.f32.mrf.mxu0
      %v521 = vpop.f32.mrf.mxu0
      %v522 = vadd.f32 %v457, %v521
      %v523 = vpop.f32.mrf.mxu0
      %524 = vmatprep.mubr.bf16.mxu0 0
      %525 = vmatmul.mubr.bf16.gmra.mxu0 %v405
      %v526 = vpop.f32.mrf.mxu0
      %v527 = vadd.f32 %v462, %v526
      %v528 = vpop.f32.mrf.mxu0
      %v529 = vpop.f32.mrf.mxu0
      %v530 = vadd.f32 %v465, %v529
      %v531 = vpop.f32.mrf.mxu0
      %532 = vmatprep.mubr.bf16.mxu0 0
      %533 = vmatmul.mubr.bf16.gmra.mxu0 %v408
      %v534 = vpop.f32.mrf.mxu0
      %v535 = vadd.f32 %v470, %v534
      %v536 = vpop.f32.mrf.mxu0
      %v537 = vpop.f32.mrf.mxu0
      %v538 = vadd.f32 %v473, %v537
      %v539 = vpop.f32.mrf.mxu0
      %540 = vmatprep.mubr.bf16.mxu0 0
      %541 = vmatmul.mubr.bf16.gmra.mxu0 %v411
      %v542 = vpop.f32.mrf.mxu0
      %v543 = vadd.f32 %v478, %v542
      %v544 = vpop.f32.mrf.mxu0
      %v545 = vpop.f32.mrf.mxu0
      %v546 = vadd.f32 %v481, %v545
      %v547 = vpop.f32.mrf.mxu0
      %548 = vdwg.mxu0
      %v549 = vmax.f32 %v519, 0.0
      %v550 = vmax.f32 %v522, 0.0
      %v551 = vmax.f32 %v527, 0.0
      %v552 = vmax.f32 %v530, 0.0
      %v553 = vmax.f32 %v535, 0.0
      %v554 = vmax.f32 %v538, 0.0
      %v555 = vmax.f32 %v543, 0.0
      %v556 = vmax.f32 %v546, 0.0
      %v557 = vpack.c.bf16 %v550, %v549
      %v558 = vpack.c.bf16 %v552, %v551
      %v559 = vpack.c.bf16 %v554, %v553
      %v560 = vpack.c.bf16 %v556, %v555
      %v565 = vunpack.c.l.b16 %v557
      %v566 = vunpack.c.h.b16 %v557
      %v567 = vunpack.c.l.b16 %v558
      %v568 = vunpack.c.h.b16 %v558
      %v569 = vunpack.c.l.b16 %v559
      %v570 = vunpack.c.h.b16 %v559
      %v571 = vunpack.c.l.b16 %v560
      %v572 = vunpack.c.h.b16 %v560
      %v573 = vpack.c.b16 %v565, %v565
      %v574 = vpack.c.b16 %v566, %v566
      %v575 = vpack.c.b16 %v567, %v567
      %v576 = vpack.c.b16 %v568, %v568
      %v577 = vpack.c.b16 %v569, %v569
      %v578 = vpack.c.b16 %v570, %v570
      %v579 = vpack.c.b16 %v571, %v571
      %v580 = vpack.c.b16 %v572, %v572
      %vm589 = vcmask 257024
      %590 = vst.msk [vmem:[%s174] sm:$0xf] %vm589, %v573
      %591 = vst.msk [vmem:[%s174 + $0x4] sm:$0xf] %vm589, %v574
      %592 = vst.msk [vmem:[%s174 + $0x8] sm:$0xf] %vm589, %v575
      %593 = vst.msk [vmem:[%s174 + $0xc] sm:$0xf] %vm589, %v576
      %594 = vst.msk [vmem:[%s174 + $0x10] sm:$0xf] %vm589, %v577
      %595 = vst.msk [vmem:[%s174 + $0x14] sm:$0xf] %vm589, %v578
      %596 = vst.msk [vmem:[%s174 + $0x18] sm:$0xf] %vm589, %v579
      %597 = vst.msk [vmem:[%s174 + $0x1c] sm:$0xf] %vm589, %v580
      %p598 = scmp.lt.s32.totalorder %s17, 1
      %s599 = scalar_select %p598, %s17, 1
      %p600 = scmp.lt.s32.totalorder %s18, 0
      %s601 = scalar_select %p600, %s18, 0
      %s602 = smul.addr %s599, 8
      %s603 = sadd.s32 %s601, %s602
      %s604 = smul.addr %s603, 4
      %s605 = scalar_lea.vmem %s2, %s604
      // Predicated region
      $region29: #{lpips.10} parent=27 // pred_check
        %p606 = pneg %p94
      $region30: #{lpips.10} parent=27 // pred_check_branch
        %608 = sbr.rel (%p606) target = $region32
      $region31: #{lpips.10} parent=27 // pred_region
        _
      $region32: #{lpips.10} parent=27 // pred_fallthru
        _
    $region28: #{lpips.10} parent=5 // pred_fallthru
      _
    %p609 = scmp.le.s32.totalorder 2, %s8
    // Predicated region
    $region33: #{lpips.10} parent=5 // pred_check
      %p610 = pneg %p609
    $region34: #{lpips.10} parent=5 // pred_check_branch
      %612 = sbr.rel (%p610) target = $region36
    $region35: #{lpips.10} parent=5 // pred_region
      %s613 = ssub.s32 %s8, 2
      // Predicated region
      $region37: #{lpips.10} parent=35 // pred_check
        %p614 = pneg %p100
      $region38: #{lpips.10} parent=35 // pred_check_branch
        %616 = sbr.rel (%p614) target = $region40
      $region39: #{lpips.10} parent=35 // pred_region
        %p617 = scmp.lt.s32.totalorder %s19, 1
        %s618 = scalar_select %p617, %s19, 1
        %p619 = scmp.lt.s32.totalorder %s20, 0
        %s620 = scalar_select %p619, %s20, 0
        %s621 = smul.addr %s618, 8
        %s622 = sadd.s32 %s620, %s621
        %s623 = smul.addr %s622, 4
        %s624 = scalar_lea.vmem %s2, %s623
      $region40: #{lpips.10} parent=35 // pred_fallthru
        _
    $region36: #{lpips.10} parent=5 // pred_fallthru
      _
  $region6: #{lpips.10} parent=0 // loop_footer
    %s12 = sadd.s32 1, %s8
  $region7: #{lpips.10} parent=0 // loop_footer_branch
    %7 = sbr.rel target = $region3
  $region8: #{lpips.10} parent=0 // loop_exit
    _

// kernel: lpips.14
$region0: #{lpips.14}
  #allocation0 [shape = 'u32[]', space=smem, size = 0x4, offset = 0x4, fixed_abs, tag = 'smem constant byte address 0x4 - core index']
  #allocation1 [shape = 'u32[144,128]{1,0:T(1,128)}', space=vmem, size = 0x12000, scoped, tag = 'internal scratch']
  %s0 = inlined_call_operand.vmem [shape: bf16[2,64,32], index: 0, kind: input, shape index: {}, may-alias: {0,1}]
  %s1 = inlined_call_operand.vmem [shape: bf16[2,64,32], index: 1, kind: input, shape index: {}, may-alias: {0,1}]
  %s2 = inlined_call_operand.vmem [shape: f32[1,32], index: 2, kind: output, shape index: {}]
  %s3 = sld [smem:[#allocation0]]
  $region18: #{lpips.14} parent=0
    _
  %s5 = ssub.s32 1, %s3
  %s6 = scalar_select 0, %s5, %s3
  // Predicated region
  $region2: #{lpips.14} parent=0 // pred_check
    _
  $region3: #{lpips.14} parent=0 // pred_check_branch
    %8 = sbr.rel (0) target = $region5
  $region4: #{lpips.14} parent=0 // pred_region
    _
  $region5: #{lpips.14} parent=0 // pred_fallthru
    _
  // Predicated region
  $region6: #{lpips.14} parent=0 // pred_check
    _
  $region7: #{lpips.14} parent=0 // pred_check_branch
    %10 = sbr.rel (0) target = $region9
  $region8: #{lpips.14} parent=0 // pred_region
    %s11 = scalar_lea.vmem %s1, 32
  $region9: #{lpips.14} parent=0 // pred_fallthru
    _
  %s12 = scalar_lea.vmem %s1, 32
  %s13 = scalar_lea.vmem %s1, 32
  %v14 = vld [vmem:[%s0] sm:$0xf]
  %v15 = vld [vmem:[%s0 + $0x4] sm:$0xf]
  %v16 = vld [vmem:[%s0 + $0x8] sm:$0xf]
  %v17 = vld [vmem:[%s0 + $0xc] sm:$0xf]
  %v18 = vld [vmem:[%s0 + $0x10] sm:$0xf]
  %v19 = vld [vmem:[%s0 + $0x14] sm:$0xf]
  %v20 = vld [vmem:[%s0 + $0x18] sm:$0xf]
  %v21 = vld [vmem:[%s0 + $0x1c] sm:$0xf]
  %v22 = vunpack.c.l.bf16 %v14
  %v23 = vunpack.c.l.bf16 %v15
  %v24 = vunpack.c.l.bf16 %v16
  %v25 = vunpack.c.l.bf16 %v17
  %v26 = vunpack.c.l.bf16 %v18
  %v27 = vunpack.c.l.bf16 %v19
  %v28 = vunpack.c.l.bf16 %v20
  %v29 = vunpack.c.l.bf16 %v21
  %v30 = vld [vmem:[%s13] sm:$0xf]
  %v31 = vld [vmem:[%s13 + $0x4] sm:$0xf]
  %v32 = vld [vmem:[%s13 + $0x8] sm:$0xf]
  %v33 = vld [vmem:[%s13 + $0xc] sm:$0xf]
  %v34 = vld [vmem:[%s13 + $0x10] sm:$0xf]
  %v35 = vld [vmem:[%s13 + $0x14] sm:$0xf]
  %v36 = vld [vmem:[%s13 + $0x18] sm:$0xf]
  %v37 = vld [vmem:[%s13 + $0x1c] sm:$0xf]
  %v38 = vunpack.c.l.bf16 %v30
  %v39 = vunpack.c.l.bf16 %v31
  %v40 = vunpack.c.l.bf16 %v32
  %v41 = vunpack.c.l.bf16 %v33
  %v42 = vunpack.c.l.bf16 %v34
  %v43 = vunpack.c.l.bf16 %v35
  %v44 = vunpack.c.l.bf16 %v36
  %v45 = vunpack.c.l.bf16 %v37
  %v46 = vmul.f32 %v22, %v22
  %v47 = vmul.f32 %v23, %v23
  %v48 = vmul.f32 %v24, %v24
  %v49 = vmul.f32 %v25, %v25
  %v50 = vmul.f32 %v26, %v26
  %v51 = vmul.f32 %v27, %v27
  %v52 = vmul.f32 %v28, %v28
  %v53 = vmul.f32 %v29, %v29
  %vm54 = vcmask 261120
  %v55 = vsel %vm54, %v46, 0.0
  %v56 = vsel %vm54, %v47, 0.0
  %v57 = vadd.f32 %v55, %v56
  %v58 = vsel %vm54, %v48, 0.0
  %v59 = vadd.f32 %v57, %v58
  %v60 = vsel %vm54, %v49, 0.0
  %v61 = vadd.f32 %v59, %v60
  %v62 = vsel %vm54, %v50, 0.0
  %v63 = vadd.f32 %v61, %v62
  %v64 = vsel %vm54, %v51, 0.0
  %v65 = vadd.f32 %v63, %v64
  %v66 = vsel %vm54, %v52, 0.0
  %v67 = vadd.f32 %v65, %v66
  %v68 = vsel %vm54, %v53, 0.0
  %v69 = vadd.f32 %v67, %v68
  %v70 = vrot.slane %v69, 4
  %v71 = vadd.f32 %v69, %v70
  %v72 = vrot.slane %v71, 2
  %v73 = vadd.f32 %v71, %v72
  %v74 = vrot.slane %v73, 1
  %v75 = vadd.f32 %v73, %v74
  %v76 = vrsqrt.pop %v75
  %v77 = vmul.f32 %v75, %v76
  %vm78 = vcmp.eq.f32.partialorder %v75, inf
  %v79 = vsel %vm78, %v75, %v77
  %vm80 = vcmp.eq.f32.partialorder %v75, 0.0
  %v81 = vand.u32 %v75, 2147483648
  %v82 = vsel %vm80, %v81, %v79
  %v83 = vmul.f32 %v38, %v38
  %v84 = vmul.f32 %v39, %v39
  %v85 = vmul.f32 %v40, %v40
  %v86 = vmul.f32 %v41, %v41
  %v87 = vmul.f32 %v42, %v42
  %v88 = vmul.f32 %v43, %v43
  %v89 = vmul.f32 %v44, %v44
  %v90 = vmul.f32 %v45, %v45
  %v91 = vsel %vm54, %v83, 0.0
  %v92 = vsel %vm54, %v84, 0.0
  %v93 = vadd.f32 %v91, %v92
  %v94 = vsel %vm54, %v85, 0.0
  %v95 = vadd.f32 %v93, %v94
  %v96 = vsel %vm54, %v86, 0.0
  %v97 = vadd.f32 %v95, %v96
  %v98 = vsel %vm54, %v87, 0.0
  %v99 = vadd.f32 %v97, %v98
  %v100 = vsel %vm54, %v88, 0.0
  %v101 = vadd.f32 %v99, %v100
  %v102 = vsel %vm54, %v89, 0.0
  %v103 = vadd.f32 %v101, %v102
  %v104 = vsel %vm54, %v90, 0.0
  %v105 = vadd.f32 %v103, %v104
  %v106 = vrot.slane %v105, 4
  %v107 = vadd.f32 %v105, %v106
  %v108 = vrot.slane %v107, 2
  %v109 = vadd.f32 %v107, %v108
  %v110 = vrot.slane %v109, 1
  %v111 = vadd.f32 %v109, %v110
  %v112 = vrsqrt.pop %v111
  %v113 = vmul.f32 %v111, %v112
  %vm114 = vcmp.eq.f32.partialorder %v111, inf
  %v115 = vsel %vm114, %v111, %v113
  %vm116 = vcmp.eq.f32.partialorder %v111, 0.0
  %v117 = vand.u32 %v111, 2147483648
  %v118 = vsel %vm116, %v117, %v115
  %v119 = vadd.f32 %v82, 1e-10
  %v120 = vrcp.pop %v119
  %v121 = vadd.f32 %v118, 1e-10
  %v122 = vrcp.pop %v121
  %v123 = vmul.f32 %v22, %v120
  %v124 = vmul.f32 %v23, %v120
  %v125 = vmul.f32 %v24, %v120
  %v126 = vmul.f32 %v25, %v120
  %v127 = vmul.f32 %v26, %v120
  %v128 = vmul.f32 %v27, %v120
  %v129 = vmul.f32 %v28, %v120
  %v130 = vmul.f32 %v29, %v120
  %v131 = vmul.f32 %v38, %v122
  %v132 = vmul.f32 %v39, %v122
  %v133 = vmul.f32 %v40, %v122
  %v134 = vmul.f32 %v41, %v122
  %v135 = vmul.f32 %v42, %v122
  %v136 = vmul.f32 %v43, %v122
  %v137 = vmul.f32 %v44, %v122
  %v138 = vmul.f32 %v45, %v122
  %v139 = vsub.f32 %v123, %v131
  %v140 = vsub.f32 %v124, %v132
  %v141 = vsub.f32 %v125, %v133
  %v142 = vsub.f32 %v126, %v134
  %v143 = vsub.f32 %v127, %v135
  %v144 = vsub.f32 %v128, %v136
  %v145 = vsub.f32 %v129, %v137
  %v146 = vsub.f32 %v130, %v138
  %v147 = vand.u32 2147483647, %v139
  %v148 = vand.u32 2147483647, %v140
  %v149 = vand.u32 2147483647, %v141
  %v150 = vand.u32 2147483647, %v142
  %v151 = vand.u32 2147483647, %v143
  %v152 = vand.u32 2147483647, %v144
  %v153 = vand.u32 2147483647, %v145
  %v154 = vand.u32 2147483647, %v146
  %v155 = vsel %vm54, %v147, 0.0
  %v156 = vsel %vm54, %v148, 0.0
  %v157 = vadd.f32 %v155, %v156
  %v158 = vsel %vm54, %v149, 0.0
  %v159 = vadd.f32 %v157, %v158
  %v160 = vsel %vm54, %v150, 0.0
  %v161 = vadd.f32 %v159, %v160
  %v162 = vsel %vm54, %v151, 0.0
  %v163 = vadd.f32 %v161, %v162
  %v164 = vsel %vm54, %v152, 0.0
  %v165 = vadd.f32 %v163, %v164
  %v166 = vsel %vm54, %v153, 0.0
  %v167 = vadd.f32 %v165, %v166
  %v168 = vsel %vm54, %v154, 0.0
  %v169 = vadd.f32 %v167, %v168
  %v170 = vrot.slane %v169, 4
  %v171 = vadd.f32 %v169, %v170
  %v172 = vrot.slane %v171, 2
  %v173 = vadd.f32 %v171, %v172
  %v174 = vrot.slane %v173, 1
  %v175 = vadd.f32 %v173, %v174
  %vm176 = vcmask 253952
  %177 = vst.msk [vmem:[%s2] sm:$0x1] %vm176, %v175
  // Predicated region
  $region10: #{lpips.14} parent=0 // pred_check
    _
  $region11: #{lpips.14} parent=0 // pred_check_branch
    %179 = sbr.rel (0) target = $region13
  $region12: #{lpips.14} parent=0 // pred_region
    _
  $region13: #{lpips.14} parent=0 // pred_fallthru
    _
  // Predicated region
  $region14: #{lpips.14} parent=0 // pred_check
    _
  $region15: #{lpips.14} parent=0 // pred_check_branch
    %181 = sbr.rel (0) target = $region17
  $region16: #{lpips.14} parent=0 // pred_region
    _
  $region17: #{lpips.14} parent=0 // pred_fallthru
    _

// kernel: lpips.15
$region0: #{lpips.15}
  #allocation0 [shape = 'u32[]', space=smem, size = 0x4, offset = 0x4, fixed_abs, tag = 'smem constant byte address 0x4 - core index']
  #allocation1 [shape = 'u32[144,128]{1,0:T(1,128)}', space=vmem, size = 0x12000, scoped, tag = 'internal scratch']
  %s0 = inlined_call_operand.vmem [shape: bf16[2,128,8], index: 0, kind: input, shape index: {}, may-alias: {0,1}]
  %s1 = inlined_call_operand.vmem [shape: bf16[2,128,8], index: 1, kind: input, shape index: {}, may-alias: {0,1}]
  %s2 = inlined_call_operand.vmem [shape: f32[1,8], index: 2, kind: output, shape index: {}]
  %s3 = sld [smem:[#allocation0]]
  $region18: #{lpips.15} parent=0
    _
  %s5 = ssub.s32 1, %s3
  %s6 = scalar_select 0, %s5, %s3
  // Predicated region
  $region2: #{lpips.15} parent=0 // pred_check
    _
  $region3: #{lpips.15} parent=0 // pred_check_branch
    %8 = sbr.rel (0) target = $region5
  $region4: #{lpips.15} parent=0 // pred_region
    _
  $region5: #{lpips.15} parent=0 // pred_fallthru
    _
  // Predicated region
  $region6: #{lpips.15} parent=0 // pred_check
    _
  $region7: #{lpips.15} parent=0 // pred_check_branch
    %10 = sbr.rel (0) target = $region9
  $region8: #{lpips.15} parent=0 // pred_region
    %s11 = scalar_lea.vmem %s1, 64
  $region9: #{lpips.15} parent=0 // pred_fallthru
    _
  %s12 = scalar_lea.vmem %s1, 64
  %s13 = scalar_lea.vmem %s1, 64
  %v14 = vld [vmem:[%s0] sm:$0xf]
  %v15 = vld [vmem:[%s0 + $0x4] sm:$0xf]
  %v16 = vld [vmem:[%s0 + $0x8] sm:$0xf]
  %v17 = vld [vmem:[%s0 + $0xc] sm:$0xf]
  %v18 = vld [vmem:[%s0 + $0x10] sm:$0xf]
  %v19 = vld [vmem:[%s0 + $0x14] sm:$0xf]
  %v20 = vld [vmem:[%s0 + $0x18] sm:$0xf]
  %v21 = vld [vmem:[%s0 + $0x1c] sm:$0xf]
  %v22 = vld [vmem:[%s0 + $0x20] sm:$0xf]
  %v23 = vld [vmem:[%s0 + $0x24] sm:$0xf]
  %v24 = vld [vmem:[%s0 + $0x28] sm:$0xf]
  %v25 = vld [vmem:[%s0 + $0x2c] sm:$0xf]
  %v26 = vld [vmem:[%s0 + $0x30] sm:$0xf]
  %v27 = vld [vmem:[%s0 + $0x34] sm:$0xf]
  %v28 = vld [vmem:[%s0 + $0x38] sm:$0xf]
  %v29 = vld [vmem:[%s0 + $0x3c] sm:$0xf]
  %v30 = vunpack.c.l.bf16 %v14
  %v31 = vunpack.c.l.bf16 %v15
  %v32 = vunpack.c.l.bf16 %v16
  %v33 = vunpack.c.l.bf16 %v17
  %v34 = vunpack.c.l.bf16 %v18
  %v35 = vunpack.c.l.bf16 %v19
  %v36 = vunpack.c.l.bf16 %v20
  %v37 = vunpack.c.l.bf16 %v21
  %v38 = vunpack.c.l.bf16 %v22
  %v39 = vunpack.c.l.bf16 %v23
  %v40 = vunpack.c.l.bf16 %v24
  %v41 = vunpack.c.l.bf16 %v25
  %v42 = vunpack.c.l.bf16 %v26
  %v43 = vunpack.c.l.bf16 %v27
  %v44 = vunpack.c.l.bf16 %v28
  %v45 = vunpack.c.l.bf16 %v29
  %v46 = vld [vmem:[%s13] sm:$0xf]
  %v47 = vld [vmem:[%s13 + $0x4] sm:$0xf]
  %v48 = vld [vmem:[%s13 + $0x8] sm:$0xf]
  %v49 = vld [vmem:[%s13 + $0xc] sm:$0xf]
  %v50 = vld [vmem:[%s13 + $0x10] sm:$0xf]
  %v51 = vld [vmem:[%s13 + $0x14] sm:$0xf]
  %v52 = vld [vmem:[%s13 + $0x18] sm:$0xf]
  %v53 = vld [vmem:[%s13 + $0x1c] sm:$0xf]
  %v54 = vld [vmem:[%s13 + $0x20] sm:$0xf]
  %v55 = vld [vmem:[%s13 + $0x24] sm:$0xf]
  %v56 = vld [vmem:[%s13 + $0x28] sm:$0xf]
  %v57 = vld [vmem:[%s13 + $0x2c] sm:$0xf]
  %v58 = vld [vmem:[%s13 + $0x30] sm:$0xf]
  %v59 = vld [vmem:[%s13 + $0x34] sm:$0xf]
  %v60 = vld [vmem:[%s13 + $0x38] sm:$0xf]
  %v61 = vld [vmem:[%s13 + $0x3c] sm:$0xf]
  %v62 = vunpack.c.l.bf16 %v46
  %v63 = vunpack.c.l.bf16 %v47
  %v64 = vunpack.c.l.bf16 %v48
  %v65 = vunpack.c.l.bf16 %v49
  %v66 = vunpack.c.l.bf16 %v50
  %v67 = vunpack.c.l.bf16 %v51
  %v68 = vunpack.c.l.bf16 %v52
  %v69 = vunpack.c.l.bf16 %v53
  %v70 = vunpack.c.l.bf16 %v54
  %v71 = vunpack.c.l.bf16 %v55
  %v72 = vunpack.c.l.bf16 %v56
  %v73 = vunpack.c.l.bf16 %v57
  %v74 = vunpack.c.l.bf16 %v58
  %v75 = vunpack.c.l.bf16 %v59
  %v76 = vunpack.c.l.bf16 %v60
  %v77 = vunpack.c.l.bf16 %v61
  %v78 = vmul.f32 %v30, %v30
  %v79 = vmul.f32 %v31, %v31
  %v80 = vmul.f32 %v32, %v32
  %v81 = vmul.f32 %v33, %v33
  %v82 = vmul.f32 %v34, %v34
  %v83 = vmul.f32 %v35, %v35
  %v84 = vmul.f32 %v36, %v36
  %v85 = vmul.f32 %v37, %v37
  %v86 = vmul.f32 %v38, %v38
  %v87 = vmul.f32 %v39, %v39
  %v88 = vmul.f32 %v40, %v40
  %v89 = vmul.f32 %v41, %v41
  %v90 = vmul.f32 %v42, %v42
  %v91 = vmul.f32 %v43, %v43
  %v92 = vmul.f32 %v44, %v44
  %v93 = vmul.f32 %v45, %v45
  %vm94 = vcmask 64512
  %v95 = vsel %vm94, %v78, 0.0
  %v96 = vsel %vm94, %v79, 0.0
  %v97 = vadd.f32 %v95, %v96
  %v98 = vsel %vm94, %v80, 0.0
  %v99 = vadd.f32 %v97, %v98
  %v100 = vsel %vm94, %v81, 0.0
  %v101 = vadd.f32 %v99, %v100
  %v102 = vsel %vm94, %v82, 0.0
  %v103 = vadd.f32 %v101, %v102
  %v104 = vsel %vm94, %v83, 0.0
  %v105 = vadd.f32 %v103, %v104
  %v106 = vsel %vm94, %v84, 0.0
  %v107 = vadd.f32 %v105, %v106
  %v108 = vsel %vm94, %v85, 0.0
  %v109 = vadd.f32 %v107, %v108
  %v110 = vsel %vm94, %v86, 0.0
  %v111 = vadd.f32 %v109, %v110
  %v112 = vsel %vm94, %v87, 0.0
  %v113 = vadd.f32 %v111, %v112
  %v114 = vsel %vm94, %v88, 0.0
  %v115 = vadd.f32 %v113, %v114
  %v116 = vsel %vm94, %v89, 0.0
  %v117 = vadd.f32 %v115, %v116
  %v118 = vsel %vm94, %v90, 0.0
  %v119 = vadd.f32 %v117, %v118
  %v120 = vsel %vm94, %v91, 0.0
  %v121 = vadd.f32 %v119, %v120
  %v122 = vsel %vm94, %v92, 0.0
  %v123 = vadd.f32 %v121, %v122
  %v124 = vsel %vm94, %v93, 0.0
  %v125 = vadd.f32 %v123, %v124
  %v126 = vrot.slane %v125, 4
  %v127 = vadd.f32 %v125, %v126
  %v128 = vrot.slane %v127, 2
  %v129 = vadd.f32 %v127, %v128
  %v130 = vrot.slane %v129, 1
  %v131 = vadd.f32 %v129, %v130
  %v132 = vrsqrt.pop %v131
  %v133 = vmul.f32 %v131, %v132
  %vm134 = vcmp.eq.f32.partialorder %v131, inf
  %v135 = vsel %vm134, %v131, %v133
  %vm136 = vcmp.eq.f32.partialorder %v131, 0.0
  %v137 = vand.u32 %v131, 2147483648
  %v138 = vsel %vm136, %v137, %v135
  %v139 = vmul.f32 %v62, %v62
  %v140 = vmul.f32 %v63, %v63
  %v141 = vmul.f32 %v64, %v64
  %v142 = vmul.f32 %v65, %v65
  %v143 = vmul.f32 %v66, %v66
  %v144 = vmul.f32 %v67, %v67
  %v145 = vmul.f32 %v68, %v68
  %v146 = vmul.f32 %v69, %v69
  %v147 = vmul.f32 %v70, %v70
  %v148 = vmul.f32 %v71, %v71
  %v149 = vmul.f32 %v72, %v72
  %v150 = vmul.f32 %v73, %v73
  %v151 = vmul.f32 %v74, %v74
  %v152 = vmul.f32 %v75, %v75
  %v153 = vmul.f32 %v76, %v76
  %v154 = vmul.f32 %v77, %v77
  %v155 = vsel %vm94, %v139, 0.0
  %v156 = vsel %vm94, %v140, 0.0
  %v157 = vadd.f32 %v155, %v156
  %v158 = vsel %vm94, %v141, 0.0
  %v159 = vadd.f32 %v157, %v158
  %v160 = vsel %vm94, %v142, 0.0
  %v161 = vadd.f32 %v159, %v160
  %v162 = vsel %vm94, %v143, 0.0
  %v163 = vadd.f32 %v161, %v162
  %v164 = vsel %vm94, %v144, 0.0
  %v165 = vadd.f32 %v163, %v164
  %v166 = vsel %vm94, %v145, 0.0
  %v167 = vadd.f32 %v165, %v166
  %v168 = vsel %vm94, %v146, 0.0
  %v169 = vadd.f32 %v167, %v168
  %v170 = vsel %vm94, %v147, 0.0
  %v171 = vadd.f32 %v169, %v170
  %v172 = vsel %vm94, %v148, 0.0
  %v173 = vadd.f32 %v171, %v172
  %v174 = vsel %vm94, %v149, 0.0
  %v175 = vadd.f32 %v173, %v174
  %v176 = vsel %vm94, %v150, 0.0
  %v177 = vadd.f32 %v175, %v176
  %v178 = vsel %vm94, %v151, 0.0
  %v179 = vadd.f32 %v177, %v178
  %v180 = vsel %vm94, %v152, 0.0
  %v181 = vadd.f32 %v179, %v180
  %v182 = vsel %vm94, %v153, 0.0
  %v183 = vadd.f32 %v181, %v182
  %v184 = vsel %vm94, %v154, 0.0
  %v185 = vadd.f32 %v183, %v184
  %v186 = vrot.slane %v185, 4
  %v187 = vadd.f32 %v185, %v186
  %v188 = vrot.slane %v187, 2
  %v189 = vadd.f32 %v187, %v188
  %v190 = vrot.slane %v189, 1
  %v191 = vadd.f32 %v189, %v190
  %v192 = vrsqrt.pop %v191
  %v193 = vmul.f32 %v191, %v192
  %vm194 = vcmp.eq.f32.partialorder %v191, inf
  %v195 = vsel %vm194, %v191, %v193
  %vm196 = vcmp.eq.f32.partialorder %v191, 0.0
  %v197 = vand.u32 %v191, 2147483648
  %v198 = vsel %vm196, %v197, %v195
  %v199 = vadd.f32 %v138, 1e-10
  %v200 = vrcp.pop %v199
  %v201 = vadd.f32 %v198, 1e-10
  %v202 = vrcp.pop %v201
  %v203 = vmul.f32 %v30, %v200
  %v204 = vmul.f32 %v31, %v200
  %v205 = vmul.f32 %v32, %v200
  %v206 = vmul.f32 %v33, %v200
  %v207 = vmul.f32 %v34, %v200
  %v208 = vmul.f32 %v35, %v200
  %v209 = vmul.f32 %v36, %v200
  %v210 = vmul.f32 %v37, %v200
  %v211 = vmul.f32 %v38, %v200
  %v212 = vmul.f32 %v39, %v200
  %v213 = vmul.f32 %v40, %v200
  %v214 = vmul.f32 %v41, %v200
  %v215 = vmul.f32 %v42, %v200
  %v216 = vmul.f32 %v43, %v200
  %v217 = vmul.f32 %v44, %v200
  %v218 = vmul.f32 %v45, %v200
  %v219 = vmul.f32 %v62, %v202
  %v220 = vmul.f32 %v63, %v202
  %v221 = vmul.f32 %v64, %v202
  %v222 = vmul.f32 %v65, %v202
  %v223 = vmul.f32 %v66, %v202
  %v224 = vmul.f32 %v67, %v202
  %v225 = vmul.f32 %v68, %v202
  %v226 = vmul.f32 %v69, %v202
  %v227 = vmul.f32 %v70, %v202
  %v228 = vmul.f32 %v71, %v202
  %v229 = vmul.f32 %v72, %v202
  %v230 = vmul.f32 %v73, %v202
  %v231 = vmul.f32 %v74, %v202
  %v232 = vmul.f32 %v75, %v202
  %v233 = vmul.f32 %v76, %v202
  %v234 = vmul.f32 %v77, %v202
  %v235 = vsub.f32 %v203, %v219
  %v236 = vsub.f32 %v204, %v220
  %v237 = vsub.f32 %v205, %v221
  %v238 = vsub.f32 %v206, %v222
  %v239 = vsub.f32 %v207, %v223
  %v240 = vsub.f32 %v208, %v224
  %v241 = vsub.f32 %v209, %v225
  %v242 = vsub.f32 %v210, %v226
  %v243 = vsub.f32 %v211, %v227
  %v244 = vsub.f32 %v212, %v228
  %v245 = vsub.f32 %v213, %v229
  %v246 = vsub.f32 %v214, %v230
  %v247 = vsub.f32 %v215, %v231
  %v248 = vsub.f32 %v216, %v232
  %v249 = vsub.f32 %v217, %v233
  %v250 = vsub.f32 %v218, %v234
  %v251 = vand.u32 2147483647, %v235
  %v252 = vand.u32 2147483647, %v236
  %v253 = vand.u32 2147483647, %v237
  %v254 = vand.u32 2147483647, %v238
  %v255 = vand.u32 2147483647, %v239
  %v256 = vand.u32 2147483647, %v240
  %v257 = vand.u32 2147483647, %v241
  %v258 = vand.u32 2147483647, %v242
  %v259 = vand.u32 2147483647, %v243
  %v260 = vand.u32 2147483647, %v244
  %v261 = vand.u32 2147483647, %v245
  %v262 = vand.u32 2147483647, %v246
  %v263 = vand.u32 2147483647, %v247
  %v264 = vand.u32 2147483647, %v248
  %v265 = vand.u32 2147483647, %v249
  %v266 = vand.u32 2147483647, %v250
  %v267 = vsel %vm94, %v251, 0.0
  %v268 = vsel %vm94, %v252, 0.0
  %v269 = vadd.f32 %v267, %v268
  %v270 = vsel %vm94, %v253, 0.0
  %v271 = vadd.f32 %v269, %v270
  %v272 = vsel %vm94, %v254, 0.0
  %v273 = vadd.f32 %v271, %v272
  %v274 = vsel %vm94, %v255, 0.0
  %v275 = vadd.f32 %v273, %v274
  %v276 = vsel %vm94, %v256, 0.0
  %v277 = vadd.f32 %v275, %v276
  %v278 = vsel %vm94, %v257, 0.0
  %v279 = vadd.f32 %v277, %v278
  %v280 = vsel %vm94, %v258, 0.0
  %v281 = vadd.f32 %v279, %v280
  %v282 = vsel %vm94, %v259, 0.0
  %v283 = vadd.f32 %v281, %v282
  %v284 = vsel %vm94, %v260, 0.0
  %v285 = vadd.f32 %v283, %v284
  %v286 = vsel %vm94, %v261, 0.0
  %v287 = vadd.f32 %v285, %v286
  %v288 = vsel %vm94, %v262, 0.0
  %v289 = vadd.f32 %v287, %v288
  %v290 = vsel %vm94, %v263, 0.0
  %v291 = vadd.f32 %v289, %v290
  %v292 = vsel %vm94, %v264, 0.0
  %v293 = vadd.f32 %v291, %v292
  %v294 = vsel %vm94, %v265, 0.0
  %v295 = vadd.f32 %v293, %v294
  %v296 = vsel %vm94, %v266, 0.0
  %v297 = vadd.f32 %v295, %v296
  %v298 = vrot.slane %v297, 4
  %v299 = vadd.f32 %v297, %v298
  %v300 = vrot.slane %v299, 2
  %v301 = vadd.f32 %v299, %v300
  %v302 = vrot.slane %v301, 1
  %v303 = vadd.f32 %v301, %v302
  %vm304 = vcmask 57344
  %305 = vst.msk [vmem:[%s2] sm:$0x1] %vm304, %v303
  // Predicated region
  $region10: #{lpips.15} parent=0 // pred_check
    _
  $region11: #{lpips.15} parent=0 // pred_check_branch
    %307 = sbr.rel (0) target = $region13
  $region12: #{lpips.15} parent=0 // pred_region
    _
  $region13: #{lpips.15} parent=0 // pred_fallthru
    _
  // Predicated region
  $region14: #{lpips.15} parent=0 // pred_check
    _
  $region15: #{lpips.15} parent=0 // pred_check_branch
    %309 = sbr.rel (0) target = $region17
  $region16: #{lpips.15} parent=0 // pred_region
    _
  $region17: #{lpips.15} parent=0 // pred_fallthru
    _

// kernel: lpips.11
$region0: #{lpips.11}
  #allocation0 [shape = 'u32[]', space=smem, size = 0x4, offset = 0x4, fixed_abs, tag = 'smem constant byte address 0x4 - core index']
  #allocation1 [shape = 'u32[144,128]{1,0:T(1,128)}', space=vmem, size = 0x12000, scoped, tag = 'internal scratch']
  %s0 = inlined_call_operand.vmem [shape: bf16[128,577], index: 0, kind: input, shape index: {}]
  %s1 = inlined_call_operand.vmem [shape: bf16[2,577,8], index: 1, kind: input, shape index: {}]
  %s2 = inlined_call_operand.vmem [shape: bf16[2,128,8], index: 2, kind: output, shape index: {}]
  %s3 = sld [smem:[#allocation0]]
  $region41: #{lpips.11} parent=0
    _
  %s5 = ssub.s32 1, %s3
  %s6 = scalar_select 0, %s5, %s3
  loop: start=0, step=1, limit=4
  $region2: #{lpips.11} parent=0 // loop_pre_header
    _
  $region3: #{lpips.11} parent=0 // loop_header
    %s8 = sphi 0, %s12
    %p9 = scmp.ge.s32.totalorder %s8, 4
    %s15 = sphi 0, %s27
    %s16 = sphi 0, %s23
    %s17 = sphi 0, %s15
    %s18 = sphi 0, %s16
    %s19 = sphi 0, %s17
    %s20 = sphi 0, %s18
    %s28 = sphi 0, %s28
    %s30 = sphi 0, %s28
    %s31 = sphi 0, %s30
    %s45 = sphi 0, %s31
    %s53 = sphi 0, %s55
    %s56 = sphi 0, %s53
    %s57 = sphi 0, %s56
    %s73 = sphi 0, %s57
    %s81 = sphi 0, %s83
    %s84 = sphi 0, %s81
    %s85 = sphi 0, %s84
    %s101 = sphi 0, %s85
  $region4: #{lpips.11} parent=0 // loop_header_branch
    %11 = sbr.rel (%p9) target = $region8
  $region5: #{lpips.11} parent=0 // loop_body
    %s13 = ssub.s32 %s8, 1
    %s14 = ssub.s32 %s8, 2
    %s21 = sadd.s32 1, %s16
    %p22 = scmp.ge.s32.totalorder %s21, 1
    %s23 = scalar_select %p22, 0, %s21
    %s24 = sadd.s32 1, %s15
    %s25 = scalar_select %p22, %s24, %s15
    %p26 = scmp.ge.s32.totalorder %s25, 2
    %s27 = scalar_select %p26, 0, %s25
    %s29 = sadd.s32 %s28, 1
    %p32 = scmp.eq.s32.totalorder %s8, 1
    %p33 = scmp.ne.s32.totalorder %s28, %s30
    %p34 = scmp.eq.s32.totalorder %s8, 0
    %p35 = por %p33, %p34
    %p36 = scmp.ne.s32.totalorder %s28, %s30
    %p37 = scmp.eq.s32.totalorder %s13, 1
    %p38 = por %p36, %p37
    %p39 = scmp.ne.s32.totalorder %s30, %s31
    %p40 = scmp.eq.s32.totalorder %s13, 0
    %p41 = por %p39, %p40
    %p42 = scmp.ne.s32.totalorder %s30, %s31
    %p43 = scmp.eq.s32.totalorder %s14, 1
    %p44 = por %p42, %p43
    %p46 = scmp.ne.s32.totalorder %s31, %s45
    %p47 = scmp.eq.s32.totalorder %s14, 0
    %p48 = por %p46, %p47
    %s49 = ssub.s32 %s15, %s27
    %s50 = ssub.s32 %s16, %s23
    %s51 = sor.u32 %s49, %s50
    %p52 = scmp.eq.s32.totalorder %s51, 0
    %s54 = sadd.s32 %s53, 1
    %s55 = scalar_select %p52, %s53, %s54
    %p58 = pneg %p52
    %p59 = scmp.eq.s32.totalorder %s8, 1
    %p60 = por %p58, %p59
    %p61 = scmp.ne.s32.totalorder %s53, %s56
    %p62 = scmp.eq.s32.totalorder %s8, 0
    %p63 = por %p61, %p62
    %p64 = scmp.ne.s32.totalorder %s53, %s56
    %p65 = scmp.eq.s32.totalorder %s13, 1
    %p66 = por %p64, %p65
    %p67 = scmp.ne.s32.totalorder %s56, %s57
    %p68 = scmp.eq.s32.totalorder %s13, 0
    %p69 = por %p67, %p68
    %p70 = scmp.ne.s32.totalorder %s56, %s57
    %p71 = scmp.eq.s32.totalorder %s14, 1
    %p72 = por %p70, %p71
    %p74 = scmp.ne.s32.totalorder %s57, %s73
    %p75 = scmp.eq.s32.totalorder %s14, 0
    %p76 = por %p74, %p75
    %s77 = ssub.s32 %s15, %s27
    %s78 = ssub.s32 %s16, %s23
    %s79 = sor.u32 %s77, %s78
    %p80 = scmp.eq.s32.totalorder %s79, 0
    %s82 = sadd.s32 %s81, 1
    %s83 = scalar_select %p80, %s81, %s82
    %p86 = pneg %p80
    %p87 = scmp.eq.s32.totalorder %s8, 1
    %p88 = por %p86, %p87
    %p89 = scmp.ne.s32.totalorder %s81, %s84
    %p90 = scmp.eq.s32.totalorder %s8, 0
    %p91 = por %p89, %p90
    %p92 = scmp.ne.s32.totalorder %s81, %s84
    %p93 = scmp.eq.s32.totalorder %s13, 1
    %p94 = por %p92, %p93
    %p95 = scmp.ne.s32.totalorder %s84, %s85
    %p96 = scmp.eq.s32.totalorder %s13, 0
    %p97 = por %p95, %p96
    %p98 = scmp.ne.s32.totalorder %s84, %s85
    %p99 = scmp.eq.s32.totalorder %s14, 1
    %p100 = por %p98, %p99
    %p102 = scmp.ne.s32.totalorder %s85, %s101
    %p103 = scmp.eq.s32.totalorder %s14, 0
    %p104 = por %p102, %p103
    %p105 = scmp.le.s32.totalorder 1, %s8
    %p106 = scmp.lt.s32.totalorder %s8, 3
    %p107 = pnand %p105, %p106
    %p108 = pneg %p107
    // Predicated region
    $region9: #{lpips.11} parent=5 // pred_check
      _
    $region10: #{lpips.11} parent=5 // pred_check_branch
      %110 = sbr.rel (%p107) target = $region12
    $region11: #{lpips.11} parent=5 // pred_region
      %s111 = ssub.s32 %s8, 1
      // Predicated region
      $region13: #{lpips.11} parent=11 // pred_check
        %p112 = pneg %p41
      $region14: #{lpips.11} parent=11 // pred_check_branch
        %114 = sbr.rel (%p112) target = $region16
      $region15: #{lpips.11} parent=11 // pred_region
        _
      $region16: #{lpips.11} parent=11 // pred_fallthru
        _
    $region12: #{lpips.11} parent=5 // pred_fallthru
      _
    %p115 = scmp.lt.s32.totalorder %s8, 2
    // Predicated region
    $region17: #{lpips.11} parent=5 // pred_check
      %p116 = pneg %p115
    $region18: #{lpips.11} parent=5 // pred_check_branch
      %118 = sbr.rel (%p116) target = $region20
    $region19: #{lpips.11} parent=5 // pred_region
      // Predicated region
      $region21: #{lpips.11} parent=19 // pred_check
        %p119 = pneg %p63
      $region22: #{lpips.11} parent=19 // pred_check_branch
        %121 = sbr.rel (%p119) target = $region24
      $region23: #{lpips.11} parent=19 // pred_region
        %p122 = scmp.lt.s32.totalorder %s15, 1
        %s123 = scalar_select %p122, %s15, 1
        %p124 = scmp.lt.s32.totalorder %s16, 0
        %s125 = scalar_select %p124, %s16, 0
        %s126 = smul.addr %s123, 73
        %s127 = sadd.s32 %s125, %s126
        %s128 = smul.addr %s127, 4
        %s129 = scalar_lea.vmem %s1, %s128
      $region24: #{lpips.11} parent=19 // pred_fallthru
        _
    $region20: #{lpips.11} parent=5 // pred_fallthru
      _
    %p130 = scmp.le.s32.totalorder 1, %s8
    %p131 = scmp.lt.s32.totalorder %s8, 3
    %p132 = pnand %p130, %p131
    %p133 = pneg %p132
    // Predicated region
    $region25: #{lpips.11} parent=5 // pred_check
      _
    $region26: #{lpips.11} parent=5 // pred_check_branch
      %135 = sbr.rel (%p132) target = $region28
    $region27: #{lpips.11} parent=5 // pred_region
      %s136 = ssub.s32 %s8, 1
      %p137 = pneg %p41
      %p138 = pneg %p38
      %p139 = scmp.lt.s32.totalorder %s17, 1
      %s140 = scalar_select %p139, %s17, 1
      %p141 = scmp.lt.s32.totalorder %s18, 0
      %s142 = scalar_select %p141, %s18, 0
      %s143 = smul.addr %s140, 73
      %s144 = sadd.s32 %s142, %s143
      %s145 = smul.addr %s144, 4
      %s146 = scalar_lea.vmem %s1, %s145
      %p147 = pneg %p69
      %p148 = pneg %p66
      %p149 = pneg %p97
      %p150 = pneg %p94
      %p151 = scmp.lt.s32.totalorder %s17, 1
      %s152 = scalar_select %p151, %s17, 1
      %p153 = scmp.lt.s32.totalorder %s18, 0
      %s154 = scalar_select %p153, %s18, 0
      %s155 = smul.addr %s152, 16
      %s156 = sadd.s32 %s154, %s155
      %s157 = smul.addr %s156, 4
      %s158 = scalar_lea.vmem %s2, %s157
      %p159 = scmp.lt.s32.totalorder %s17, 1
      %s160 = scalar_select %p159, %s17, 1
      %p161 = scmp.lt.s32.totalorder %s18, 0
      %s162 = scalar_select %p161, %s18, 0
      %s163 = smul.addr %s160, 73
      %s164 = sadd.s32 %s162, %s163
      %s165 = smul.addr %s164, 4
      %s166 = scalar_lea.vmem %s1, %s165
      %p167 = scmp.lt.s32.totalorder %s17, 1
      %s168 = scalar_select %p167, %s17, 1
      %p169 = scmp.lt.s32.totalorder %s18, 0
      %s170 = scalar_select %p169, %s18, 0
      %s171 = smul.addr %s168, 16
      %s172 = sadd.s32 %s170, %s171
      %s173 = smul.addr %s172, 4
      %s174 = scalar_lea.vmem %s2, %s173
      %v176 = vld [vmem:[%s0] sm:$0xff]
      %v177 = vld [vmem:[%s0 + $0x8] sm:$0xff]
      %v178 = vld [vmem:[%s0 + $0x10] sm:$0xf]
      %v179 = vld [vmem:[%s0 + $0x14] sm:$0xff]
      %v180 = vld [vmem:[%s0 + $0x1c] sm:$0xff]
      %v181 = vld [vmem:[%s0 + $0x24] sm:$0xf]
      %v182 = vld [vmem:[%s0 + $0x28] sm:$0xff]
      %v183 = vld [vmem:[%s0 + $0x30] sm:$0xff]
      %v184 = vld [vmem:[%s0 + $0x38] sm:$0xf]
      %v185 = vld [vmem:[%s0 + $0x3c] sm:$0xff]
      %v186 = vld [vmem:[%s0 + $0x44] sm:$0xff]
      %v187 = vld [vmem:[%s0 + $0x4c] sm:$0xf]
      %v188 = vld [vmem:[%s0 + $0x50] sm:$0xff]
      %v189 = vld [vmem:[%s0 + $0x58] sm:$0xff]
      %v190 = vld [vmem:[%s0 + $0x60] sm:$0xf]
      %v191 = vld [vmem:[%s0 + $0x64] sm:$0xff]
      %v192 = vld [vmem:[%s0 + $0x6c] sm:$0xff]
      %v193 = vld [vmem:[%s0 + $0x74] sm:$0xf]
      %v194 = vld [vmem:[%s0 + $0x78] sm:$0xff]
      %v195 = vld [vmem:[%s0 + $0x80] sm:$0xff]
      %v196 = vld [vmem:[%s0 + $0x88] sm:$0xf]
      %v197 = vld [vmem:[%s0 + $0x8c] sm:$0xff]
      %v198 = vld [vmem:[%s0 + $0x94] sm:$0xff]
      %v199 = vld [vmem:[%s0 + $0x9c] sm:$0xf]
      %v200 = vld [vmem:[%s0 + $0xa0] sm:$0xff]
      %v201 = vld [vmem:[%s0 + $0xa8] sm:$0xff]
      %v202 = vld [vmem:[%s0 + $0xb0] sm:$0xf]
      %v203 = vld [vmem:[%s0 + $0xb4] sm:$0xff]
      %v204 = vld [vmem:[%s0 + $0xbc] sm:$0xff]
      %v205 = vld [vmem:[%s0 + $0xc4] sm:$0xf]
      %v206 = vld [vmem:[%s0 + $0xc8] sm:$0xff]
      %v207 = vld [vmem:[%s0 + $0xd0] sm:$0xff]
      %v208 = vld [vmem:[%s0 + $0xd8] sm:$0xf]
      %v209 = vld [vmem:[%s0 + $0xdc] sm:$0xff]
      %v210 = vld [vmem:[%s0 + $0xe4] sm:$0xff]
      %v211 = vld [vmem:[%s0 + $0xec] sm:$0xf]
      %v212 = vld [vmem:[%s0 + $0xf0] sm:$0xff]
      %v213 = vld [vmem:[%s0 + $0xf8] sm:$0xff]
      %v214 = vld [vmem:[%s0 + $0x100] sm:$0xf]
      %v215 = vld [vmem:[%s0 + $0x104] sm:$0xff]
      %v216 = vld [vmem:[%s0 + $0x10c] sm:$0xff]
      %v217 = vld [vmem:[%s0 + $0x114] sm:$0xf]
      %v218 = vld [vmem:[%s0 + $0x118] sm:$0xff]
      %v219 = vld [vmem:[%s0 + $0x120] sm:$0xff]
      %v220 = vld [vmem:[%s0 + $0x128] sm:$0xf]
      %v221 = vld [vmem:[%s0 + $0x12c] sm:$0xff]
      %v222 = vld [vmem:[%s0 + $0x134] sm:$0xff]
      %v223 = vld [vmem:[%s0 + $0x13c] sm:$0xf]
      %v224 = vld [vmem:[%s166] sm:$0xf]
      %v225 = vld [vmem:[%s166 + $0x4] sm:$0xf]
      %v226 = vld [vmem:[%s166 + $0x8] sm:$0xf]
      %v227 = vld [vmem:[%s166 + $0xc] sm:$0xf]
      %v228 = vld [vmem:[%s166 + $0x10] sm:$0xf]
      %v229 = vld [vmem:[%s166 + $0x14] sm:$0xf]
      %v230 = vld [vmem:[%s166 + $0x18] sm:$0xf]
      %v231 = vld [vmem:[%s166 + $0x1c] sm:$0xf]
      %v232 = vld [vmem:[%s166 + $0x20] sm:$0xf]
      %v233 = vld [vmem:[%s166 + $0x24] sm:$0xf]
      %v234 = vld [vmem:[%s166 + $0x28] sm:$0xf]
      %v235 = vld [vmem:[%s166 + $0x2c] sm:$0xf]
      %v236 = vld [vmem:[%s166 + $0x30] sm:$0xf]
      %v237 = vld [vmem:[%s166 + $0x34] sm:$0xf]
      %v238 = vld [vmem:[%s166 + $0x38] sm:$0xf]
      %v239 = vld [vmem:[%s166 + $0x3c] sm:$0xf]
      %v240 = vld [vmem:[%s166 + $0x40] sm:$0xf]
      %v241 = vld [vmem:[%s166 + $0x44] sm:$0xf]
      %v242 = vld [vmem:[%s166 + $0x48] sm:$0xf]
      %v243 = vld [vmem:[%s166 + $0x4c] sm:$0xf]
      %v244 = vld [vmem:[%s166 + $0x50] sm:$0xf]
      %v245 = vld [vmem:[%s166 + $0x54] sm:$0xf]
      %v246 = vld [vmem:[%s166 + $0x58] sm:$0xf]
      %v247 = vld [vmem:[%s166 + $0x5c] sm:$0xf]
      %v248 = vld [vmem:[%s166 + $0x60] sm:$0xf]
      %v249 = vld [vmem:[%s166 + $0x64] sm:$0xf]
      %v250 = vld [vmem:[%s166 + $0x68] sm:$0xf]
      %v251 = vld [vmem:[%s166 + $0x6c] sm:$0xf]
      %v252 = vld [vmem:[%s166 + $0x70] sm:$0xf]
      %v253 = vld [vmem:[%s166 + $0x74] sm:$0xf]
      %v254 = vld [vmem:[%s166 + $0x78] sm:$0xf]
      %v255 = vld [vmem:[%s166 + $0x7c] sm:$0xf]
      %v256 = vld [vmem:[%s166 + $0x80] sm:$0xf]
      %v257 = vld [vmem:[%s166 + $0x84] sm:$0xf]
      %v258 = vld [vmem:[%s166 + $0x88] sm:$0xf]
      %v259 = vld [vmem:[%s166 + $0x8c] sm:$0xf]
      %v260 = vld [vmem:[%s166 + $0x90] sm:$0xf]
      %v261 = vld [vmem:[%s166 + $0x94] sm:$0xf]
      %v262 = vld [vmem:[%s166 + $0x98] sm:$0xf]
      %v263 = vld [vmem:[%s166 + $0x9c] sm:$0xf]
      %v264 = vld [vmem:[%s166 + $0xa0] sm:$0xf]
      %v265 = vld [vmem:[%s166 + $0xa4] sm:$0xf]
      %v266 = vld [vmem:[%s166 + $0xa8] sm:$0xf]
      %v267 = vld [vmem:[%s166 + $0xac] sm:$0xf]
      %v268 = vld [vmem:[%s166 + $0xb0] sm:$0xf]
      %v269 = vld [vmem:[%s166 + $0xb4] sm:$0xf]
      %v270 = vld [vmem:[%s166 + $0xb8] sm:$0xf]
      %v271 = vld [vmem:[%s166 + $0xbc] sm:$0xf]
      %v272 = vld [vmem:[%s166 + $0xc0] sm:$0xf]
      %v273 = vld [vmem:[%s166 + $0xc4] sm:$0xf]
      %v274 = vld [vmem:[%s166 + $0xc8] sm:$0xf]
      %v275 = vld [vmem:[%s166 + $0xcc] sm:$0xf]
      %v276 = vld [vmem:[%s166 + $0xd0] sm:$0xf]
      %v277 = vld [vmem:[%s166 + $0xd4] sm:$0xf]
      %v278 = vld [vmem:[%s166 + $0xd8] sm:$0xf]
      %v279 = vld [vmem:[%s166 + $0xdc] sm:$0xf]
      %v280 = vld [vmem:[%s166 + $0xe0] sm:$0xf]
      %v281 = vld [vmem:[%s166 + $0xe4] sm:$0xf]
      %v282 = vld [vmem:[%s166 + $0xe8] sm:$0xf]
      %v283 = vld [vmem:[%s166 + $0xec] sm:$0xf]
      %v284 = vld [vmem:[%s166 + $0xf0] sm:$0xf]
      %v285 = vld [vmem:[%s166 + $0xf4] sm:$0xf]
      %v286 = vld [vmem:[%s166 + $0xf8] sm:$0xf]
      %v287 = vld [vmem:[%s166 + $0xfc] sm:$0xf]
      %v288 = vld [vmem:[%s166 + $0x100] sm:$0xf]
      %v289 = vld [vmem:[%s166 + $0x104] sm:$0xf]
      %v290 = vld [vmem:[%s166 + $0x108] sm:$0xf]
      %v291 = vld [vmem:[%s166 + $0x10c] sm:$0xf]
      %v292 = vld [vmem:[%s166 + $0x110] sm:$0xf]
      %v293 = vld [vmem:[%s166 + $0x114] sm:$0xf]
      %v294 = vld [vmem:[%s166 + $0x118] sm:$0xf]
      %v295 = vld [vmem:[%s166 + $0x11c] sm:$0xf]
      %v296 = vld [vmem:[%s166 + $0x120] sm:$0x1]
      %v345 = vunpack.c.l.b16 %v176
      %v346 = vunpack.c.h.b16 %v176
      %v347 = vunpack.c.l.b16 %v177
      %v348 = vunpack.c.h.b16 %v177
      %v349 = vunpack.c.l.b16 %v178
      %v350 = vunpack.c.l.b16 %v179
      %v351 = vunpack.c.h.b16 %v179
      %v352 = vunpack.c.l.b16 %v180
      %v353 = vunpack.c.h.b16 %v180
      %v354 = vunpack.c.l.b16 %v181
      %v355 = vunpack.c.l.b16 %v182
      %v356 = vunpack.c.h.b16 %v182
      %v357 = vunpack.c.l.b16 %v183
      %v358 = vunpack.c.h.b16 %v183
      %v359 = vunpack.c.l.b16 %v184
      %v360 = vunpack.c.l.b16 %v185
      %v361 = vunpack.c.h.b16 %v185
      %v362 = vunpack.c.l.b16 %v186
      %v363 = vunpack.c.h.b16 %v186
      %v364 = vunpack.c.l.b16 %v187
      %v365 = vunpack.c.l.b16 %v188
      %v366 = vunpack.c.h.b16 %v188
      %v367 = vunpack.c.l.b16 %v189
      %v368 = vunpack.c.h.b16 %v189
      %v369 = vunpack.c.l.b16 %v190
      %v370 = vunpack.c.l.b16 %v191
      %v371 = vunpack.c.h.b16 %v191
      %v372 = vunpack.c.l.b16 %v192
      %v373 = vunpack.c.h.b16 %v192
      %v374 = vunpack.c.l.b16 %v193
      %v375 = vunpack.c.l.b16 %v194
      %v376 = vunpack.c.h.b16 %v194
      %v377 = vunpack.c.l.b16 %v195
      %v378 = vunpack.c.h.b16 %v195
      %v379 = vunpack.c.l.b16 %v196
      %v380 = vunpack.c.l.b16 %v197
      %v381 = vunpack.c.h.b16 %v197
      %v382 = vunpack.c.l.b16 %v198
      %v383 = vunpack.c.h.b16 %v198
      %v384 = vunpack.c.l.b16 %v199
      %v385 = vunpack.c.l.b16 %v200
      %v386 = vunpack.c.h.b16 %v200
      %v387 = vunpack.c.l.b16 %v201
      %v388 = vunpack.c.h.b16 %v201
      %v389 = vunpack.c.l.b16 %v202
      %v390 = vunpack.c.l.b16 %v203
      %v391 = vunpack.c.h.b16 %v203
      %v392 = vunpack.c.l.b16 %v204
      %v393 = vunpack.c.h.b16 %v204
      %v394 = vunpack.c.l.b16 %v205
      %v395 = vunpack.c.l.b16 %v206
      %v396 = vunpack.c.h.b16 %v206
      %v397 = vunpack.c.l.b16 %v207
      %v398 = vunpack.c.h.b16 %v207
      %v399 = vunpack.c.l.b16 %v208
      %v400 = vunpack.c.l.b16 %v209
      %v401 = vunpack.c.h.b16 %v209
      %v402 = vunpack.c.l.b16 %v210
      %v403 = vunpack.c.h.b16 %v210
      %v404 = vunpack.c.l.b16 %v211
      %v405 = vunpack.c.l.b16 %v212
      %v406 = vunpack.c.h.b16 %v212
      %v407 = vunpack.c.l.b16 %v213
      %v408 = vunpack.c.h.b16 %v213
      %v409 = vunpack.c.l.b16 %v214
      %v410 = vunpack.c.l.b16 %v215
      %v411 = vunpack.c.h.b16 %v215
      %v412 = vunpack.c.l.b16 %v216
      %v413 = vunpack.c.h.b16 %v216
      %v414 = vunpack.c.l.b16 %v217
      %v415 = vunpack.c.l.b16 %v218
      %v416 = vunpack.c.h.b16 %v218
      %v417 = vunpack.c.l.b16 %v219
      %v418 = vunpack.c.h.b16 %v219
      %v419 = vunpack.c.l.b16 %v220
      %v420 = vunpack.c.l.b16 %v221
      %v421 = vunpack.c.h.b16 %v221
      %v422 = vunpack.c.l.b16 %v222
      %v423 = vunpack.c.h.b16 %v222
      %v424 = vunpack.c.l.b16 %v223
      %v425 = vpack.c.b16 %v350, %v345
      %v426 = vpack.c.b16 %v351, %v346
      %v427 = vpack.c.b16 %v352, %v347
      %v428 = vpack.c.b16 %v353, %v348
      %v429 = vpack.c.b16 %v354, %v349
      %v430 = vpack.c.b16 %v360, %v355
      %v431 = vpack.c.b16 %v361, %v356
      %v432 = vpack.c.b16 %v362, %v357
      %v433 = vpack.c.b16 %v363, %v358
      %v434 = vpack.c.b16 %v364, %v359
      %v435 = vpack.c.b16 %v370, %v365
      %v436 = vpack.c.b16 %v371, %v366
      %v437 = vpack.c.b16 %v372, %v367
      %v438 = vpack.c.b16 %v373, %v368
      %v439 = vpack.c.b16 %v374, %v369
      %v440 = vpack.c.b16 %v380, %v375
      %v441 = vpack.c.b16 %v381, %v376
      %v442 = vpack.c.b16 %v382, %v377
      %v443 = vpack.c.b16 %v383, %v378
      %v444 = vpack.c.b16 %v384, %v379
      %v445 = vpack.c.b16 %v390, %v385
      %v446 = vpack.c.b16 %v391, %v386
      %v447 = vpack.c.b16 %v392, %v387
      %v448 = vpack.c.b16 %v393, %v388
      %v449 = vpack.c.b16 %v394, %v389
      %v450 = vpack.c.b16 %v400, %v395
      %v451 = vpack.c.b16 %v401, %v396
      %v452 = vpack.c.b16 %v402, %v397
      %v453 = vpack.c.b16 %v403, %v398
      %v454 = vpack.c.b16 %v404, %v399
      %v455 = vpack.c.b16 %v410, %v405
      %v456 = vpack.c.b16 %v411, %v406
      %v457 = vpack.c.b16 %v412, %v407
      %v458 = vpack.c.b16 %v413, %v408
      %v459 = vpack.c.b16 %v414, %v409
      %v460 = vpack.c.b16 %v420, %v415
      %v461 = vpack.c.b16 %v421, %v416
      %v462 = vpack.c.b16 %v422, %v417
      %v463 = vpack.c.b16 %v423, %v418
      %v464 = vpack.c.b16 %v424, %v419
      %v570 = vunpack.c.l.b16 %v224
      %v571 = vunpack.c.l.b16 %v225
      %v572 = vunpack.c.l.b16 %v226
      %v573 = vunpack.c.l.b16 %v227
      %v574 = vunpack.c.l.b16 %v228
      %v575 = vunpack.c.l.b16 %v229
      %v576 = vunpack.c.l.b16 %v230
      %v577 = vunpack.c.l.b16 %v231
      %v578 = vunpack.c.l.b16 %v232
      %v579 = vunpack.c.l.b16 %v233
      %v580 = vunpack.c.l.b16 %v234
      %v581 = vunpack.c.l.b16 %v235
      %v582 = vunpack.c.l.b16 %v236
      %v583 = vunpack.c.l.b16 %v237
      %v584 = vunpack.c.l.b16 %v238
      %v585 = vunpack.c.l.b16 %v239
      %v586 = vunpack.c.l.b16 %v240
      %v587 = vunpack.c.l.b16 %v241
      %v588 = vunpack.c.l.b16 %v242
      %v589 = vunpack.c.l.b16 %v243
      %v590 = vunpack.c.l.b16 %v244
      %v591 = vunpack.c.l.b16 %v245
      %v592 = vunpack.c.l.b16 %v246
      %v593 = vunpack.c.l.b16 %v247
      %v594 = vunpack.c.l.b16 %v248
      %v595 = vunpack.c.l.b16 %v249
      %v596 = vunpack.c.l.b16 %v250
      %v597 = vunpack.c.l.b16 %v251
      %v598 = vunpack.c.l.b16 %v252
      %v599 = vunpack.c.l.b16 %v253
      %v600 = vunpack.c.l.b16 %v254
      %v601 = vunpack.c.l.b16 %v255
      %v602 = vunpack.c.l.b16 %v256
      %v603 = vunpack.c.l.b16 %v257
      %v604 = vunpack.c.l.b16 %v258
      %v605 = vunpack.c.l.b16 %v259
      %v606 = vunpack.c.l.b16 %v260
      %v607 = vunpack.c.l.b16 %v261
      %v608 = vunpack.c.l.b16 %v262
      %v609 = vunpack.c.l.b16 %v263
      %v610 = vunpack.c.l.b16 %v264
      %v611 = vunpack.c.l.b16 %v265
      %v612 = vunpack.c.l.b16 %v266
      %v613 = vunpack.c.l.b16 %v267
      %v614 = vunpack.c.l.b16 %v268
      %v615 = vunpack.c.l.b16 %v269
      %v616 = vunpack.c.l.b16 %v270
      %v617 = vunpack.c.l.b16 %v271
      %v618 = vunpack.c.l.b16 %v272
      %v619 = vunpack.c.l.b16 %v273
      %v620 = vunpack.c.l.b16 %v274
      %v621 = vunpack.c.l.b16 %v275
      %v622 = vunpack.c.l.b16 %v276
      %v623 = vunpack.c.l.b16 %v277
      %v624 = vunpack.c.l.b16 %v278
      %v625 = vunpack.c.l.b16 %v279
      %v626 = vunpack.c.l.b16 %v280
      %v627 = vunpack.c.l.b16 %v281
      %v628 = vunpack.c.l.b16 %v282
      %v629 = vunpack.c.l.b16 %v283
      %v630 = vunpack.c.l.b16 %v284
      %v631 = vunpack.c.l.b16 %v285
      %v632 = vunpack.c.l.b16 %v286
      %v633 = vunpack.c.l.b16 %v287
      %v634 = vunpack.c.l.b16 %v288
      %v635 = vunpack.c.l.b16 %v289
      %v636 = vunpack.c.l.b16 %v290
      %v637 = vunpack.c.l.b16 %v291
      %v638 = vunpack.c.l.b16 %v292
      %v639 = vunpack.c.l.b16 %v293
      %v640 = vunpack.c.l.b16 %v294
      %v641 = vunpack.c.l.b16 %v295
      %v642 = vunpack.c.l.b16 %v296
      %v643 = vpack.c.b16 %v571, %v570
      %v644 = vpack.c.b16 %v573, %v572
      %v645 = vpack.c.b16 %v575, %v574
      %v646 = vpack.c.b16 %v577, %v576
      %v647 = vpack.c.b16 %v579, %v578
      %v648 = vpack.c.b16 %v581, %v580
      %v649 = vpack.c.b16 %v583, %v582
      %v650 = vpack.c.b16 %v585, %v584
      %v651 = vpack.c.b16 %v587, %v586
      %v652 = vpack.c.b16 %v589, %v588
      %v653 = vpack.c.b16 %v591, %v590
      %v654 = vpack.c.b16 %v593, %v592
      %v655 = vpack.c.b16 %v595, %v594
      %v656 = vpack.c.b16 %v597, %v596
      %v657 = vpack.c.b16 %v599, %v598
      %v658 = vpack.c.b16 %v601, %v600
      %v659 = vpack.c.b16 %v603, %v602
      %v660 = vpack.c.b16 %v605, %v604
      %v661 = vpack.c.b16 %v607, %v606
      %v662 = vpack.c.b16 %v609, %v608
      %v663 = vpack.c.b16 %v611, %v610
      %v664 = vpack.c.b16 %v613, %v612
      %v665 = vpack.c.b16 %v615, %v614
      %v666 = vpack.c.b16 %v617, %v616
      %v667 = vpack.c.b16 %v619, %v618
      %v668 = vpack.c.b16 %v621, %v620
      %v669 = vpack.c.b16 %v623, %v622
      %v670 = vpack.c.b16 %v625, %v624
      %v671 = vpack.c.b16 %v627, %v626
      %v672 = vpack.c.b16 %v629, %v628
      %v673 = vpack.c.b16 %v631, %v630
      %v674 = vpack.c.b16 %v633, %v632
      %v675 = vpack.c.b16 %v635, %v634
      %v676 = vpack.c.b16 %v637, %v636
      %v677 = vpack.c.b16 %v639, %v638
      %v678 = vpack.c.b16 %v641, %v640
      %v679 = vpack.c.b16 %v642, %v642
      %vm716 = vcmask 531456
      %v718 = vsel %vm716, %v429, 0
      %v721 = vsel %vm716, %v434, 0
      %v724 = vsel %vm716, %v439, 0
      %v727 = vsel %vm716, %v444, 0
      %v730 = vsel %vm716, %v449, 0
      %v733 = vsel %vm716, %v454, 0
      %v736 = vsel %vm716, %v459, 0
      %v739 = vsel %vm716, %v464, 0
      %vm741 = vcmask 1040384
      %v742 = vsel 0, 4294967295, 65535
      %v743 = vsel %vm741, %v742, 0
      %v745 = vand.u32 %v679, %v743
      %747 = vmatprep.subr.bf16.mxu0 0
      %748 = vmatpush1.bf16.msra.mxu0 %v650
      %749 = vmatprep.subr.bf16.mxu0 0
      %750 = vmatpush1.bf16.msra.mxu0 %v649
      %751 = vmatprep.subr.bf16.mxu0 0
      %752 = vmatpush1.bf16.msra.mxu0 %v648
      %753 = vmatprep.subr.bf16.mxu0 0
      %754 = vmatpush1.bf16.msra.mxu0 %v647
      %755 = vmatprep.subr.bf16.mxu0 0
      %756 = vmatpush1.bf16.msra.mxu0 %v646
      %757 = vmatprep.subr.bf16.mxu0 0
      %758 = vmatpush1.bf16.msra.mxu0 %v645
      %759 = vmatprep.subr.bf16.mxu0 0
      %760 = vmatpush1.bf16.msra.mxu0 %v644
      %761 = vmatprep.subr.bf16.mxu0 0
      %762 = vmatpush1.bf16.msra.mxu0 %v643
      %763 = vmatprep.subr.bf16.mxu0 0
      %764 = vmatpush2.bf16.msra.mxu0 %v658
      %765 = vmatprep.subr.bf16.mxu0 0
      %766 = vmatpush2.bf16.msra.mxu0 %v657
      %767 = vmatprep.subr.bf16.mxu0 0
      %768 = vmatpush2.bf16.msra.mxu0 %v656
      %769 = vmatprep.subr.bf16.mxu0 0
      %770 = vmatpush2.bf16.msra.mxu0 %v655
      %771 = vmatprep.subr.bf16.mxu0 0
      %772 = vmatpush2.bf16.msra.mxu0 %v654
      %773 = vmatprep.subr.bf16.mxu0 0
      %774 = vmatpush2.bf16.msra.mxu0 %v653
      %775 = vmatprep.subr.bf16.mxu0 0
      %776 = vmatpush2.bf16.msra.mxu0 %v652
      %777 = vmatprep.subr.bf16.mxu0 0
      %778 = vmatpush2.bf16.msra.mxu0 %v651
      %779 = vmatprep.mubr.bf16.mxu0 %v426
      %780 = vmatmul.mubr.bf16.gmra.mxu0 %v425
      %v781 = vpop.f32.mrf.mxu0
      %v782 = vadd.f32 0.0, %v781
      %v783 = vpop.f32.mrf.mxu0
      %v784 = vpop.f32.mrf.mxu0
      %v785 = vadd.f32 0.0, %v784
      %v786 = vpop.f32.mrf.mxu0
      %787 = vmatprep.mubr.bf16.mxu0 %v431
      %788 = vmatmul.mubr.bf16.gmra.mxu0 %v430
      %v789 = vpop.f32.mrf.mxu0
      %v790 = vadd.f32 0.0, %v789
      %v791 = vpop.f32.mrf.mxu0
      %v792 = vpop.f32.mrf.mxu0
      %v793 = vadd.f32 0.0, %v792
      %v794 = vpop.f32.mrf.mxu0
      %795 = vmatprep.mubr.bf16.mxu0 %v436
      %796 = vmatmul.mubr.bf16.gmra.mxu0 %v435
      %v797 = vpop.f32.mrf.mxu0
      %v798 = vadd.f32 0.0, %v797
      %v799 = vpop.f32.mrf.mxu0
      %v800 = vpop.f32.mrf.mxu0
      %v801 = vadd.f32 0.0, %v800
      %v802 = vpop.f32.mrf.mxu0
      %803 = vmatprep.mubr.bf16.mxu0 %v441
      %804 = vmatmul.mubr.bf16.gmra.mxu0 %v440
      %v805 = vpop.f32.mrf.mxu0
      %v806 = vadd.f32 0.0, %v805
      %v807 = vpop.f32.mrf.mxu0
      %v808 = vpop.f32.mrf.mxu0
      %v809 = vadd.f32 0.0, %v808
      %v810 = vpop.f32.mrf.mxu0
      %811 = vmatprep.mubr.bf16.mxu0 %v446
      %812 = vmatmul.mubr.bf16.gmra.mxu0 %v445
      %v813 = vpop.f32.mrf.mxu0
      %v814 = vadd.f32 0.0, %v813
      %v815 = vpop.f32.mrf.mxu0
      %v816 = vpop.f32.mrf.mxu0
      %v817 = vadd.f32 0.0, %v816
      %v818 = vpop.f32.mrf.mxu0
      %819 = vmatprep.mubr.bf16.mxu0 %v451
      %820 = vmatmul.mubr.bf16.gmra.mxu0 %v450
      %v821 = vpop.f32.mrf.mxu0
      %v822 = vadd.f32 0.0, %v821
      %v823 = vpop.f32.mrf.mxu0
      %v824 = vpop.f32.mrf.mxu0
      %v825 = vadd.f32 0.0, %v824
      %v826 = vpop.f32.mrf.mxu0
      %827 = vmatprep.mubr.bf16.mxu0 %v456
      %828 = vmatmul.mubr.bf16.gmra.mxu0 %v455
      %v829 = vpop.f32.mrf.mxu0
      %v830 = vadd.f32 0.0, %v829
      %v831 = vpop.f32.mrf.mxu0
      %v832 = vpop.f32.mrf.mxu0
      %v833 = vadd.f32 0.0, %v832
      %v834 = vpop.f32.mrf.mxu0
      %835 = vmatprep.mubr.bf16.mxu0 %v461
      %836 = vmatmul.mubr.bf16.gmra.mxu0 %v460
      %v837 = vpop.f32.mrf.mxu0
      %v838 = vadd.f32 0.0, %v837
      %v839 = vpop.f32.mrf.mxu0
      %v840 = vpop.f32.mrf.mxu0
      %v841 = vadd.f32 0.0, %v840
      %v842 = vpop.f32.mrf.mxu0
      %843 = vdwg.mxu0
      %844 = vmatprep.subr.bf16.mxu0 0
      %845 = vmatpush1.bf16.msra.mxu0 %v666
      %846 = vmatprep.subr.bf16.mxu0 0
      %847 = vmatpush1.bf16.msra.mxu0 %v665
      %848 = vmatprep.subr.bf16.mxu0 0
      %849 = vmatpush1.bf16.msra.mxu0 %v664
      %850 = vmatprep.subr.bf16.mxu0 0
      %851 = vmatpush1.bf16.msra.mxu0 %v663
      %852 = vmatprep.subr.bf16.mxu0 0
      %853 = vmatpush1.bf16.msra.mxu0 %v662
      %854 = vmatprep.subr.bf16.mxu0 0
      %855 = vmatpush1.bf16.msra.mxu0 %v661
      %856 = vmatprep.subr.bf16.mxu0 0
      %857 = vmatpush1.bf16.msra.mxu0 %v660
      %858 = vmatprep.subr.bf16.mxu0 0
      %859 = vmatpush1.bf16.msra.mxu0 %v659
      %860 = vmatprep.subr.bf16.mxu0 0
      %861 = vmatpush2.bf16.msra.mxu0 %v674
      %862 = vmatprep.subr.bf16.mxu0 0
      %863 = vmatpush2.bf16.msra.mxu0 %v673
      %864 = vmatprep.subr.bf16.mxu0 0
      %865 = vmatpush2.bf16.msra.mxu0 %v672
      %866 = vmatprep.subr.bf16.mxu0 0
      %867 = vmatpush2.bf16.msra.mxu0 %v671
      %868 = vmatprep.subr.bf16.mxu0 0
      %869 = vmatpush2.bf16.msra.mxu0 %v670
      %870 = vmatprep.subr.bf16.mxu0 0
      %871 = vmatpush2.bf16.msra.mxu0 %v669
      %872 = vmatprep.subr.bf16.mxu0 0
      %873 = vmatpush2.bf16.msra.mxu0 %v668
      %874 = vmatprep.subr.bf16.mxu0 0
      %875 = vmatpush2.bf16.msra.mxu0 %v667
      %876 = vmatprep.mubr.bf16.mxu0 %v428
      %877 = vmatmul.mubr.bf16.gmra.mxu0 %v427
      %v878 = vpop.f32.mrf.mxu0
      %v879 = vadd.f32 %v782, %v878
      %v880 = vpop.f32.mrf.mxu0
      %v881 = vpop.f32.mrf.mxu0
      %v882 = vadd.f32 %v785, %v881
      %v883 = vpop.f32.mrf.mxu0
      %884 = vmatprep.mubr.bf16.mxu0 %v433
      %885 = vmatmul.mubr.bf16.gmra.mxu0 %v432
      %v886 = vpop.f32.mrf.mxu0
      %v887 = vadd.f32 %v790, %v886
      %v888 = vpop.f32.mrf.mxu0
      %v889 = vpop.f32.mrf.mxu0
      %v890 = vadd.f32 %v793, %v889
      %v891 = vpop.f32.mrf.mxu0
      %892 = vmatprep.mubr.bf16.mxu0 %v438
      %893 = vmatmul.mubr.bf16.gmra.mxu0 %v437
      %v894 = vpop.f32.mrf.mxu0
      %v895 = vadd.f32 %v798, %v894
      %v896 = vpop.f32.mrf.mxu0
      %v897 = vpop.f32.mrf.mxu0
      %v898 = vadd.f32 %v801, %v897
      %v899 = vpop.f32.mrf.mxu0
      %900 = vmatprep.mubr.bf16.mxu0 %v443
      %901 = vmatmul.mubr.bf16.gmra.mxu0 %v442
      %v902 = vpop.f32.mrf.mxu0
      %v903 = vadd.f32 %v806, %v902
      %v904 = vpop.f32.mrf.mxu0
      %v905 = vpop.f32.mrf.mxu0
      %v906 = vadd.f32 %v809, %v905
      %v907 = vpop.f32.mrf.mxu0
      %908 = vmatprep.mubr.bf16.mxu0 %v448
      %909 = vmatmul.mubr.bf16.gmra.mxu0 %v447
      %v910 = vpop.f32.mrf.mxu0
      %v911 = vadd.f32 %v814, %v910
      %v912 = vpop.f32.mrf.mxu0
      %v913 = vpop.f32.mrf.mxu0
      %v914 = vadd.f32 %v817, %v913
      %v915 = vpop.f32.mrf.mxu0
      %916 = vmatprep.mubr.bf16.mxu0 %v453
      %917 = vmatmul.mubr.bf16.gmra.mxu0 %v452
      %v918 = vpop.f32.mrf.mxu0
      %v919 = vadd.f32 %v822, %v918
      %v920 = vpop.f32.mrf.mxu0
      %v921 = vpop.f32.mrf.mxu0
      %v922 = vadd.f32 %v825, %v921
      %v923 = vpop.f32.mrf.mxu0
      %924 = vmatprep.mubr.bf16.mxu0 %v458
      %925 = vmatmul.mubr.bf16.gmra.mxu0 %v457
      %v926 = vpop.f32.mrf.mxu0
      %v927 = vadd.f32 %v830, %v926
      %v928 = vpop.f32.mrf.mxu0
      %v929 = vpop.f32.mrf.mxu0
      %v930 = vadd.f32 %v833, %v929
      %v931 = vpop.f32.mrf.mxu0
      %932 = vmatprep.mubr.bf16.mxu0 %v463
      %933 = vmatmul.mubr.bf16.gmra.mxu0 %v462
      %v934 = vpop.f32.mrf.mxu0
      %v935 = vadd.f32 %v838, %v934
      %v936 = vpop.f32.mrf.mxu0
      %v937 = vpop.f32.mrf.mxu0
      %v938 = vadd.f32 %v841, %v937
      %v939 = vpop.f32.mrf.mxu0
      %940 = vdwg.mxu0
      %941 = vmatprep.subr.bf16.mxu0 0
      %942 = vmatpush1.bf16.msra.mxu0 0
      %943 = vmatprep.subr.bf16.mxu0 0
      %944 = vmatpush1.bf16.msra.mxu0 0
      %945 = vmatprep.subr.bf16.mxu0 0
      %946 = vmatpush1.bf16.msra.mxu0 0
      %947 = vmatprep.subr.bf16.mxu0 0
      %948 = vmatpush1.bf16.msra.mxu0 %v745
      %949 = vmatprep.subr.bf16.mxu0 0
      %950 = vmatpush1.bf16.msra.mxu0 %v678
      %951 = vmatprep.subr.bf16.mxu0 0
      %952 = vmatpush1.bf16.msra.mxu0 %v677
      %953 = vmatprep.subr.bf16.mxu0 0
      %954 = vmatpush1.bf16.msra.mxu0 %v676
      %955 = vmatprep.subr.bf16.mxu0 0
      %956 = vmatpush1.bf16.msra.mxu0 %v675
      %957 = vmatprep.subr.bf16.mxu0 0
      %958 = vmatpush2.bf16.msra.mxu0 0
      %959 = vmatprep.subr.bf16.mxu0 0
      %960 = vmatpush2.bf16.msra.mxu0 0
      %961 = vmatprep.subr.bf16.mxu0 0
      %962 = vmatpush2.bf16.msra.mxu0 0
      %963 = vmatprep.subr.bf16.mxu0 0
      %964 = vmatpush2.bf16.msra.mxu0 0
      %965 = vmatprep.subr.bf16.mxu0 0
      %966 = vmatpush2.bf16.msra.mxu0 0
      %967 = vmatprep.subr.bf16.mxu0 0
      %968 = vmatpush2.bf16.msra.mxu0 0
      %969 = vmatprep.subr.bf16.mxu0 0
      %970 = vmatpush2.bf16.msra.mxu0 0
      %971 = vmatprep.subr.bf16.mxu0 0
      %972 = vmatpush2.bf16.msra.mxu0 0
      %973 = vmatprep.mubr.bf16.mxu0 0
      %974 = vmatmul.mubr.bf16.gmra.mxu0 %v718
      %v975 = vpop.f32.mrf.mxu0
      %v976 = vadd.f32 %v879, %v975
      %v977 = vpop.f32.mrf.mxu0
      %v978 = vpop.f32.mrf.mxu0
      %v979 = vadd.f32 %v882, %v978
      %v980 = vpop.f32.mrf.mxu0
      %981 = vmatprep.mubr.bf16.mxu0 0
      %982 = vmatmul.mubr.bf16.gmra.mxu0 %v721
      %v983 = vpop.f32.mrf.mxu0
      %v984 = vadd.f32 %v887, %v983
      %v985 = vpop.f32.mrf.mxu0
      %v986 = vpop.f32.mrf.mxu0
      %v987 = vadd.f32 %v890, %v986
      %v988 = vpop.f32.mrf.mxu0
      %989 = vmatprep.mubr.bf16.mxu0 0
      %990 = vmatmul.mubr.bf16.gmra.mxu0 %v724
      %v991 = vpop.f32.mrf.mxu0
      %v992 = vadd.f32 %v895, %v991
      %v993 = vpop.f32.mrf.mxu0
      %v994 = vpop.f32.mrf.mxu0
      %v995 = vadd.f32 %v898, %v994
      %v996 = vpop.f32.mrf.mxu0
      %997 = vmatprep.mubr.bf16.mxu0 0
      %998 = vmatmul.mubr.bf16.gmra.mxu0 %v727
      %v999 = vpop.f32.mrf.mxu0
      %v1000 = vadd.f32 %v903, %v999
      %v1001 = vpop.f32.mrf.mxu0
      %v1002 = vpop.f32.mrf.mxu0
      %v1003 = vadd.f32 %v906, %v1002
      %v1004 = vpop.f32.mrf.mxu0
      %1005 = vmatprep.mubr.bf16.mxu0 0
      %1006 = vmatmul.mubr.bf16.gmra.mxu0 %v730
      %v1007 = vpop.f32.mrf.mxu0
      %v1008 = vadd.f32 %v911, %v1007
      %v1009 = vpop.f32.mrf.mxu0
      %v1010 = vpop.f32.mrf.mxu0
      %v1011 = vadd.f32 %v914, %v1010
      %v1012 = vpop.f32.mrf.mxu0
      %1013 = vmatprep.mubr.bf16.mxu0 0
      %1014 = vmatmul.mubr.bf16.gmra.mxu0 %v733
      %v1015 = vpop.f32.mrf.mxu0
      %v1016 = vadd.f32 %v919, %v1015
      %v1017 = vpop.f32.mrf.mxu0
      %v1018 = vpop.f32.mrf.mxu0
      %v1019 = vadd.f32 %v922, %v1018
      %v1020 = vpop.f32.mrf.mxu0
      %1021 = vmatprep.mubr.bf16.mxu0 0
      %1022 = vmatmul.mubr.bf16.gmra.mxu0 %v736
      %v1023 = vpop.f32.mrf.mxu0
      %v1024 = vadd.f32 %v927, %v1023
      %v1025 = vpop.f32.mrf.mxu0
      %v1026 = vpop.f32.mrf.mxu0
      %v1027 = vadd.f32 %v930, %v1026
      %v1028 = vpop.f32.mrf.mxu0
      %1029 = vmatprep.mubr.bf16.mxu0 0
      %1030 = vmatmul.mubr.bf16.gmra.mxu0 %v739
      %v1031 = vpop.f32.mrf.mxu0
      %v1032 = vadd.f32 %v935, %v1031
      %v1033 = vpop.f32.mrf.mxu0
      %v1034 = vpop.f32.mrf.mxu0
      %v1035 = vadd.f32 %v938, %v1034
      %v1036 = vpop.f32.mrf.mxu0
      %1037 = vdwg.mxu0
      %v1038 = vmax.f32 %v976, 0.0
      %v1039 = vmax.f32 %v979, 0.0
      %v1040 = vmax.f32 %v984, 0.0
      %v1041 = vmax.f32 %v987, 0.0
      %v1042 = vmax.f32 %v992, 0.0
      %v1043 = vmax.f32 %v995, 0.0
      %v1044 = vmax.f32 %v1000, 0.0
      %v1045 = vmax.f32 %v1003, 0.0
      %v1046 = vmax.f32 %v1008, 0.0
      %v1047 = vmax.f32 %v1011, 0.0
      %v1048 = vmax.f32 %v1016, 0.0
      %v1049 = vmax.f32 %v1019, 0.0
      %v1050 = vmax.f32 %v1024, 0.0
      %v1051 = vmax.f32 %v1027, 0.0
      %v1052 = vmax.f32 %v1032, 0.0
      %v1053 = vmax.f32 %v1035, 0.0
      %v1054 = vpack.c.bf16 %v1039, %v1038
      %v1055 = vpack.c.bf16 %v1041, %v1040
      %v1056 = vpack.c.bf16 %v1043, %v1042
      %v1057 = vpack.c.bf16 %v1045, %v1044
      %v1058 = vpack.c.bf16 %v1047, %v1046
      %v1059 = vpack.c.bf16 %v1049, %v1048
      %v1060 = vpack.c.bf16 %v1051, %v1050
      %v1061 = vpack.c.bf16 %v1053, %v1052
      %v1070 = vunpack.c.l.b16 %v1054
      %v1071 = vunpack.c.h.b16 %v1054
      %v1072 = vunpack.c.l.b16 %v1055
      %v1073 = vunpack.c.h.b16 %v1055
      %v1074 = vunpack.c.l.b16 %v1056
      %v1075 = vunpack.c.h.b16 %v1056
      %v1076 = vunpack.c.l.b16 %v1057
      %v1077 = vunpack.c.h.b16 %v1057
      %v1078 = vunpack.c.l.b16 %v1058
      %v1079 = vunpack.c.h.b16 %v1058
      %v1080 = vunpack.c.l.b16 %v1059
      %v1081 = vunpack.c.h.b16 %v1059
      %v1082 = vunpack.c.l.b16 %v1060
      %v1083 = vunpack.c.h.b16 %v1060
      %v1084 = vunpack.c.l.b16 %v1061
      %v1085 = vunpack.c.h.b16 %v1061
      %v1086 = vpack.c.b16 %v1070, %v1070
      %v1087 = vpack.c.b16 %v1071, %v1071
      %v1088 = vpack.c.b16 %v1072, %v1072
      %v1089 = vpack.c.b16 %v1073, %v1073
      %v1090 = vpack.c.b16 %v1074, %v1074
      %v1091 = vpack.c.b16 %v1075, %v1075
      %v1092 = vpack.c.b16 %v1076, %v1076
      %v1093 = vpack.c.b16 %v1077, %v1077
      %v1094 = vpack.c.b16 %v1078, %v1078
      %v1095 = vpack.c.b16 %v1079, %v1079
      %v1096 = vpack.c.b16 %v1080, %v1080
      %v1097 = vpack.c.b16 %v1081, %v1081
      %v1098 = vpack.c.b16 %v1082, %v1082
      %v1099 = vpack.c.b16 %v1083, %v1083
      %v1100 = vpack.c.b16 %v1084, %v1084
      %v1101 = vpack.c.b16 %v1085, %v1085
      %vm1118 = vcmask 60416
      %1119 = vst.msk [vmem:[%s174] sm:$0xf] %vm1118, %v1086
      %1120 = vst.msk [vmem:[%s174 + $0x4] sm:$0xf] %vm1118, %v1087
      %1121 = vst.msk [vmem:[%s174 + $0x8] sm:$0xf] %vm1118, %v1088
      %1122 = vst.msk [vmem:[%s174 + $0xc] sm:$0xf] %vm1118, %v1089
      %1123 = vst.msk [vmem:[%s174 + $0x10] sm:$0xf] %vm1118, %v1090
      %1124 = vst.msk [vmem:[%s174 + $0x14] sm:$0xf] %vm1118, %v1091
      %1125 = vst.msk [vmem:[%s174 + $0x18] sm:$0xf] %vm1118, %v1092
      %1126 = vst.msk [vmem:[%s174 + $0x1c] sm:$0xf] %vm1118, %v1093
      %1127 = vst.msk [vmem:[%s174 + $0x20] sm:$0xf] %vm1118, %v1094
      %1128 = vst.msk [vmem:[%s174 + $0x24] sm:$0xf] %vm1118, %v1095
      %1129 = vst.msk [vmem:[%s174 + $0x28] sm:$0xf] %vm1118, %v1096
      %1130 = vst.msk [vmem:[%s174 + $0x2c] sm:$0xf] %vm1118, %v1097
      %1131 = vst.msk [vmem:[%s174 + $0x30] sm:$0xf] %vm1118, %v1098
      %1132 = vst.msk [vmem:[%s174 + $0x34] sm:$0xf] %vm1118, %v1099
      %1133 = vst.msk [vmem:[%s174 + $0x38] sm:$0xf] %vm1118, %v1100
      %1134 = vst.msk [vmem:[%s174 + $0x3c] sm:$0xf] %vm1118, %v1101
      %p1135 = scmp.lt.s32.totalorder %s17, 1
      %s1136 = scalar_select %p1135, %s17, 1
      %p1137 = scmp.lt.s32.totalorder %s18, 0
      %s1138 = scalar_select %p1137, %s18, 0
      %s1139 = smul.addr %s1136, 16
      %s1140 = sadd.s32 %s1138, %s1139
      %s1141 = smul.addr %s1140, 4
      %s1142 = scalar_lea.vmem %s2, %s1141
      // Predicated region
      $region29: #{lpips.11} parent=27 // pred_check
        %p1143 = pneg %p94
      $region30: #{lpips.11} parent=27 // pred_check_branch
        %1145 = sbr.rel (%p1143) target = $region32
      $region31: #{lpips.11} parent=27 // pred_region
        _
      $region32: #{lpips.11} parent=27 // pred_fallthru
        _
    $region28: #{lpips.11} parent=5 // pred_fallthru
      _
    %p1146 = scmp.le.s32.totalorder 2, %s8
    // Predicated region
    $region33: #{lpips.11} parent=5 // pred_check
      %p1147 = pneg %p1146
    $region34: #{lpips.11} parent=5 // pred_check_branch
      %1149 = sbr.rel (%p1147) target = $region36
    $region35: #{lpips.11} parent=5 // pred_region
      %s1150 = ssub.s32 %s8, 2
      // Predicated region
      $region37: #{lpips.11} parent=35 // pred_check
        %p1151 = pneg %p100
      $region38: #{lpips.11} parent=35 // pred_check_branch
        %1153 = sbr.rel (%p1151) target = $region40
      $region39: #{lpips.11} parent=35 // pred_region
        %p1154 = scmp.lt.s32.totalorder %s19, 1
        %s1155 = scalar_select %p1154, %s19, 1
        %p1156 = scmp.lt.s32.totalorder %s20, 0
        %s1157 = scalar_select %p1156, %s20, 0
        %s1158 = smul.addr %s1155, 16
        %s1159 = sadd.s32 %s1157, %s1158
        %s1160 = smul.addr %s1159, 4
        %s1161 = scalar_lea.vmem %s2, %s1160
      $region40: #{lpips.11} parent=35 // pred_fallthru
        _
    $region36: #{lpips.11} parent=5 // pred_fallthru
      _
  $region6: #{lpips.11} parent=0 // loop_footer
    %s12 = sadd.s32 1, %s8
  $region7: #{lpips.11} parent=0 // loop_footer_branch
    %7 = sbr.rel target = $region3
  $region8: #{lpips.11} parent=0 // loop_exit
    _

</llo_original>
